<compile_context>
chip_gen: v7x
topology: tpu7x:2x2x1
jax: 0.10.0
libtpu: 0.0.40
codegen_flags: <defaults>
</compile_context>

<pallas_src>
import functools
from math import floor

import numpy as np
import jax
import jax.numpy as jnp
from jax.experimental import pallas as pl
from jax.experimental.pallas import tpu as pltpu


# --------------------------------------------------------------------------
# Fused kernel: 4 x (conv [+BN] + LeakyReLU) + linear + sigmoid, one call.
# --------------------------------------------------------------------------
def _disc_fused_kernel(
    x_ref,
    t0_ref, b0_ref,
    t1_ref, p1_ref, pt1_ref, g1_ref, be1_ref,
    t2_ref, p2_ref, pt2_ref, g2_ref, be2_ref,
    t3_ref, p3_ref, pt3_ref, g3_ref, be3_ref,
    lw_ref, lb_ref,
    hsig_ref, h_ref,
    *, n_batch, hw_out, eps=1e-5, slope=0.2):
  f32 = jnp.float32

  def conv(a, t_ref):
    # bf16 operands on the MXU, f32 accumulation; epilogue stays f32.
    return jnp.dot(a.astype(t_ref.dtype), t_ref[...],
                   preferred_element_type=f32)

  def lrelu(y):
    return jnp.maximum(y, slope * y)

  def bn(y, p_ref, pt_ref, g_ref, be_ref, hw):
    # Training-mode BatchNorm2d: biased batch stats over (N, H, W).
    # One reduction pass: per-column sum / sum-of-squares over the batch rows,
    # then a (1, HW*C) @ (HW*C, C) pooling matmul groups them per channel.
    inv_count = 1.0 / float(n_batch * hw)
    s1 = jnp.dot(jnp.sum(y, axis=0, keepdims=True), p_ref[...],
                 preferred_element_type=f32)
    s2 = jnp.dot(jnp.sum(y * y, axis=0, keepdims=True), p_ref[...],
                 preferred_element_type=f32)
    mean = s1 * inv_count
    var = jnp.maximum(s2 * inv_count - mean * mean, 0.0)
    scale_c = g_ref[...] * jax.lax.rsqrt(var + eps)
    shift_c = be_ref[...] - mean * scale_c
    # Broadcast the per-channel affine back to (c, h, w)-ordered columns.
    scale = jnp.dot(scale_c, pt_ref[...], preferred_element_type=f32)
    shift = jnp.dot(shift_c, pt_ref[...], preferred_element_type=f32)
    return y * scale + shift

  a = x_ref[...].astype(f32)
  # Layer 0: conv + bias + LeakyReLU (no BN in the PyTorch model).
  a = lrelu(conv(a, t0_ref) + b0_ref[...])
  # Layers 1..3: conv + BN + LeakyReLU.  Conv bias omitted: it is cancelled
  # exactly by the BN mean subtraction in training mode.
  a = lrelu(bn(conv(a, t1_ref), p1_ref, pt1_ref, g1_ref, be1_ref, hw_out[1]))
  a = lrelu(bn(conv(a, t2_ref), p2_ref, pt2_ref, g2_ref, be2_ref, hw_out[2]))
  a = lrelu(bn(conv(a, t3_ref), p3_ref, pt3_ref, g3_ref, be3_ref, hw_out[3]))
  # Linear + sigmoid.  Columns of `a` are already in NCHW .view(batch,-1)
  # order, so no transpose is needed.
  h = jnp.dot(a, lw_ref[...], preferred_element_type=f32) + lb_ref[...]
  h_ref[...] = h
  hsig_ref[...] = 1.0 / (1.0 + jnp.exp(-h))


def discriminator_forward(kparams, x_nchw, batch_size):
  n = batch_size
  # NCHW flatten == (c, h, w) column order; pure reshape, no transpose.
  x_flat = x_nchw.reshape(n, -1).astype(jnp.float32)

  inputs = [x_flat, kparams["t"][0], kparams["b0"]]
  for l in (1, 2, 3):
    inputs += [kparams["t"][l], kparams["pool"][l], kparams["poolT"][l],
               kparams["gamma"][l], kparams["beta"][l]]
  inputs += [kparams["lin_w"], kparams["lin_b"]]

  in_specs = [pl.BlockSpec(tuple(a.shape), lambda i: (0, 0)) for a in inputs]
  out_shape = (jax.ShapeDtypeStruct((n, 1), jnp.float32),   # h_sigmoid
               jax.ShapeDtypeStruct((n, 1), jnp.float32))   # h
  out_specs = (pl.BlockSpec((n, 1), lambda i: (0, 0)),
               pl.BlockSpec((n, 1), lambda i: (0, 0)))

  kernel = functools.partial(_disc_fused_kernel,
                             n_batch=n, hw_out=kparams["hw_out"])
  return pl.pallas_call(
      kernel,
      out_shape=out_shape,
      grid=(1,),
      in_specs=in_specs,
      out_specs=out_specs,
      compiler_params=pltpu.CompilerParams(
          dimension_semantics=("arbitrary",)),
  )(*inputs)


# --------------------------------------------------------------------------
# Host-side parameter construction
# --------------------------------------------------------------------------
def _conv_as_dense_matrix(w_oihw, H, W, stride=2, pad=1):
  """Dense (Cin*H*W, Cout*Ho*Wo) matrix for a conv, padding folded in.

  Row order (ci, h, w); column order (co, ho, wo) — both NCHW flatten order.
  """
  co, ci, kh, kw = w_oihw.shape
  Ho = (H + 2 * pad - kh) // stride + 1
  Wo = (W + 2 * pad - kw) // stride + 1
  T = np.zeros((ci * H * W, co * Ho * Wo), np.float32)
  ci_idx = np.arange(ci) * (H * W)
  co_idx = np.arange(co) * (Ho * Wo)
  for ho in range(Ho):
    for wo in range(Wo):
      for i in range(kh):
        hh = stride * ho - pad + i
        if hh < 0 or hh >= H:
          continue
        for j in range(kw):
          ww = stride * wo - pad + j
          if ww < 0 or ww >= W:
            continue
          rows = ci_idx + hh * W + ww
          cols = co_idx + ho * Wo + wo
          T[np.ix_(rows, cols)] = w_oihw[:, :, i, j].T
  return T


def init_params(key, img_size, c_dim, in_num, out_num, df_dim):
  """Raw parameters in PyTorch layouts (used by both kernel prep & reference)."""
  cin = c_dim * (in_num + out_num)
  chans = [cin, df_dim, df_dim * 2, df_dim * 4, df_dim * 8]
  h, w = img_size
  spatial = [(h, w)]
  raw = {"conv_w": [], "gamma": [None], "beta": [None]}
  for l in range(4):
    ci, co = chans[l], chans[l + 1]
    key, kw_ = jax.random.split(key)
    raw["conv_w"].append(0.05 * jax.random.normal(kw_, (co, ci, 4, 4),
                                                  jnp.float32))
    h = floor((h + 2 * 1 - 4) / 2 + 1)
    w = floor((w + 2 * 1 - 4) / 2 + 1)
    spatial.append((h, w))
    if l == 0:
      key, kb = jax.random.split(key)
      raw["conv_b0"] = 0.05 * jax.random.normal(kb, (co,), jnp.float32)
    else:
      key, kg, kbt = jax.random.split(key, 3)
      raw["gamma"].append(1.0 + 0.1 * jax.random.normal(kg, (co,), jnp.float32))
      raw["beta"].append(0.1 * jax.random.normal(kbt, (co,), jnp.float32))
  hf, wf = spatial[-1]
  in_features = int(hf * wf * df_dim * 8)
  key, klw, klb = jax.random.split(key, 3)
  raw["lin_w"] = 0.05 * jax.random.normal(klw, (in_features, 1), jnp.float32)
  raw["lin_b"] = 0.05 * jax.random.normal(klb, (1, 1), jnp.float32)
  raw["spatial"] = spatial
  raw["chans"] = chans
  return raw


def prepare_kernel_params(raw):
  """Kernel-ready params: dense conv matrices (bf16), pooling matrices, etc."""
  spatial, chans = raw["spatial"], raw["chans"]
  kp = {"t": [], "pool": {}, "poolT": {}, "gamma": {}, "beta": {}}
  for l in range(4):
    H, W = spatial[l]
    Ho, Wo = spatial[l + 1]
    co = chans[l + 1]
    t_np = _conv_as_dense_matrix(np.asarray(raw["conv_w"][l]), H, W)
    kp["t"].append(jnp.asarray(t_np, jnp.bfloat16))      # bf16 MXU operands
    hw = Ho * Wo
    if l == 0:
      b0 = np.asarray(raw["conv_b0"])
      kp["b0"] = jnp.asarray(np.repeat(b0, hw)[None, :], jnp.float32)
    else:
      # P[c*hw + s, c] = 1 : pools (c,h,w)-ordered columns per channel.
      p = np.kron(np.eye(co, dtype=np.float32),
                  np.ones((hw, 1), np.float32))
      kp["pool"][l] = jnp.asarray(p)
      kp["poolT"][l] = jnp.asarray(np.ascontiguousarray(p.T))
      kp["gamma"][l] = jnp.asarray(np.asarray(raw["gamma"][l])[None, :],
                                   jnp.float32)
      kp["beta"][l] = jnp.asarray(np.asarray(raw["beta"][l])[None, :],
                                  jnp.float32)
  kp["lin_w"] = raw["lin_w"]
  kp["lin_b"] = raw["lin_b"]
  kp["hw_out"] = tuple(spatial[l + 1][0] * spatial[l + 1][1] for l in range(4))
  return kp


# --------------------------------------------------------------------------
# Pure-JAX reference (same bf16 operand quantization) for validation
# --------------------------------------------------------------------------
def reference_forward(raw, x_nchw, batch_size):
  bf16, f32 = jnp.bfloat16, jnp.float32
  a = x_nchw.astype(f32)
  for l in range(4):
    w = raw["conv_w"][l].astype(bf16)
    y = jax.lax.conv_general_dilated(
        a.astype(bf16), w, window_strides=(2, 2),
        padding=((1, 1), (1, 1)),
        dimension_numbers=("NCHW", "OIHW", "NCHW"),
        preferred_element_type=f32)
    if l == 0:
      y = y + raw["conv_b0"].reshape(1, -1, 1, 1)
    else:
      mean = jnp.mean(y, axis=(0, 2, 3), keepdims=True)
      var = jnp.mean((y - mean) ** 2, axis=(0, 2, 3), keepdims=True)
      y = (y - mean) * jax.lax.rsqrt(var + 1e-5)
      y = y * raw["gamma"][l].reshape(1, -1, 1, 1) \
            + raw["beta"][l].reshape(1, -1, 1, 1)
    a = jnp.maximum(y, 0.2 * y)
  feat = a.reshape(batch_size, -1)                 # NCHW .view(batch, -1)
  h = feat @ raw["lin_w"] + raw["lin_b"]
  return 1.0 / (1.0 + jnp.exp(-h)), h


if __name__ == "__main__":
  img_size = (16, 16)
  c_dim, in_num, out_num, df_dim = 2, 1, 1, 8
  batch = 4
  in_c = c_dim * (in_num + out_num)

  key = jax.random.PRNGKey(0)
  kparam_key, kx = jax.random.split(key)
  raw = init_params(kparam_key, img_size, c_dim, in_num, out_num, df_dim)
  kparams = prepare_kernel_params(raw)
  x = jax.random.normal(kx, (batch, in_c, img_size[0], img_size[1]),
                        jnp.float32)

  h_sigmoid, h = discriminator_forward(kparams, x, batch)
  jax.block_until_ready((h_sigmoid, h))

  assert h.shape == (batch, 1) and h_sigmoid.shape == (batch, 1)
  assert bool(jnp.all((h_sigmoid > 0) & (h_sigmoid < 1)))

  ref_sig, ref_h = reference_forward(raw, x, batch)
  jax.block_until_ready((ref_sig, ref_h))
  np.testing.assert_allclose(np.asarray(h), np.asarray(ref_h),
                             rtol=2e-2, atol=2e-2)
  np.testing.assert_allclose(np.asarray(h_sigmoid), np.asarray(ref_sig),
                             rtol=2e-2, atol=2e-2)
  print("KERNEL_OK")
</pallas_src>

<mosaic_0001>
module attributes {stable_mosaic.version = 11 : i64} {
  func.func @_disc_fused_kernel(%arg0: i32, %arg1: memref<4x1024xf32, #tpu.memory_space<vmem>>, %arg2: memref<1024x512xbf16, #tpu.memory_space<vmem>>, %arg3: memref<1x512xf32, #tpu.memory_space<vmem>>, %arg4: memref<512x256xbf16, #tpu.memory_space<vmem>>, %arg5: memref<256x16xf32, #tpu.memory_space<vmem>>, %arg6: memref<16x256xf32, #tpu.memory_space<vmem>>, %arg7: memref<1x16xf32, #tpu.memory_space<vmem>>, %arg8: memref<1x16xf32, #tpu.memory_space<vmem>>, %arg9: memref<256x128xbf16, #tpu.memory_space<vmem>>, %arg10: memref<128x32xf32, #tpu.memory_space<vmem>>, %arg11: memref<32x128xf32, #tpu.memory_space<vmem>>, %arg12: memref<1x32xf32, #tpu.memory_space<vmem>>, %arg13: memref<1x32xf32, #tpu.memory_space<vmem>>, %arg14: memref<128x64xbf16, #tpu.memory_space<vmem>>, %arg15: memref<64x64xf32, #tpu.memory_space<vmem>>, %arg16: memref<64x64xf32, #tpu.memory_space<vmem>>, %arg17: memref<1x64xf32, #tpu.memory_space<vmem>>, %arg18: memref<1x64xf32, #tpu.memory_space<vmem>>, %arg19: memref<64x1xf32, #tpu.memory_space<vmem>>, %arg20: memref<1x1xf32, #tpu.memory_space<vmem>>, %arg21: memref<4x1xf32, #tpu.memory_space<vmem>>, %arg22: memref<4x1xf32, #tpu.memory_space<vmem>>) attributes {dimension_semantics = [#tpu.dimension_semantics<arbitrary>], iteration_bounds = array<i64: 1>, scalar_prefetch = 0 : i64, scratch_operands = 0 : i64, tpu.core_type = #tpu.core_type<tc>, window_params = [{pipeline_mode = #tpu.pipeline_mode<synchronous>, transform_indices = @transform_0, window_bounds = array<i64: 4, 1024>}, {pipeline_mode = #tpu.pipeline_mode<synchronous>, transform_indices = @transform_1, window_bounds = array<i64: 1024, 512>}, {pipeline_mode = #tpu.pipeline_mode<synchronous>, transform_indices = @transform_2, window_bounds = array<i64: 1, 512>}, {pipeline_mode = #tpu.pipeline_mode<synchronous>, transform_indices = @transform_3, window_bounds = array<i64: 512, 256>}, {pipeline_mode = #tpu.pipeline_mode<synchronous>, transform_indices = @transform_4, window_bounds = array<i64: 256, 16>}, {pipeline_mode = #tpu.pipeline_mode<synchronous>, transform_indices = @transform_5, window_bounds = array<i64: 16, 256>}, {pipeline_mode = #tpu.pipeline_mode<synchronous>, transform_indices = @transform_6, window_bounds = array<i64: 1, 16>}, {pipeline_mode = #tpu.pipeline_mode<synchronous>, transform_indices = @transform_7, window_bounds = array<i64: 1, 16>}, {pipeline_mode = #tpu.pipeline_mode<synchronous>, transform_indices = @transform_8, window_bounds = array<i64: 256, 128>}, {pipeline_mode = #tpu.pipeline_mode<synchronous>, transform_indices = @transform_9, window_bounds = array<i64: 128, 32>}, {pipeline_mode = #tpu.pipeline_mode<synchronous>, transform_indices = @transform_10, window_bounds = array<i64: 32, 128>}, {pipeline_mode = #tpu.pipeline_mode<synchronous>, transform_indices = @transform_11, window_bounds = array<i64: 1, 32>}, {pipeline_mode = #tpu.pipeline_mode<synchronous>, transform_indices = @transform_12, window_bounds = array<i64: 1, 32>}, {pipeline_mode = #tpu.pipeline_mode<synchronous>, transform_indices = @transform_13, window_bounds = array<i64: 128, 64>}, {pipeline_mode = #tpu.pipeline_mode<synchronous>, transform_indices = @transform_14, window_bounds = array<i64: 64, 64>}, {pipeline_mode = #tpu.pipeline_mode<synchronous>, transform_indices = @transform_15, window_bounds = array<i64: 64, 64>}, {pipeline_mode = #tpu.pipeline_mode<synchronous>, transform_indices = @transform_16, window_bounds = array<i64: 1, 64>}, {pipeline_mode = #tpu.pipeline_mode<synchronous>, transform_indices = @transform_17, window_bounds = array<i64: 1, 64>}, {pipeline_mode = #tpu.pipeline_mode<synchronous>, transform_indices = @transform_18, window_bounds = array<i64: 64, 1>}, {pipeline_mode = #tpu.pipeline_mode<synchronous>, transform_indices = @transform_19, window_bounds = array<i64: 1, 1>}, {pipeline_mode = #tpu.pipeline_mode<synchronous>, transform_indices = @transform_20, window_bounds = array<i64: 4, 1>}, {pipeline_mode = #tpu.pipeline_mode<synchronous>, transform_indices = @transform_21, window_bounds = array<i64: 4, 1>}]} {
    %c0 = arith.constant 0 : index
    %c0_0 = arith.constant 0 : index
    %0 = vector.load %arg1[%c0, %c0_0] : memref<4x1024xf32, #tpu.memory_space<vmem>>, vector<4x1024xf32>
    %1 = arith.truncf %0 : vector<4x1024xf32> to vector<4x1024xbf16>
    %c0_1 = arith.constant 0 : index
    %c0_2 = arith.constant 0 : index
    %2 = vector.load %arg2[%c0_1, %c0_2] : memref<1024x512xbf16, #tpu.memory_space<vmem>>, vector<1024x512xbf16>
    %cst = arith.constant dense<0.000000e+00> : vector<4x512xf32>
    %3 = tpu.matmul %1, %2, %cst {dimension_numbers = #tpu.dot_dimension_numbers<[1], [0], [0], [1], [0, 0, 1, 1], [], []>} : vector<4x1024xbf16>, vector<1024x512xbf16>, vector<4x512xf32> -> vector<4x512xf32>
    %c0_3 = arith.constant 0 : index
    %c0_4 = arith.constant 0 : index
    %4 = vector.load %arg3[%c0_3, %c0_4] : memref<1x512xf32, #tpu.memory_space<vmem>>, vector<1x512xf32>
    %5 = vector.broadcast %4 : vector<1x512xf32> to vector<4x512xf32>
    %6 = arith.addf %3, %5 : vector<4x512xf32>
    %cst_5 = arith.constant 2.000000e-01 : f32
    %7 = vector.broadcast %cst_5 : f32 to vector<4x512xf32>
    %8 = arith.mulf %7, %6 : vector<4x512xf32>
    %9 = arith.maximumf %6, %8 : vector<4x512xf32>
    %10 = arith.truncf %9 : vector<4x512xf32> to vector<4x512xbf16>
    %c0_6 = arith.constant 0 : index
    %c0_7 = arith.constant 0 : index
    %11 = vector.load %arg4[%c0_6, %c0_7] : memref<512x256xbf16, #tpu.memory_space<vmem>>, vector<512x256xbf16>
    %cst_8 = arith.constant dense<0.000000e+00> : vector<4x256xf32>
    %12 = tpu.matmul %10, %11, %cst_8 {dimension_numbers = #tpu.dot_dimension_numbers<[1], [0], [0], [1], [0, 0, 1, 1], [], []>} : vector<4x512xbf16>, vector<512x256xbf16>, vector<4x256xf32> -> vector<4x256xf32>
    %cst_9 = arith.constant dense<0.000000e+00> : vector<256xf32>
    %13 = vector.multi_reduction <add>, %12, %cst_9 [0] : vector<4x256xf32> to vector<256xf32>
    %14 = vector.shape_cast %13 : vector<256xf32> to vector<1x256xf32>
    %c0_10 = arith.constant 0 : index
    %c0_11 = arith.constant 0 : index
    %15 = vector.load %arg5[%c0_10, %c0_11] : memref<256x16xf32, #tpu.memory_space<vmem>>, vector<256x16xf32>
    %cst_12 = arith.constant dense<0.000000e+00> : vector<1x16xf32>
    %16 = tpu.matmul %14, %15, %cst_12 {dimension_numbers = #tpu.dot_dimension_numbers<[1], [0], [0], [1], [0, 0, 1, 1], [], []>} : vector<1x256xf32>, vector<256x16xf32>, vector<1x16xf32> -> vector<1x16xf32>
    %17 = arith.mulf %12, %12 : vector<4x256xf32>
    %cst_13 = arith.constant dense<0.000000e+00> : vector<256xf32>
    %18 = vector.multi_reduction <add>, %17, %cst_13 [0] : vector<4x256xf32> to vector<256xf32>
    %19 = vector.shape_cast %18 : vector<256xf32> to vector<1x256xf32>
    %c0_14 = arith.constant 0 : index
    %c0_15 = arith.constant 0 : index
    %20 = vector.load %arg5[%c0_14, %c0_15] : memref<256x16xf32, #tpu.memory_space<vmem>>, vector<256x16xf32>
    %cst_16 = arith.constant dense<0.000000e+00> : vector<1x16xf32>
    %21 = tpu.matmul %19, %20, %cst_16 {dimension_numbers = #tpu.dot_dimension_numbers<[1], [0], [0], [1], [0, 0, 1, 1], [], []>} : vector<1x256xf32>, vector<256x16xf32>, vector<1x16xf32> -> vector<1x16xf32>
    %cst_17 = arith.constant 1.562500e-02 : f32
    %22 = vector.broadcast %cst_17 : f32 to vector<1x16xf32>
    %23 = arith.mulf %16, %22 : vector<1x16xf32>
    %cst_18 = arith.constant 1.562500e-02 : f32
    %24 = vector.broadcast %cst_18 : f32 to vector<1x16xf32>
    %25 = arith.mulf %21, %24 : vector<1x16xf32>
    %26 = arith.mulf %23, %23 : vector<1x16xf32>
    %27 = arith.subf %25, %26 : vector<1x16xf32>
    %cst_19 = arith.constant 0.000000e+00 : f32
    %28 = vector.broadcast %cst_19 : f32 to vector<1x16xf32>
    %29 = arith.maximumf %27, %28 : vector<1x16xf32>
    %c0_20 = arith.constant 0 : index
    %c0_21 = arith.constant 0 : index
    %30 = vector.load %arg7[%c0_20, %c0_21] : memref<1x16xf32, #tpu.memory_space<vmem>>, vector<1x16xf32>
    %cst_22 = arith.constant 9.99999974E-6 : f32
    %31 = vector.broadcast %cst_22 : f32 to vector<1x16xf32>
    %32 = arith.addf %29, %31 : vector<1x16xf32>
    %33 = math.rsqrt %32 : vector<1x16xf32>
    %34 = arith.mulf %30, %33 : vector<1x16xf32>
    %c0_23 = arith.constant 0 : index
    %c0_24 = arith.constant 0 : index
    %35 = vector.load %arg8[%c0_23, %c0_24] : memref<1x16xf32, #tpu.memory_space<vmem>>, vector<1x16xf32>
    %36 = arith.mulf %23, %34 : vector<1x16xf32>
    %37 = arith.subf %35, %36 : vector<1x16xf32>
    %c0_25 = arith.constant 0 : index
    %c0_26 = arith.constant 0 : index
    %38 = vector.load %arg6[%c0_25, %c0_26] : memref<16x256xf32, #tpu.memory_space<vmem>>, vector<16x256xf32>
    %cst_27 = arith.constant dense<0.000000e+00> : vector<1x256xf32>
    %39 = tpu.matmul %34, %38, %cst_27 {dimension_numbers = #tpu.dot_dimension_numbers<[1], [0], [0], [1], [0, 0, 1, 1], [], []>} : vector<1x16xf32>, vector<16x256xf32>, vector<1x256xf32> -> vector<1x256xf32>
    %c0_28 = arith.constant 0 : index
    %c0_29 = arith.constant 0 : index
    %40 = vector.load %arg6[%c0_28, %c0_29] : memref<16x256xf32, #tpu.memory_space<vmem>>, vector<16x256xf32>
    %cst_30 = arith.constant dense<0.000000e+00> : vector<1x256xf32>
    %41 = tpu.matmul %37, %40, %cst_30 {dimension_numbers = #tpu.dot_dimension_numbers<[1], [0], [0], [1], [0, 0, 1, 1], [], []>} : vector<1x16xf32>, vector<16x256xf32>, vector<1x256xf32> -> vector<1x256xf32>
    %42 = vector.broadcast %39 : vector<1x256xf32> to vector<4x256xf32>
    %43 = arith.mulf %12, %42 : vector<4x256xf32>
    %44 = vector.broadcast %41 : vector<1x256xf32> to vector<4x256xf32>
    %45 = arith.addf %43, %44 : vector<4x256xf32>
    %cst_31 = arith.constant 2.000000e-01 : f32
    %46 = vector.broadcast %cst_31 : f32 to vector<4x256xf32>
    %47 = arith.mulf %46, %45 : vector<4x256xf32>
    %48 = arith.maximumf %45, %47 : vector<4x256xf32>
    %49 = arith.truncf %48 : vector<4x256xf32> to vector<4x256xbf16>
    %c0_32 = arith.constant 0 : index
    %c0_33 = arith.constant 0 : index
    %50 = vector.load %arg9[%c0_32, %c0_33] : memref<256x128xbf16, #tpu.memory_space<vmem>>, vector<256x128xbf16>
    %cst_34 = arith.constant dense<0.000000e+00> : vector<4x128xf32>
    %51 = tpu.matmul %49, %50, %cst_34 {dimension_numbers = #tpu.dot_dimension_numbers<[1], [0], [0], [1], [0, 0, 1, 1], [], []>} : vector<4x256xbf16>, vector<256x128xbf16>, vector<4x128xf32> -> vector<4x128xf32>
    %cst_35 = arith.constant dense<0.000000e+00> : vector<128xf32>
    %52 = vector.multi_reduction <add>, %51, %cst_35 [0] : vector<4x128xf32> to vector<128xf32>
    %53 = vector.shape_cast %52 : vector<128xf32> to vector<1x128xf32>
    %c0_36 = arith.constant 0 : index
    %c0_37 = arith.constant 0 : index
    %54 = vector.load %arg10[%c0_36, %c0_37] : memref<128x32xf32, #tpu.memory_space<vmem>>, vector<128x32xf32>
    %cst_38 = arith.constant dense<0.000000e+00> : vector<1x32xf32>
    %55 = tpu.matmul %53, %54, %cst_38 {dimension_numbers = #tpu.dot_dimension_numbers<[1], [0], [0], [1], [0, 0, 1, 1], [], []>} : vector<1x128xf32>, vector<128x32xf32>, vector<1x32xf32> -> vector<1x32xf32>
    %56 = arith.mulf %51, %51 : vector<4x128xf32>
    %cst_39 = arith.constant dense<0.000000e+00> : vector<128xf32>
    %57 = vector.multi_reduction <add>, %56, %cst_39 [0] : vector<4x128xf32> to vector<128xf32>
    %58 = vector.shape_cast %57 : vector<128xf32> to vector<1x128xf32>
    %c0_40 = arith.constant 0 : index
    %c0_41 = arith.constant 0 : index
    %59 = vector.load %arg10[%c0_40, %c0_41] : memref<128x32xf32, #tpu.memory_space<vmem>>, vector<128x32xf32>
    %cst_42 = arith.constant dense<0.000000e+00> : vector<1x32xf32>
    %60 = tpu.matmul %58, %59, %cst_42 {dimension_numbers = #tpu.dot_dimension_numbers<[1], [0], [0], [1], [0, 0, 1, 1], [], []>} : vector<1x128xf32>, vector<128x32xf32>, vector<1x32xf32> -> vector<1x32xf32>
    %cst_43 = arith.constant 6.250000e-02 : f32
    %61 = vector.broadcast %cst_43 : f32 to vector<1x32xf32>
    %62 = arith.mulf %55, %61 : vector<1x32xf32>
    %cst_44 = arith.constant 6.250000e-02 : f32
    %63 = vector.broadcast %cst_44 : f32 to vector<1x32xf32>
    %64 = arith.mulf %60, %63 : vector<1x32xf32>
    %65 = arith.mulf %62, %62 : vector<1x32xf32>
    %66 = arith.subf %64, %65 : vector<1x32xf32>
    %cst_45 = arith.constant 0.000000e+00 : f32
    %67 = vector.broadcast %cst_45 : f32 to vector<1x32xf32>
    %68 = arith.maximumf %66, %67 : vector<1x32xf32>
    %c0_46 = arith.constant 0 : index
    %c0_47 = arith.constant 0 : index
    %69 = vector.load %arg12[%c0_46, %c0_47] : memref<1x32xf32, #tpu.memory_space<vmem>>, vector<1x32xf32>
    %cst_48 = arith.constant 9.99999974E-6 : f32
    %70 = vector.broadcast %cst_48 : f32 to vector<1x32xf32>
    %71 = arith.addf %68, %70 : vector<1x32xf32>
    %72 = math.rsqrt %71 : vector<1x32xf32>
    %73 = arith.mulf %69, %72 : vector<1x32xf32>
    %c0_49 = arith.constant 0 : index
    %c0_50 = arith.constant 0 : index
    %74 = vector.load %arg13[%c0_49, %c0_50] : memref<1x32xf32, #tpu.memory_space<vmem>>, vector<1x32xf32>
    %75 = arith.mulf %62, %73 : vector<1x32xf32>
    %76 = arith.subf %74, %75 : vector<1x32xf32>
    %c0_51 = arith.constant 0 : index
    %c0_52 = arith.constant 0 : index
    %77 = vector.load %arg11[%c0_51, %c0_52] : memref<32x128xf32, #tpu.memory_space<vmem>>, vector<32x128xf32>
    %cst_53 = arith.constant dense<0.000000e+00> : vector<1x128xf32>
    %78 = tpu.matmul %73, %77, %cst_53 {dimension_numbers = #tpu.dot_dimension_numbers<[1], [0], [0], [1], [0, 0, 1, 1], [], []>} : vector<1x32xf32>, vector<32x128xf32>, vector<1x128xf32> -> vector<1x128xf32>
    %c0_54 = arith.constant 0 : index
    %c0_55 = arith.constant 0 : index
    %79 = vector.load %arg11[%c0_54, %c0_55] : memref<32x128xf32, #tpu.memory_space<vmem>>, vector<32x128xf32>
    %cst_56 = arith.constant dense<0.000000e+00> : vector<1x128xf32>
    %80 = tpu.matmul %76, %79, %cst_56 {dimension_numbers = #tpu.dot_dimension_numbers<[1], [0], [0], [1], [0, 0, 1, 1], [], []>} : vector<1x32xf32>, vector<32x128xf32>, vector<1x128xf32> -> vector<1x128xf32>
    %81 = vector.broadcast %78 : vector<1x128xf32> to vector<4x128xf32>
    %82 = arith.mulf %51, %81 : vector<4x128xf32>
    %83 = vector.broadcast %80 : vector<1x128xf32> to vector<4x128xf32>
    %84 = arith.addf %82, %83 : vector<4x128xf32>
    %cst_57 = arith.constant 2.000000e-01 : f32
    %85 = vector.broadcast %cst_57 : f32 to vector<4x128xf32>
    %86 = arith.mulf %85, %84 : vector<4x128xf32>
    %87 = arith.maximumf %84, %86 : vector<4x128xf32>
    %88 = arith.truncf %87 : vector<4x128xf32> to vector<4x128xbf16>
    %c0_58 = arith.constant 0 : index
    %c0_59 = arith.constant 0 : index
    %89 = vector.load %arg14[%c0_58, %c0_59] : memref<128x64xbf16, #tpu.memory_space<vmem>>, vector<128x64xbf16>
    %cst_60 = arith.constant dense<0.000000e+00> : vector<4x64xf32>
    %90 = tpu.matmul %88, %89, %cst_60 {dimension_numbers = #tpu.dot_dimension_numbers<[1], [0], [0], [1], [0, 0, 1, 1], [], []>} : vector<4x128xbf16>, vector<128x64xbf16>, vector<4x64xf32> -> vector<4x64xf32>
    %cst_61 = arith.constant dense<0.000000e+00> : vector<64xf32>
    %91 = vector.multi_reduction <add>, %90, %cst_61 [0] : vector<4x64xf32> to vector<64xf32>
    %92 = vector.shape_cast %91 : vector<64xf32> to vector<1x64xf32>
    %c0_62 = arith.constant 0 : index
    %c0_63 = arith.constant 0 : index
    %93 = vector.load %arg15[%c0_62, %c0_63] : memref<64x64xf32, #tpu.memory_space<vmem>>, vector<64x64xf32>
    %cst_64 = arith.constant dense<0.000000e+00> : vector<1x64xf32>
    %94 = tpu.matmul %92, %93, %cst_64 {dimension_numbers = #tpu.dot_dimension_numbers<[1], [0], [0], [1], [0, 0, 1, 1], [], []>} : vector<1x64xf32>, vector<64x64xf32>, vector<1x64xf32> -> vector<1x64xf32>
    %95 = arith.mulf %90, %90 : vector<4x64xf32>
    %cst_65 = arith.constant dense<0.000000e+00> : vector<64xf32>
    %96 = vector.multi_reduction <add>, %95, %cst_65 [0] : vector<4x64xf32> to vector<64xf32>
    %97 = vector.shape_cast %96 : vector<64xf32> to vector<1x64xf32>
    %c0_66 = arith.constant 0 : index
    %c0_67 = arith.constant 0 : index
    %98 = vector.load %arg15[%c0_66, %c0_67] : memref<64x64xf32, #tpu.memory_space<vmem>>, vector<64x64xf32>
    %cst_68 = arith.constant dense<0.000000e+00> : vector<1x64xf32>
    %99 = tpu.matmul %97, %98, %cst_68 {dimension_numbers = #tpu.dot_dimension_numbers<[1], [0], [0], [1], [0, 0, 1, 1], [], []>} : vector<1x64xf32>, vector<64x64xf32>, vector<1x64xf32> -> vector<1x64xf32>
    %cst_69 = arith.constant 2.500000e-01 : f32
    %100 = vector.broadcast %cst_69 : f32 to vector<1x64xf32>
    %101 = arith.mulf %94, %100 : vector<1x64xf32>
    %cst_70 = arith.constant 2.500000e-01 : f32
    %102 = vector.broadcast %cst_70 : f32 to vector<1x64xf32>
    %103 = arith.mulf %99, %102 : vector<1x64xf32>
    %104 = arith.mulf %101, %101 : vector<1x64xf32>
    %105 = arith.subf %103, %104 : vector<1x64xf32>
    %cst_71 = arith.constant 0.000000e+00 : f32
    %106 = vector.broadcast %cst_71 : f32 to vector<1x64xf32>
    %107 = arith.maximumf %105, %106 : vector<1x64xf32>
    %c0_72 = arith.constant 0 : index
    %c0_73 = arith.constant 0 : index
    %108 = vector.load %arg17[%c0_72, %c0_73] : memref<1x64xf32, #tpu.memory_space<vmem>>, vector<1x64xf32>
    %cst_74 = arith.constant 9.99999974E-6 : f32
    %109 = vector.broadcast %cst_74 : f32 to vector<1x64xf32>
    %110 = arith.addf %107, %109 : vector<1x64xf32>
    %111 = math.rsqrt %110 : vector<1x64xf32>
    %112 = arith.mulf %108, %111 : vector<1x64xf32>
    %c0_75 = arith.constant 0 : index
    %c0_76 = arith.constant 0 : index
    %113 = vector.load %arg18[%c0_75, %c0_76] : memref<1x64xf32, #tpu.memory_space<vmem>>, vector<1x64xf32>
    %114 = arith.mulf %101, %112 : vector<1x64xf32>
    %115 = arith.subf %113, %114 : vector<1x64xf32>
    %c0_77 = arith.constant 0 : index
    %c0_78 = arith.constant 0 : index
    %116 = vector.load %arg16[%c0_77, %c0_78] : memref<64x64xf32, #tpu.memory_space<vmem>>, vector<64x64xf32>
    %cst_79 = arith.constant dense<0.000000e+00> : vector<1x64xf32>
    %117 = tpu.matmul %112, %116, %cst_79 {dimension_numbers = #tpu.dot_dimension_numbers<[1], [0], [0], [1], [0, 0, 1, 1], [], []>} : vector<1x64xf32>, vector<64x64xf32>, vector<1x64xf32> -> vector<1x64xf32>
    %c0_80 = arith.constant 0 : index
    %c0_81 = arith.constant 0 : index
    %118 = vector.load %arg16[%c0_80, %c0_81] : memref<64x64xf32, #tpu.memory_space<vmem>>, vector<64x64xf32>
    %cst_82 = arith.constant dense<0.000000e+00> : vector<1x64xf32>
    %119 = tpu.matmul %115, %118, %cst_82 {dimension_numbers = #tpu.dot_dimension_numbers<[1], [0], [0], [1], [0, 0, 1, 1], [], []>} : vector<1x64xf32>, vector<64x64xf32>, vector<1x64xf32> -> vector<1x64xf32>
    %120 = vector.broadcast %117 : vector<1x64xf32> to vector<4x64xf32>
    %121 = arith.mulf %90, %120 : vector<4x64xf32>
    %122 = vector.broadcast %119 : vector<1x64xf32> to vector<4x64xf32>
    %123 = arith.addf %121, %122 : vector<4x64xf32>
    %cst_83 = arith.constant 2.000000e-01 : f32
    %124 = vector.broadcast %cst_83 : f32 to vector<4x64xf32>
    %125 = arith.mulf %124, %123 : vector<4x64xf32>
    %126 = arith.maximumf %123, %125 : vector<4x64xf32>
    %c0_84 = arith.constant 0 : index
    %c0_85 = arith.constant 0 : index
    %127 = vector.load %arg19[%c0_84, %c0_85] : memref<64x1xf32, #tpu.memory_space<vmem>>, vector<64x1xf32>
    %cst_86 = arith.constant dense<0.000000e+00> : vector<4x1xf32>
    %128 = tpu.matmul %126, %127, %cst_86 {dimension_numbers = #tpu.dot_dimension_numbers<[1], [0], [0], [1], [0, 0, 1, 1], [], []>} : vector<4x64xf32>, vector<64x1xf32>, vector<4x1xf32> -> vector<4x1xf32>
    %c0_87 = arith.constant 0 : index
    %c0_88 = arith.constant 0 : index
    %129 = vector.load %arg20[%c0_87, %c0_88] : memref<1x1xf32, #tpu.memory_space<vmem>>, vector<1x1xf32>
    %130 = vector.broadcast %129 : vector<1x1xf32> to vector<4x1xf32>
    %131 = arith.addf %128, %130 : vector<4x1xf32>
    %c0_89 = arith.constant 0 : index
    %c0_90 = arith.constant 0 : index
    %132 = vector.load %arg22[%c0_89, %c0_90] : memref<4x1xf32, #tpu.memory_space<vmem>>, vector<4x1xf32>
    tpu.vector_store %arg22[%c0_89, %c0_90], %131 {strides = array<i32>} : memref<4x1xf32, #tpu.memory_space<vmem>>, vector<4x1xf32>,
    %cst_91 = arith.constant 0.000000e+00 : f32
    %133 = vector.broadcast %cst_91 : f32 to vector<4x1xf32>
    %134 = arith.subf %133, %131 : vector<4x1xf32>
    %135 = math.exp %134 : vector<4x1xf32>
    %cst_92 = arith.constant 1.000000e+00 : f32
    %136 = vector.broadcast %cst_92 : f32 to vector<4x1xf32>
    %137 = arith.addf %136, %135 : vector<4x1xf32>
    %cst_93 = arith.constant 1.000000e+00 : f32
    %138 = vector.broadcast %cst_93 : f32 to vector<4x1xf32>
    %139 = arith.divf %138, %137 : vector<4x1xf32>
    %c0_94 = arith.constant 0 : index
    %c0_95 = arith.constant 0 : index
    %140 = vector.load %arg21[%c0_94, %c0_95] : memref<4x1xf32, #tpu.memory_space<vmem>>, vector<4x1xf32>
    tpu.vector_store %arg21[%c0_94, %c0_95], %139 {strides = array<i32>} : memref<4x1xf32, #tpu.memory_space<vmem>>, vector<4x1xf32>,
    return
  }
  func.func @transform_0(%arg0: i32) -> (i32, i32) {
    %c0_i32 = arith.constant 0 : i32
    %c0_i32_0 = arith.constant 0 : i32
    %c0_i32_1 = arith.constant 0 : i32
    return %c0_i32, %c0_i32_0 : i32, i32
  }
  func.func @transform_1(%arg0: i32) -> (i32, i32) {
    %c0_i32 = arith.constant 0 : i32
    %c0_i32_0 = arith.constant 0 : i32
    %c0_i32_1 = arith.constant 0 : i32
    return %c0_i32, %c0_i32_0 : i32, i32
  }
  func.func @transform_2(%arg0: i32) -> (i32, i32) {
    %c0_i32 = arith.constant 0 : i32
    %c0_i32_0 = arith.constant 0 : i32
    %c0_i32_1 = arith.constant 0 : i32
    return %c0_i32, %c0_i32_0 : i32, i32
  }
  func.func @transform_3(%arg0: i32) -> (i32, i32) {
    %c0_i32 = arith.constant 0 : i32
    %c0_i32_0 = arith.constant 0 : i32
    %c0_i32_1 = arith.constant 0 : i32
    return %c0_i32, %c0_i32_0 : i32, i32
  }
  func.func @transform_4(%arg0: i32) -> (i32, i32) {
    %c0_i32 = arith.constant 0 : i32
    %c0_i32_0 = arith.constant 0 : i32
    %c0_i32_1 = arith.constant 0 : i32
    return %c0_i32, %c0_i32_0 : i32, i32
  }
  func.func @transform_5(%arg0: i32) -> (i32, i32) {
    %c0_i32 = arith.constant 0 : i32
    %c0_i32_0 = arith.constant 0 : i32
    %c0_i32_1 = arith.constant 0 : i32
    return %c0_i32, %c0_i32_0 : i32, i32
  }
  func.func @transform_6(%arg0: i32) -> (i32, i32) {
    %c0_i32 = arith.constant 0 : i32
    %c0_i32_0 = arith.constant 0 : i32
    %c0_i32_1 = arith.constant 0 : i32
    return %c0_i32, %c0_i32_0 : i32, i32
  }
  func.func @transform_7(%arg0: i32) -> (i32, i32) {
    %c0_i32 = arith.constant 0 : i32
    %c0_i32_0 = arith.constant 0 : i32
    %c0_i32_1 = arith.constant 0 : i32
    return %c0_i32, %c0_i32_0 : i32, i32
  }
  func.func @transform_8(%arg0: i32) -> (i32, i32) {
    %c0_i32 = arith.constant 0 : i32
    %c0_i32_0 = arith.constant 0 : i32
    %c0_i32_1 = arith.constant 0 : i32
    return %c0_i32, %c0_i32_0 : i32, i32
  }
  func.func @transform_9(%arg0: i32) -> (i32, i32) {
    %c0_i32 = arith.constant 0 : i32
    %c0_i32_0 = arith.constant 0 : i32
    %c0_i32_1 = arith.constant 0 : i32
    return %c0_i32, %c0_i32_0 : i32, i32
  }
  func.func @transform_10(%arg0: i32) -> (i32, i32) {
    %c0_i32 = arith.constant 0 : i32
    %c0_i32_0 = arith.constant 0 : i32
    %c0_i32_1 = arith.constant 0 : i32
    return %c0_i32, %c0_i32_0 : i32, i32
  }
  func.func @transform_11(%arg0: i32) -> (i32, i32) {
    %c0_i32 = arith.constant 0 : i32
    %c0_i32_0 = arith.constant 0 : i32
    %c0_i32_1 = arith.constant 0 : i32
    return %c0_i32, %c0_i32_0 : i32, i32
  }
  func.func @transform_12(%arg0: i32) -> (i32, i32) {
    %c0_i32 = arith.constant 0 : i32
    %c0_i32_0 = arith.constant 0 : i32
    %c0_i32_1 = arith.constant 0 : i32
    return %c0_i32, %c0_i32_0 : i32, i32
  }
  func.func @transform_13(%arg0: i32) -> (i32, i32) {
    %c0_i32 = arith.constant 0 : i32
    %c0_i32_0 = arith.constant 0 : i32
    %c0_i32_1 = arith.constant 0 : i32
    return %c0_i32, %c0_i32_0 : i32, i32
  }
  func.func @transform_14(%arg0: i32) -> (i32, i32) {
    %c0_i32 = arith.constant 0 : i32
    %c0_i32_0 = arith.constant 0 : i32
    %c0_i32_1 = arith.constant 0 : i32
    return %c0_i32, %c0_i32_0 : i32, i32
  }
  func.func @transform_15(%arg0: i32) -> (i32, i32) {
    %c0_i32 = arith.constant 0 : i32
    %c0_i32_0 = arith.constant 0 : i32
    %c0_i32_1 = arith.constant 0 : i32
    return %c0_i32, %c0_i32_0 : i32, i32
  }
  func.func @transform_16(%arg0: i32) -> (i32, i32) {
    %c0_i32 = arith.constant 0 : i32
    %c0_i32_0 = arith.constant 0 : i32
    %c0_i32_1 = arith.constant 0 : i32
    return %c0_i32, %c0_i32_0 : i32, i32
  }
  func.func @transform_17(%arg0: i32) -> (i32, i32) {
    %c0_i32 = arith.constant 0 : i32
    %c0_i32_0 = arith.constant 0 : i32
    %c0_i32_1 = arith.constant 0 : i32
    return %c0_i32, %c0_i32_0 : i32, i32
  }
  func.func @transform_18(%arg0: i32) -> (i32, i32) {
    %c0_i32 = arith.constant 0 : i32
    %c0_i32_0 = arith.constant 0 : i32
    %c0_i32_1 = arith.constant 0 : i32
    return %c0_i32, %c0_i32_0 : i32, i32
  }
  func.func @transform_19(%arg0: i32) -> (i32, i32) {
    %c0_i32 = arith.constant 0 : i32
    %c0_i32_0 = arith.constant 0 : i32
    %c0_i32_1 = arith.constant 0 : i32
    return %c0_i32, %c0_i32_0 : i32, i32
  }
  func.func @transform_20(%arg0: i32) -> (i32, i32) {
    %c0_i32 = arith.constant 0 : i32
    %c0_i32_0 = arith.constant 0 : i32
    %c0_i32_1 = arith.constant 0 : i32
    return %c0_i32, %c0_i32_0 : i32, i32
  }
  func.func @transform_21(%arg0: i32) -> (i32, i32) {
    %c0_i32 = arith.constant 0 : i32
    %c0_i32_0 = arith.constant 0 : i32
    %c0_i32_1 = arith.constant 0 : i32
    return %c0_i32, %c0_i32_0 : i32, i32
  }
}

</mosaic_0001>

<llo_original>
// kernel: tpu_custom_call.1
$region0: #{tpu_custom_call.1}
  #allocation0 [shape = 'u32[]', space=smem, size = 0x4, offset = 0x4, fixed_abs, tag = 'smem constant byte address 0x4 - core index']
  #allocation1 [shape = 'u32[144,128]{1,0:T(1,128)}', space=vmem, size = 0x12000, scoped, tag = 'internal scratch']
  #allocation2 [shape = 'f32[1,1]{1,0:T(1,128)S(1)}', space=vmem, size = 0x200, scoped, tag = 'scoped memory for tpu_custom_call.1']
  %s0 = inlined_call_operand.hbm [shape: f32[4,1024], index: 0, kind: input, shape index: {}]
  %s1 = inlined_call_operand.hbm [shape: bf16[1024,512], index: 1, kind: input, shape index: {}]
  %s2 = inlined_call_operand.vmem [shape: f32[1,512], index: 2, kind: input, shape index: {}]
  %s3 = inlined_call_operand.vmem [shape: bf16[512,256], index: 3, kind: input, shape index: {}]
  %s4 = inlined_call_operand.vmem [shape: f32[256,16], index: 4, kind: input, shape index: {}]
  %s5 = inlined_call_operand.hbm [shape: f32[16,256], index: 5, kind: input, shape index: {}]
  %s6 = inlined_call_operand.vmem [shape: f32[1,16], index: 6, kind: input, shape index: {}]
  %s7 = inlined_call_operand.hbm [shape: f32[1,16], index: 7, kind: input, shape index: {}]
  %s8 = inlined_call_operand.hbm [shape: bf16[256,128], index: 8, kind: input, shape index: {}]
  %s9 = inlined_call_operand.vmem [shape: f32[128,32], index: 9, kind: input, shape index: {}]
  %s10 = inlined_call_operand.hbm [shape: f32[32,128], index: 10, kind: input, shape index: {}]
  %s11 = inlined_call_operand.vmem [shape: f32[1,32], index: 11, kind: input, shape index: {}]
  %s12 = inlined_call_operand.vmem [shape: f32[1,32], index: 12, kind: input, shape index: {}]
  %s13 = inlined_call_operand.vmem [shape: bf16[128,64], index: 13, kind: input, shape index: {}]
  %s14 = inlined_call_operand.vmem [shape: f32[64,64], index: 14, kind: input, shape index: {}]
  %s15 = inlined_call_operand.vmem [shape: f32[64,64], index: 15, kind: input, shape index: {}]
  %s16 = inlined_call_operand.vmem [shape: f32[1,64], index: 16, kind: input, shape index: {}]
  %s17 = inlined_call_operand.vmem [shape: f32[1,64], index: 17, kind: input, shape index: {}]
  %s18 = inlined_call_operand.vmem [shape: f32[64,1], index: 18, kind: input, shape index: {}]
  %s19 = inlined_call_operand.<no memory space> [shape: f32[1,1], index: 19, kind: input, shape index: {}]
  %s20 = inlined_call_operand.vmem [shape: f32[4,1], index: 20, kind: output, shape index: {0}]
  %s21 = inlined_call_operand.vmem [shape: f32[4,1], index: 21, kind: output, shape index: {1}]
  %22 = xla_tuple %s20, %s21
  %s23 = sld [smem:[#allocation0]]
  $region122: #{tpu_custom_call.1} parent=0
    _
  %s25 = ssub.s32 1, %s23
  %s26 = scalar_select 0, %s25, %s23
  %v27 = vstv %s19
  %28 = vst [vmem:[#allocation2] sm:$0x1] %v27
  $region1: #{tpu_custom_call.1} parent=0
    #allocation3 [shape = 'u8[16384]{0}', space=vmem, size = 0x4000, scoped, tag = 'input window, operand 0, single buffered']
    #allocation4 [shape = 's32[1]{0}', space=sflag, size = 0x4, scoped, tag = 'scoped memory for tpu_custom_call.1']
    #allocation5 [shape = 'u8[1048576]{0}', space=vmem, size = 0x100000, scoped, tag = 'input window, operand 1, single buffered']
    #allocation6 [shape = 's32[1]{0}', space=sflag, size = 0x4, scoped, tag = 'scoped memory for tpu_custom_call.1']
    #allocation7 [shape = 'u8[16384]{0}', space=vmem, size = 0x4000, scoped, tag = 'input window, operand 5, single buffered']
    #allocation8 [shape = 'u8[512]{0}', space=vmem, size = 0x400, scoped, tag = 'input window, operand 7, single buffered']
    #allocation9 [shape = 's32[1]{0}', space=sflag, size = 0x4, scoped, tag = 'scoped memory for tpu_custom_call.1']
    #allocation10 [shape = 'u8[65536]{0}', space=vmem, size = 0x10000, scoped, tag = 'input window, operand 8, single buffered']
    #allocation11 [shape = 'u8[16384]{0}', space=vmem, size = 0x4000, scoped, tag = 'input window, operand 10, single buffered']
    #allocation12 [shape = 's32[1]{0}', space=sflag, size = 0x4, scoped, tag = 'scoped memory for tpu_custom_call.1']
    %29 = vsyncpa [#allocation4], 0
    %30 = vsyncpa [#allocation6], 0
    %31 = vsyncpa [#allocation9], 0
    %32 = vsyncpa [#allocation12], 0
    // Predicated region
    $region2: #{tpu_custom_call.1} parent=1 // pred_check
      _
    $region3: #{tpu_custom_call.1} parent=1 // pred_check_branch
      %34 = sbr.rel (0) target = $region5
    $region4: #{tpu_custom_call.1} parent=1 // pred_region
      %s36 = ssub.s32 512, 512
      %37 = vsyncadd [#allocation4], %s36
      %s39 = sshll.u32 [#allocation3], 4
      %s40 = int_to_ptr.vmem [resolvable:$true] %s39
      %42 = dma.hbm_to_vmem [thread:$0]  %s0, 512, %s40, [#allocation4]
    $region5: #{tpu_custom_call.1} parent=1 // pred_fallthru
      _
    // Predicated region
    $region6: #{tpu_custom_call.1} parent=1 // pred_check
      _
    $region7: #{tpu_custom_call.1} parent=1 // pred_check_branch
      %44 = sbr.rel (0) target = $region9
    $region8: #{tpu_custom_call.1} parent=1 // pred_region
      %s46 = ssub.s32 32768, 32768
      %47 = vsyncadd [#allocation6], %s46
      %s48 = sshll.u32 [#allocation5], 4
      %s49 = int_to_ptr.vmem [resolvable:$true] %s48
      %54 = dma.hbm_to_vmem [thread:$0]  %s1, 32768, %s49, [#allocation6], 256, 256, 16
    $region9: #{tpu_custom_call.1} parent=1 // pred_fallthru
      _
    // Predicated region
    $region10: #{tpu_custom_call.1} parent=1 // pred_check
      _
    $region11: #{tpu_custom_call.1} parent=1 // pred_check_branch
      %56 = sbr.rel (0) target = $region13
    $region12: #{tpu_custom_call.1} parent=1 // pred_region
      _
    $region13: #{tpu_custom_call.1} parent=1 // pred_fallthru
      _
    // Predicated region
    $region14: #{tpu_custom_call.1} parent=1 // pred_check
      _
    $region15: #{tpu_custom_call.1} parent=1 // pred_check_branch
      %58 = sbr.rel (0) target = $region17
    $region16: #{tpu_custom_call.1} parent=1 // pred_region
      _
    $region17: #{tpu_custom_call.1} parent=1 // pred_fallthru
      _
    // Predicated region
    $region18: #{tpu_custom_call.1} parent=1 // pred_check
      _
    $region19: #{tpu_custom_call.1} parent=1 // pred_check_branch
      %60 = sbr.rel (0) target = $region21
    $region20: #{tpu_custom_call.1} parent=1 // pred_region
      _
    $region21: #{tpu_custom_call.1} parent=1 // pred_fallthru
      _
    // Predicated region
    $region22: #{tpu_custom_call.1} parent=1 // pred_check
      _
    $region23: #{tpu_custom_call.1} parent=1 // pred_check_branch
      %62 = sbr.rel (0) target = $region25
    $region24: #{tpu_custom_call.1} parent=1 // pred_region
      %s64 = ssub.s32 512, 512
      %65 = vsyncadd [#allocation6], %s64
      %s66 = sshll.u32 [#allocation7], 4
      %s67 = int_to_ptr.vmem [resolvable:$true] %s66
      %72 = dma.hbm_to_vmem [thread:$0]  %s5, 512, %s67, [#allocation6], 256, 256, 16
    $region25: #{tpu_custom_call.1} parent=1 // pred_fallthru
      _
    // Predicated region
    $region26: #{tpu_custom_call.1} parent=1 // pred_check
      _
    $region27: #{tpu_custom_call.1} parent=1 // pred_check_branch
      %74 = sbr.rel (0) target = $region29
    $region28: #{tpu_custom_call.1} parent=1 // pred_region
      _
    $region29: #{tpu_custom_call.1} parent=1 // pred_fallthru
      _
    // Predicated region
    $region30: #{tpu_custom_call.1} parent=1 // pred_check
      _
    $region31: #{tpu_custom_call.1} parent=1 // pred_check_branch
      %76 = sbr.rel (0) target = $region33
    $region32: #{tpu_custom_call.1} parent=1 // pred_region
      %s78 = ssub.s32 16, 16
      %79 = vsyncadd [#allocation9], %s78
      %s81 = sshll.u32 [#allocation8], 4
      %s82 = int_to_ptr.vmem [resolvable:$true] %s81
      %84 = dma.hbm_to_vmem [thread:$0]  %s7, 16, %s82, [#allocation9]
    $region33: #{tpu_custom_call.1} parent=1 // pred_fallthru
      _
    // Predicated region
    $region34: #{tpu_custom_call.1} parent=1 // pred_check
      _
    $region35: #{tpu_custom_call.1} parent=1 // pred_check_branch
      %86 = sbr.rel (0) target = $region37
    $region36: #{tpu_custom_call.1} parent=1 // pred_region
      %s88 = ssub.s32 2048, 2048
      %89 = vsyncadd [#allocation9], %s88
      %s90 = sshll.u32 [#allocation10], 4
      %s91 = int_to_ptr.vmem [resolvable:$true] %s90
      %96 = dma.hbm_to_vmem [thread:$0]  %s8, 2048, %s91, [#allocation9], 64, 64, 4
    $region37: #{tpu_custom_call.1} parent=1 // pred_fallthru
      _
    // Predicated region
    $region38: #{tpu_custom_call.1} parent=1 // pred_check
      _
    $region39: #{tpu_custom_call.1} parent=1 // pred_check_branch
      %98 = sbr.rel (0) target = $region41
    $region40: #{tpu_custom_call.1} parent=1 // pred_region
      _
    $region41: #{tpu_custom_call.1} parent=1 // pred_fallthru
      _
    // Predicated region
    $region42: #{tpu_custom_call.1} parent=1 // pred_check
      _
    $region43: #{tpu_custom_call.1} parent=1 // pred_check_branch
      %100 = sbr.rel (0) target = $region45
    $region44: #{tpu_custom_call.1} parent=1 // pred_region
      %s102 = ssub.s32 512, 512
      %103 = vsyncadd [#allocation12], %s102
      %s104 = sshll.u32 [#allocation11], 4
      %s105 = int_to_ptr.vmem [resolvable:$true] %s104
      %110 = dma.hbm_to_vmem [thread:$0]  %s10, 512, %s105, [#allocation12], 128, 128, 8
    $region45: #{tpu_custom_call.1} parent=1 // pred_fallthru
      _
    // Predicated region
    $region46: #{tpu_custom_call.1} parent=1 // pred_check
      _
    $region47: #{tpu_custom_call.1} parent=1 // pred_check_branch
      %112 = sbr.rel (0) target = $region49
    $region48: #{tpu_custom_call.1} parent=1 // pred_region
      _
    $region49: #{tpu_custom_call.1} parent=1 // pred_fallthru
      _
    // Predicated region
    $region50: #{tpu_custom_call.1} parent=1 // pred_check
      _
    $region51: #{tpu_custom_call.1} parent=1 // pred_check_branch
      %114 = sbr.rel (0) target = $region53
    $region52: #{tpu_custom_call.1} parent=1 // pred_region
      _
    $region53: #{tpu_custom_call.1} parent=1 // pred_fallthru
      _
    // Predicated region
    $region54: #{tpu_custom_call.1} parent=1 // pred_check
      _
    $region55: #{tpu_custom_call.1} parent=1 // pred_check_branch
      %116 = sbr.rel (0) target = $region57
    $region56: #{tpu_custom_call.1} parent=1 // pred_region
      _
    $region57: #{tpu_custom_call.1} parent=1 // pred_fallthru
      _
    // Predicated region
    $region58: #{tpu_custom_call.1} parent=1 // pred_check
      _
    $region59: #{tpu_custom_call.1} parent=1 // pred_check_branch
      %118 = sbr.rel (0) target = $region61
    $region60: #{tpu_custom_call.1} parent=1 // pred_region
      _
    $region61: #{tpu_custom_call.1} parent=1 // pred_fallthru
      _
    // Predicated region
    $region62: #{tpu_custom_call.1} parent=1 // pred_check
      _
    $region63: #{tpu_custom_call.1} parent=1 // pred_check_branch
      %120 = sbr.rel (0) target = $region65
    $region64: #{tpu_custom_call.1} parent=1 // pred_region
      _
    $region65: #{tpu_custom_call.1} parent=1 // pred_fallthru
      _
    // Predicated region
    $region66: #{tpu_custom_call.1} parent=1 // pred_check
      _
    $region67: #{tpu_custom_call.1} parent=1 // pred_check_branch
      %122 = sbr.rel (0) target = $region69
    $region68: #{tpu_custom_call.1} parent=1 // pred_region
      _
    $region69: #{tpu_custom_call.1} parent=1 // pred_fallthru
      _
    // Predicated region
    $region70: #{tpu_custom_call.1} parent=1 // pred_check
      _
    $region71: #{tpu_custom_call.1} parent=1 // pred_check_branch
      %124 = sbr.rel (0) target = $region73
    $region72: #{tpu_custom_call.1} parent=1 // pred_region
      _
    $region73: #{tpu_custom_call.1} parent=1 // pred_fallthru
      _
    // Predicated region
    $region74: #{tpu_custom_call.1} parent=1 // pred_check
      _
    $region75: #{tpu_custom_call.1} parent=1 // pred_check_branch
      %126 = sbr.rel (0) target = $region77
    $region76: #{tpu_custom_call.1} parent=1 // pred_region
      _
    $region77: #{tpu_custom_call.1} parent=1 // pred_fallthru
      _
    // Predicated region
    $region78: #{tpu_custom_call.1} parent=1 // pred_check
      _
    $region79: #{tpu_custom_call.1} parent=1 // pred_check_branch
      %128 = sbr.rel (0) target = $region81
    $region80: #{tpu_custom_call.1} parent=1 // pred_region
      _
    $region81: #{tpu_custom_call.1} parent=1 // pred_fallthru
      _
    // Predicated region
    $region82: #{tpu_custom_call.1} parent=1 // pred_check
      _
    $region83: #{tpu_custom_call.1} parent=1 // pred_check_branch
      %130 = sbr.rel (0) target = $region85
    $region84: #{tpu_custom_call.1} parent=1 // pred_region
      %131 = dma.done [#allocation4], 512
    $region85: #{tpu_custom_call.1} parent=1 // pred_fallthru
      _
    // Predicated region
    $region86: #{tpu_custom_call.1} parent=1 // pred_check
      _
    $region87: #{tpu_custom_call.1} parent=1 // pred_check_branch
      %133 = sbr.rel (0) target = $region89
    $region88: #{tpu_custom_call.1} parent=1 // pred_region
      %134 = dma.done [#allocation6], 32768
    $region89: #{tpu_custom_call.1} parent=1 // pred_fallthru
      _
    // Predicated region
    $region90: #{tpu_custom_call.1} parent=1 // pred_check
      _
    $region91: #{tpu_custom_call.1} parent=1 // pred_check_branch
      %136 = sbr.rel (0) target = $region93
    $region92: #{tpu_custom_call.1} parent=1 // pred_region
      %137 = dma.done [#allocation6], 512
    $region93: #{tpu_custom_call.1} parent=1 // pred_fallthru
      _
    // Predicated region
    $region94: #{tpu_custom_call.1} parent=1 // pred_check
      _
    $region95: #{tpu_custom_call.1} parent=1 // pred_check_branch
      %139 = sbr.rel (0) target = $region97
    $region96: #{tpu_custom_call.1} parent=1 // pred_region
      %140 = dma.done [#allocation9], 16
    $region97: #{tpu_custom_call.1} parent=1 // pred_fallthru
      _
    // Predicated region
    $region98: #{tpu_custom_call.1} parent=1 // pred_check
      _
    $region99: #{tpu_custom_call.1} parent=1 // pred_check_branch
      %142 = sbr.rel (0) target = $region101
    $region100: #{tpu_custom_call.1} parent=1 // pred_region
      %143 = dma.done [#allocation9], 2048
    $region101: #{tpu_custom_call.1} parent=1 // pred_fallthru
      _
    // Predicated region
    $region102: #{tpu_custom_call.1} parent=1 // pred_check
      _
    $region103: #{tpu_custom_call.1} parent=1 // pred_check_branch
      %145 = sbr.rel (0) target = $region105
    $region104: #{tpu_custom_call.1} parent=1 // pred_region
      %146 = dma.done [#allocation12], 512
    $region105: #{tpu_custom_call.1} parent=1 // pred_fallthru
      _
    %v148 = vld [vmem:[#allocation3] sm:$0xff]
    %v149 = vld [vmem:[#allocation3 + $0x8] sm:$0xff]
    %v150 = vld [vmem:[#allocation3 + $0x10] sm:$0xff]
    %v151 = vld [vmem:[#allocation3 + $0x18] sm:$0xff]
    %v156 = vcombine.high %v148, %v148
    %v157 = vcombine.high %v149, %v149
    %v158 = vcombine.high %v150, %v150
    %v159 = vcombine.high %v151, %v151
    %v164 = vpack.c.bf16 %v148, %v148
    %v165 = vpack.c.bf16 %v156, %v156
    %v166 = vpack.c.bf16 %v149, %v149
    %v167 = vpack.c.bf16 %v157, %v157
    %v168 = vpack.c.bf16 %v150, %v150
    %v169 = vpack.c.bf16 %v158, %v158
    %v170 = vpack.c.bf16 %v151, %v151
    %v171 = vpack.c.bf16 %v159, %v159
    %v172 = vld [vmem:[#allocation5] sm:$0xff]
    %v173 = vld [vmem:[#allocation5 + $0x8] sm:$0xff]
    %v174 = vld [vmem:[#allocation5 + $0x10] sm:$0xff]
    %v175 = vld [vmem:[#allocation5 + $0x18] sm:$0xff]
    %v176 = vld [vmem:[#allocation5 + $0x20] sm:$0xff]
    %v177 = vld [vmem:[#allocation5 + $0x28] sm:$0xff]
    %v178 = vld [vmem:[#allocation5 + $0x30] sm:$0xff]
    %v179 = vld [vmem:[#allocation5 + $0x38] sm:$0xff]
    %v180 = vld [vmem:[#allocation5 + $0x40] sm:$0xff]
    %v181 = vld [vmem:[#allocation5 + $0x48] sm:$0xff]
    %v182 = vld [vmem:[#allocation5 + $0x50] sm:$0xff]
    %v183 = vld [vmem:[#allocation5 + $0x58] sm:$0xff]
    %v184 = vld [vmem:[#allocation5 + $0x60] sm:$0xff]
    %v185 = vld [vmem:[#allocation5 + $0x68] sm:$0xff]
    %v186 = vld [vmem:[#allocation5 + $0x70] sm:$0xff]
    %v187 = vld [vmem:[#allocation5 + $0x78] sm:$0xff]
    %v188 = vld [vmem:[#allocation5 + $0x80] sm:$0xff]
    %v189 = vld [vmem:[#allocation5 + $0x88] sm:$0xff]
    %v190 = vld [vmem:[#allocation5 + $0x90] sm:$0xff]
    %v191 = vld [vmem:[#allocation5 + $0x98] sm:$0xff]
    %v192 = vld [vmem:[#allocation5 + $0xa0] sm:$0xff]
    %v193 = vld [vmem:[#allocation5 + $0xa8] sm:$0xff]
    %v194 = vld [vmem:[#allocation5 + $0xb0] sm:$0xff]
    %v195 = vld [vmem:[#allocation5 + $0xb8] sm:$0xff]
    %v196 = vld [vmem:[#allocation5 + $0xc0] sm:$0xff]
    %v197 = vld [vmem:[#allocation5 + $0xc8] sm:$0xff]
    %v198 = vld [vmem:[#allocation5 + $0xd0] sm:$0xff]
    %v199 = vld [vmem:[#allocation5 + $0xd8] sm:$0xff]
    %v200 = vld [vmem:[#allocation5 + $0xe0] sm:$0xff]
    %v201 = vld [vmem:[#allocation5 + $0xe8] sm:$0xff]
    %v202 = vld [vmem:[#allocation5 + $0xf0] sm:$0xff]
    %v203 = vld [vmem:[#allocation5 + $0xf8] sm:$0xff]
    %v204 = vld [vmem:[#allocation5 + $0x100] sm:$0xff]
    %v205 = vld [vmem:[#allocation5 + $0x108] sm:$0xff]
    %v206 = vld [vmem:[#allocation5 + $0x110] sm:$0xff]
    %v207 = vld [vmem:[#allocation5 + $0x118] sm:$0xff]
    %v208 = vld [vmem:[#allocation5 + $0x120] sm:$0xff]
    %v209 = vld [vmem:[#allocation5 + $0x128] sm:$0xff]
    %v210 = vld [vmem:[#allocation5 + $0x130] sm:$0xff]
    %v211 = vld [vmem:[#allocation5 + $0x138] sm:$0xff]
    %v212 = vld [vmem:[#allocation5 + $0x140] sm:$0xff]
    %v213 = vld [vmem:[#allocation5 + $0x148] sm:$0xff]
    %v214 = vld [vmem:[#allocation5 + $0x150] sm:$0xff]
    %v215 = vld [vmem:[#allocation5 + $0x158] sm:$0xff]
    %v216 = vld [vmem:[#allocation5 + $0x160] sm:$0xff]
    %v217 = vld [vmem:[#allocation5 + $0x168] sm:$0xff]
    %v218 = vld [vmem:[#allocation5 + $0x170] sm:$0xff]
    %v219 = vld [vmem:[#allocation5 + $0x178] sm:$0xff]
    %v220 = vld [vmem:[#allocation5 + $0x180] sm:$0xff]
    %v221 = vld [vmem:[#allocation5 + $0x188] sm:$0xff]
    %v222 = vld [vmem:[#allocation5 + $0x190] sm:$0xff]
    %v223 = vld [vmem:[#allocation5 + $0x198] sm:$0xff]
    %v224 = vld [vmem:[#allocation5 + $0x1a0] sm:$0xff]
    %v225 = vld [vmem:[#allocation5 + $0x1a8] sm:$0xff]
    %v226 = vld [vmem:[#allocation5 + $0x1b0] sm:$0xff]
    %v227 = vld [vmem:[#allocation5 + $0x1b8] sm:$0xff]
    %v228 = vld [vmem:[#allocation5 + $0x1c0] sm:$0xff]
    %v229 = vld [vmem:[#allocation5 + $0x1c8] sm:$0xff]
    %v230 = vld [vmem:[#allocation5 + $0x1d0] sm:$0xff]
    %v231 = vld [vmem:[#allocation5 + $0x1d8] sm:$0xff]
    %v232 = vld [vmem:[#allocation5 + $0x1e0] sm:$0xff]
    %v233 = vld [vmem:[#allocation5 + $0x1e8] sm:$0xff]
    %v234 = vld [vmem:[#allocation5 + $0x1f0] sm:$0xff]
    %v235 = vld [vmem:[#allocation5 + $0x1f8] sm:$0xff]
    %v236 = vld [vmem:[#allocation5 + $0x200] sm:$0xff]
    %v237 = vld [vmem:[#allocation5 + $0x208] sm:$0xff]
    %v238 = vld [vmem:[#allocation5 + $0x210] sm:$0xff]
    %v239 = vld [vmem:[#allocation5 + $0x218] sm:$0xff]
    %v240 = vld [vmem:[#allocation5 + $0x220] sm:$0xff]
    %v241 = vld [vmem:[#allocation5 + $0x228] sm:$0xff]
    %v242 = vld [vmem:[#allocation5 + $0x230] sm:$0xff]
    %v243 = vld [vmem:[#allocation5 + $0x238] sm:$0xff]
    %v244 = vld [vmem:[#allocation5 + $0x240] sm:$0xff]
    %v245 = vld [vmem:[#allocation5 + $0x248] sm:$0xff]
    %v246 = vld [vmem:[#allocation5 + $0x250] sm:$0xff]
    %v247 = vld [vmem:[#allocation5 + $0x258] sm:$0xff]
    %v248 = vld [vmem:[#allocation5 + $0x260] sm:$0xff]
    %v249 = vld [vmem:[#allocation5 + $0x268] sm:$0xff]
    %v250 = vld [vmem:[#allocation5 + $0x270] sm:$0xff]
    %v251 = vld [vmem:[#allocation5 + $0x278] sm:$0xff]
    %v252 = vld [vmem:[#allocation5 + $0x280] sm:$0xff]
    %v253 = vld [vmem:[#allocation5 + $0x288] sm:$0xff]
    %v254 = vld [vmem:[#allocation5 + $0x290] sm:$0xff]
    %v255 = vld [vmem:[#allocation5 + $0x298] sm:$0xff]
    %v256 = vld [vmem:[#allocation5 + $0x2a0] sm:$0xff]
    %v257 = vld [vmem:[#allocation5 + $0x2a8] sm:$0xff]
    %v258 = vld [vmem:[#allocation5 + $0x2b0] sm:$0xff]
    %v259 = vld [vmem:[#allocation5 + $0x2b8] sm:$0xff]
    %v260 = vld [vmem:[#allocation5 + $0x2c0] sm:$0xff]
    %v261 = vld [vmem:[#allocation5 + $0x2c8] sm:$0xff]
    %v262 = vld [vmem:[#allocation5 + $0x2d0] sm:$0xff]
    %v263 = vld [vmem:[#allocation5 + $0x2d8] sm:$0xff]
    %v264 = vld [vmem:[#allocation5 + $0x2e0] sm:$0xff]
    %v265 = vld [vmem:[#allocation5 + $0x2e8] sm:$0xff]
    %v266 = vld [vmem:[#allocation5 + $0x2f0] sm:$0xff]
    %v267 = vld [vmem:[#allocation5 + $0x2f8] sm:$0xff]
    %v268 = vld [vmem:[#allocation5 + $0x300] sm:$0xff]
    %v269 = vld [vmem:[#allocation5 + $0x308] sm:$0xff]
    %v270 = vld [vmem:[#allocation5 + $0x310] sm:$0xff]
    %v271 = vld [vmem:[#allocation5 + $0x318] sm:$0xff]
    %v272 = vld [vmem:[#allocation5 + $0x320] sm:$0xff]
    %v273 = vld [vmem:[#allocation5 + $0x328] sm:$0xff]
    %v274 = vld [vmem:[#allocation5 + $0x330] sm:$0xff]
    %v275 = vld [vmem:[#allocation5 + $0x338] sm:$0xff]
    %v276 = vld [vmem:[#allocation5 + $0x340] sm:$0xff]
    %v277 = vld [vmem:[#allocation5 + $0x348] sm:$0xff]
    %v278 = vld [vmem:[#allocation5 + $0x350] sm:$0xff]
    %v279 = vld [vmem:[#allocation5 + $0x358] sm:$0xff]
    %v280 = vld [vmem:[#allocation5 + $0x360] sm:$0xff]
    %v281 = vld [vmem:[#allocation5 + $0x368] sm:$0xff]
    %v282 = vld [vmem:[#allocation5 + $0x370] sm:$0xff]
    %v283 = vld [vmem:[#allocation5 + $0x378] sm:$0xff]
    %v284 = vld [vmem:[#allocation5 + $0x380] sm:$0xff]
    %v285 = vld [vmem:[#allocation5 + $0x388] sm:$0xff]
    %v286 = vld [vmem:[#allocation5 + $0x390] sm:$0xff]
    %v287 = vld [vmem:[#allocation5 + $0x398] sm:$0xff]
    %v288 = vld [vmem:[#allocation5 + $0x3a0] sm:$0xff]
    %v289 = vld [vmem:[#allocation5 + $0x3a8] sm:$0xff]
    %v290 = vld [vmem:[#allocation5 + $0x3b0] sm:$0xff]
    %v291 = vld [vmem:[#allocation5 + $0x3b8] sm:$0xff]
    %v292 = vld [vmem:[#allocation5 + $0x3c0] sm:$0xff]
    %v293 = vld [vmem:[#allocation5 + $0x3c8] sm:$0xff]
    %v294 = vld [vmem:[#allocation5 + $0x3d0] sm:$0xff]
    %v295 = vld [vmem:[#allocation5 + $0x3d8] sm:$0xff]
    %v296 = vld [vmem:[#allocation5 + $0x3e0] sm:$0xff]
    %v297 = vld [vmem:[#allocation5 + $0x3e8] sm:$0xff]
    %v298 = vld [vmem:[#allocation5 + $0x3f0] sm:$0xff]
    %v299 = vld [vmem:[#allocation5 + $0x3f8] sm:$0xff]
    %v300 = vld [vmem:[#allocation5 + $0x400] sm:$0xff]
    %v301 = vld [vmem:[#allocation5 + $0x408] sm:$0xff]
    %v302 = vld [vmem:[#allocation5 + $0x410] sm:$0xff]
    %v303 = vld [vmem:[#allocation5 + $0x418] sm:$0xff]
    %v304 = vld [vmem:[#allocation5 + $0x420] sm:$0xff]
    %v305 = vld [vmem:[#allocation5 + $0x428] sm:$0xff]
    %v306 = vld [vmem:[#allocation5 + $0x430] sm:$0xff]
    %v307 = vld [vmem:[#allocation5 + $0x438] sm:$0xff]
    %v308 = vld [vmem:[#allocation5 + $0x440] sm:$0xff]
    %v309 = vld [vmem:[#allocation5 + $0x448] sm:$0xff]
    %v310 = vld [vmem:[#allocation5 + $0x450] sm:$0xff]
    %v311 = vld [vmem:[#allocation5 + $0x458] sm:$0xff]
    %v312 = vld [vmem:[#allocation5 + $0x460] sm:$0xff]
    %v313 = vld [vmem:[#allocation5 + $0x468] sm:$0xff]
    %v314 = vld [vmem:[#allocation5 + $0x470] sm:$0xff]
    %v315 = vld [vmem:[#allocation5 + $0x478] sm:$0xff]
    %v316 = vld [vmem:[#allocation5 + $0x480] sm:$0xff]
    %v317 = vld [vmem:[#allocation5 + $0x488] sm:$0xff]
    %v318 = vld [vmem:[#allocation5 + $0x490] sm:$0xff]
    %v319 = vld [vmem:[#allocation5 + $0x498] sm:$0xff]
    %v320 = vld [vmem:[#allocation5 + $0x4a0] sm:$0xff]
    %v321 = vld [vmem:[#allocation5 + $0x4a8] sm:$0xff]
    %v322 = vld [vmem:[#allocation5 + $0x4b0] sm:$0xff]
    %v323 = vld [vmem:[#allocation5 + $0x4b8] sm:$0xff]
    %v324 = vld [vmem:[#allocation5 + $0x4c0] sm:$0xff]
    %v325 = vld [vmem:[#allocation5 + $0x4c8] sm:$0xff]
    %v326 = vld [vmem:[#allocation5 + $0x4d0] sm:$0xff]
    %v327 = vld [vmem:[#allocation5 + $0x4d8] sm:$0xff]
    %v328 = vld [vmem:[#allocation5 + $0x4e0] sm:$0xff]
    %v329 = vld [vmem:[#allocation5 + $0x4e8] sm:$0xff]
    %v330 = vld [vmem:[#allocation5 + $0x4f0] sm:$0xff]
    %v331 = vld [vmem:[#allocation5 + $0x4f8] sm:$0xff]
    %v332 = vld [vmem:[#allocation5 + $0x500] sm:$0xff]
    %v333 = vld [vmem:[#allocation5 + $0x508] sm:$0xff]
    %v334 = vld [vmem:[#allocation5 + $0x510] sm:$0xff]
    %v335 = vld [vmem:[#allocation5 + $0x518] sm:$0xff]
    %v336 = vld [vmem:[#allocation5 + $0x520] sm:$0xff]
    %v337 = vld [vmem:[#allocation5 + $0x528] sm:$0xff]
    %v338 = vld [vmem:[#allocation5 + $0x530] sm:$0xff]
    %v339 = vld [vmem:[#allocation5 + $0x538] sm:$0xff]
    %v340 = vld [vmem:[#allocation5 + $0x540] sm:$0xff]
    %v341 = vld [vmem:[#allocation5 + $0x548] sm:$0xff]
    %v342 = vld [vmem:[#allocation5 + $0x550] sm:$0xff]
    %v343 = vld [vmem:[#allocation5 + $0x558] sm:$0xff]
    %v344 = vld [vmem:[#allocation5 + $0x560] sm:$0xff]
    %v345 = vld [vmem:[#allocation5 + $0x568] sm:$0xff]
    %v346 = vld [vmem:[#allocation5 + $0x570] sm:$0xff]
    %v347 = vld [vmem:[#allocation5 + $0x578] sm:$0xff]
    %v348 = vld [vmem:[#allocation5 + $0x580] sm:$0xff]
    %v349 = vld [vmem:[#allocation5 + $0x588] sm:$0xff]
    %v350 = vld [vmem:[#allocation5 + $0x590] sm:$0xff]
    %v351 = vld [vmem:[#allocation5 + $0x598] sm:$0xff]
    %v352 = vld [vmem:[#allocation5 + $0x5a0] sm:$0xff]
    %v353 = vld [vmem:[#allocation5 + $0x5a8] sm:$0xff]
    %v354 = vld [vmem:[#allocation5 + $0x5b0] sm:$0xff]
    %v355 = vld [vmem:[#allocation5 + $0x5b8] sm:$0xff]
    %v356 = vld [vmem:[#allocation5 + $0x5c0] sm:$0xff]
    %v357 = vld [vmem:[#allocation5 + $0x5c8] sm:$0xff]
    %v358 = vld [vmem:[#allocation5 + $0x5d0] sm:$0xff]
    %v359 = vld [vmem:[#allocation5 + $0x5d8] sm:$0xff]
    %v360 = vld [vmem:[#allocation5 + $0x5e0] sm:$0xff]
    %v361 = vld [vmem:[#allocation5 + $0x5e8] sm:$0xff]
    %v362 = vld [vmem:[#allocation5 + $0x5f0] sm:$0xff]
    %v363 = vld [vmem:[#allocation5 + $0x5f8] sm:$0xff]
    %v364 = vld [vmem:[#allocation5 + $0x600] sm:$0xff]
    %v365 = vld [vmem:[#allocation5 + $0x608] sm:$0xff]
    %v366 = vld [vmem:[#allocation5 + $0x610] sm:$0xff]
    %v367 = vld [vmem:[#allocation5 + $0x618] sm:$0xff]
    %v368 = vld [vmem:[#allocation5 + $0x620] sm:$0xff]
    %v369 = vld [vmem:[#allocation5 + $0x628] sm:$0xff]
    %v370 = vld [vmem:[#allocation5 + $0x630] sm:$0xff]
    %v371 = vld [vmem:[#allocation5 + $0x638] sm:$0xff]
    %v372 = vld [vmem:[#allocation5 + $0x640] sm:$0xff]
    %v373 = vld [vmem:[#allocation5 + $0x648] sm:$0xff]
    %v374 = vld [vmem:[#allocation5 + $0x650] sm:$0xff]
    %v375 = vld [vmem:[#allocation5 + $0x658] sm:$0xff]
    %v376 = vld [vmem:[#allocation5 + $0x660] sm:$0xff]
    %v377 = vld [vmem:[#allocation5 + $0x668] sm:$0xff]
    %v378 = vld [vmem:[#allocation5 + $0x670] sm:$0xff]
    %v379 = vld [vmem:[#allocation5 + $0x678] sm:$0xff]
    %v380 = vld [vmem:[#allocation5 + $0x680] sm:$0xff]
    %v381 = vld [vmem:[#allocation5 + $0x688] sm:$0xff]
    %v382 = vld [vmem:[#allocation5 + $0x690] sm:$0xff]
    %v383 = vld [vmem:[#allocation5 + $0x698] sm:$0xff]
    %v384 = vld [vmem:[#allocation5 + $0x6a0] sm:$0xff]
    %v385 = vld [vmem:[#allocation5 + $0x6a8] sm:$0xff]
    %v386 = vld [vmem:[#allocation5 + $0x6b0] sm:$0xff]
    %v387 = vld [vmem:[#allocation5 + $0x6b8] sm:$0xff]
    %v388 = vld [vmem:[#allocation5 + $0x6c0] sm:$0xff]
    %v389 = vld [vmem:[#allocation5 + $0x6c8] sm:$0xff]
    %v390 = vld [vmem:[#allocation5 + $0x6d0] sm:$0xff]
    %v391 = vld [vmem:[#allocation5 + $0x6d8] sm:$0xff]
    %v392 = vld [vmem:[#allocation5 + $0x6e0] sm:$0xff]
    %v393 = vld [vmem:[#allocation5 + $0x6e8] sm:$0xff]
    %v394 = vld [vmem:[#allocation5 + $0x6f0] sm:$0xff]
    %v395 = vld [vmem:[#allocation5 + $0x6f8] sm:$0xff]
    %v396 = vld [vmem:[#allocation5 + $0x700] sm:$0xff]
    %v397 = vld [vmem:[#allocation5 + $0x708] sm:$0xff]
    %v398 = vld [vmem:[#allocation5 + $0x710] sm:$0xff]
    %v399 = vld [vmem:[#allocation5 + $0x718] sm:$0xff]
    %v400 = vld [vmem:[#allocation5 + $0x720] sm:$0xff]
    %v401 = vld [vmem:[#allocation5 + $0x728] sm:$0xff]
    %v402 = vld [vmem:[#allocation5 + $0x730] sm:$0xff]
    %v403 = vld [vmem:[#allocation5 + $0x738] sm:$0xff]
    %v404 = vld [vmem:[#allocation5 + $0x740] sm:$0xff]
    %v405 = vld [vmem:[#allocation5 + $0x748] sm:$0xff]
    %v406 = vld [vmem:[#allocation5 + $0x750] sm:$0xff]
    %v407 = vld [vmem:[#allocation5 + $0x758] sm:$0xff]
    %v408 = vld [vmem:[#allocation5 + $0x760] sm:$0xff]
    %v409 = vld [vmem:[#allocation5 + $0x768] sm:$0xff]
    %v410 = vld [vmem:[#allocation5 + $0x770] sm:$0xff]
    %v411 = vld [vmem:[#allocation5 + $0x778] sm:$0xff]
    %v412 = vld [vmem:[#allocation5 + $0x780] sm:$0xff]
    %v413 = vld [vmem:[#allocation5 + $0x788] sm:$0xff]
    %v414 = vld [vmem:[#allocation5 + $0x790] sm:$0xff]
    %v415 = vld [vmem:[#allocation5 + $0x798] sm:$0xff]
    %v416 = vld [vmem:[#allocation5 + $0x7a0] sm:$0xff]
    %v417 = vld [vmem:[#allocation5 + $0x7a8] sm:$0xff]
    %v418 = vld [vmem:[#allocation5 + $0x7b0] sm:$0xff]
    %v419 = vld [vmem:[#allocation5 + $0x7b8] sm:$0xff]
    %v420 = vld [vmem:[#allocation5 + $0x7c0] sm:$0xff]
    %v421 = vld [vmem:[#allocation5 + $0x7c8] sm:$0xff]
    %v422 = vld [vmem:[#allocation5 + $0x7d0] sm:$0xff]
    %v423 = vld [vmem:[#allocation5 + $0x7d8] sm:$0xff]
    %v424 = vld [vmem:[#allocation5 + $0x7e0] sm:$0xff]
    %v425 = vld [vmem:[#allocation5 + $0x7e8] sm:$0xff]
    %v426 = vld [vmem:[#allocation5 + $0x7f0] sm:$0xff]
    %v427 = vld [vmem:[#allocation5 + $0x7f8] sm:$0xff]
    %v428 = vld [vmem:[%s2] sm:$0xf]
    %v430 = vlaneseq
    %v431 = vshrl.u32 %v430, 7
    %v432 = vsub.s32 0, %v431
    %v433 = vrot.slane %v428, %v432
    %v434 = vlaneseq
    %v435 = vshrl.u32 %v434, 7
    %v436 = vsub.s32 1, %v435
    %v437 = vrot.slane %v428, %v436
    %v438 = vlaneseq
    %v439 = vshrl.u32 %v438, 7
    %v440 = vsub.s32 2, %v439
    %v441 = vrot.slane %v428, %v440
    %v442 = vlaneseq
    %v443 = vshrl.u32 %v442, 7
    %v444 = vsub.s32 3, %v443
    %v445 = vrot.slane %v428, %v444
    %v706 = vunpack.c.l.b16 %v172
    %v707 = vunpack.c.h.b16 %v172
    %v708 = vunpack.c.l.b16 %v173
    %v709 = vunpack.c.h.b16 %v173
    %v710 = vunpack.c.l.b16 %v174
    %v711 = vunpack.c.h.b16 %v174
    %v712 = vunpack.c.l.b16 %v175
    %v713 = vunpack.c.h.b16 %v175
    %v714 = vunpack.c.l.b16 %v176
    %v715 = vunpack.c.h.b16 %v176
    %v716 = vunpack.c.l.b16 %v177
    %v717 = vunpack.c.h.b16 %v177
    %v718 = vunpack.c.l.b16 %v178
    %v719 = vunpack.c.h.b16 %v178
    %v720 = vunpack.c.l.b16 %v179
    %v721 = vunpack.c.h.b16 %v179
    %v722 = vunpack.c.l.b16 %v180
    %v723 = vunpack.c.h.b16 %v180
    %v724 = vunpack.c.l.b16 %v181
    %v725 = vunpack.c.h.b16 %v181
    %v726 = vunpack.c.l.b16 %v182
    %v727 = vunpack.c.h.b16 %v182
    %v728 = vunpack.c.l.b16 %v183
    %v729 = vunpack.c.h.b16 %v183
    %v730 = vunpack.c.l.b16 %v184
    %v731 = vunpack.c.h.b16 %v184
    %v732 = vunpack.c.l.b16 %v185
    %v733 = vunpack.c.h.b16 %v185
    %v734 = vunpack.c.l.b16 %v186
    %v735 = vunpack.c.h.b16 %v186
    %v736 = vunpack.c.l.b16 %v187
    %v737 = vunpack.c.h.b16 %v187
    %v738 = vunpack.c.l.b16 %v188
    %v739 = vunpack.c.h.b16 %v188
    %v740 = vunpack.c.l.b16 %v189
    %v741 = vunpack.c.h.b16 %v189
    %v742 = vunpack.c.l.b16 %v190
    %v743 = vunpack.c.h.b16 %v190
    %v744 = vunpack.c.l.b16 %v191
    %v745 = vunpack.c.h.b16 %v191
    %v746 = vunpack.c.l.b16 %v192
    %v747 = vunpack.c.h.b16 %v192
    %v748 = vunpack.c.l.b16 %v193
    %v749 = vunpack.c.h.b16 %v193
    %v750 = vunpack.c.l.b16 %v194
    %v751 = vunpack.c.h.b16 %v194
    %v752 = vunpack.c.l.b16 %v195
    %v753 = vunpack.c.h.b16 %v195
    %v754 = vunpack.c.l.b16 %v196
    %v755 = vunpack.c.h.b16 %v196
    %v756 = vunpack.c.l.b16 %v197
    %v757 = vunpack.c.h.b16 %v197
    %v758 = vunpack.c.l.b16 %v198
    %v759 = vunpack.c.h.b16 %v198
    %v760 = vunpack.c.l.b16 %v199
    %v761 = vunpack.c.h.b16 %v199
    %v762 = vunpack.c.l.b16 %v200
    %v763 = vunpack.c.h.b16 %v200
    %v764 = vunpack.c.l.b16 %v201
    %v765 = vunpack.c.h.b16 %v201
    %v766 = vunpack.c.l.b16 %v202
    %v767 = vunpack.c.h.b16 %v202
    %v768 = vunpack.c.l.b16 %v203
    %v769 = vunpack.c.h.b16 %v203
    %v770 = vunpack.c.l.b16 %v204
    %v771 = vunpack.c.h.b16 %v204
    %v772 = vunpack.c.l.b16 %v205
    %v773 = vunpack.c.h.b16 %v205
    %v774 = vunpack.c.l.b16 %v206
    %v775 = vunpack.c.h.b16 %v206
    %v776 = vunpack.c.l.b16 %v207
    %v777 = vunpack.c.h.b16 %v207
    %v778 = vunpack.c.l.b16 %v208
    %v779 = vunpack.c.h.b16 %v208
    %v780 = vunpack.c.l.b16 %v209
    %v781 = vunpack.c.h.b16 %v209
    %v782 = vunpack.c.l.b16 %v210
    %v783 = vunpack.c.h.b16 %v210
    %v784 = vunpack.c.l.b16 %v211
    %v785 = vunpack.c.h.b16 %v211
    %v786 = vunpack.c.l.b16 %v212
    %v787 = vunpack.c.h.b16 %v212
    %v788 = vunpack.c.l.b16 %v213
    %v789 = vunpack.c.h.b16 %v213
    %v790 = vunpack.c.l.b16 %v214
    %v791 = vunpack.c.h.b16 %v214
    %v792 = vunpack.c.l.b16 %v215
    %v793 = vunpack.c.h.b16 %v215
    %v794 = vunpack.c.l.b16 %v216
    %v795 = vunpack.c.h.b16 %v216
    %v796 = vunpack.c.l.b16 %v217
    %v797 = vunpack.c.h.b16 %v217
    %v798 = vunpack.c.l.b16 %v218
    %v799 = vunpack.c.h.b16 %v218
    %v800 = vunpack.c.l.b16 %v219
    %v801 = vunpack.c.h.b16 %v219
    %v802 = vunpack.c.l.b16 %v220
    %v803 = vunpack.c.h.b16 %v220
    %v804 = vunpack.c.l.b16 %v221
    %v805 = vunpack.c.h.b16 %v221
    %v806 = vunpack.c.l.b16 %v222
    %v807 = vunpack.c.h.b16 %v222
    %v808 = vunpack.c.l.b16 %v223
    %v809 = vunpack.c.h.b16 %v223
    %v810 = vunpack.c.l.b16 %v224
    %v811 = vunpack.c.h.b16 %v224
    %v812 = vunpack.c.l.b16 %v225
    %v813 = vunpack.c.h.b16 %v225
    %v814 = vunpack.c.l.b16 %v226
    %v815 = vunpack.c.h.b16 %v226
    %v816 = vunpack.c.l.b16 %v227
    %v817 = vunpack.c.h.b16 %v227
    %v818 = vunpack.c.l.b16 %v228
    %v819 = vunpack.c.h.b16 %v228
    %v820 = vunpack.c.l.b16 %v229
    %v821 = vunpack.c.h.b16 %v229
    %v822 = vunpack.c.l.b16 %v230
    %v823 = vunpack.c.h.b16 %v230
    %v824 = vunpack.c.l.b16 %v231
    %v825 = vunpack.c.h.b16 %v231
    %v826 = vunpack.c.l.b16 %v232
    %v827 = vunpack.c.h.b16 %v232
    %v828 = vunpack.c.l.b16 %v233
    %v829 = vunpack.c.h.b16 %v233
    %v830 = vunpack.c.l.b16 %v234
    %v831 = vunpack.c.h.b16 %v234
    %v832 = vunpack.c.l.b16 %v235
    %v833 = vunpack.c.h.b16 %v235
    %v834 = vunpack.c.l.b16 %v236
    %v835 = vunpack.c.h.b16 %v236
    %v836 = vunpack.c.l.b16 %v237
    %v837 = vunpack.c.h.b16 %v237
    %v838 = vunpack.c.l.b16 %v238
    %v839 = vunpack.c.h.b16 %v238
    %v840 = vunpack.c.l.b16 %v239
    %v841 = vunpack.c.h.b16 %v239
    %v842 = vunpack.c.l.b16 %v240
    %v843 = vunpack.c.h.b16 %v240
    %v844 = vunpack.c.l.b16 %v241
    %v845 = vunpack.c.h.b16 %v241
    %v846 = vunpack.c.l.b16 %v242
    %v847 = vunpack.c.h.b16 %v242
    %v848 = vunpack.c.l.b16 %v243
    %v849 = vunpack.c.h.b16 %v243
    %v850 = vunpack.c.l.b16 %v244
    %v851 = vunpack.c.h.b16 %v244
    %v852 = vunpack.c.l.b16 %v245
    %v853 = vunpack.c.h.b16 %v245
    %v854 = vunpack.c.l.b16 %v246
    %v855 = vunpack.c.h.b16 %v246
    %v856 = vunpack.c.l.b16 %v247
    %v857 = vunpack.c.h.b16 %v247
    %v858 = vunpack.c.l.b16 %v248
    %v859 = vunpack.c.h.b16 %v248
    %v860 = vunpack.c.l.b16 %v249
    %v861 = vunpack.c.h.b16 %v249
    %v862 = vunpack.c.l.b16 %v250
    %v863 = vunpack.c.h.b16 %v250
    %v864 = vunpack.c.l.b16 %v251
    %v865 = vunpack.c.h.b16 %v251
    %v866 = vunpack.c.l.b16 %v252
    %v867 = vunpack.c.h.b16 %v252
    %v868 = vunpack.c.l.b16 %v253
    %v869 = vunpack.c.h.b16 %v253
    %v870 = vunpack.c.l.b16 %v254
    %v871 = vunpack.c.h.b16 %v254
    %v872 = vunpack.c.l.b16 %v255
    %v873 = vunpack.c.h.b16 %v255
    %v874 = vunpack.c.l.b16 %v256
    %v875 = vunpack.c.h.b16 %v256
    %v876 = vunpack.c.l.b16 %v257
    %v877 = vunpack.c.h.b16 %v257
    %v878 = vunpack.c.l.b16 %v258
    %v879 = vunpack.c.h.b16 %v258
    %v880 = vunpack.c.l.b16 %v259
    %v881 = vunpack.c.h.b16 %v259
    %v882 = vunpack.c.l.b16 %v260
    %v883 = vunpack.c.h.b16 %v260
    %v884 = vunpack.c.l.b16 %v261
    %v885 = vunpack.c.h.b16 %v261
    %v886 = vunpack.c.l.b16 %v262
    %v887 = vunpack.c.h.b16 %v262
    %v888 = vunpack.c.l.b16 %v263
    %v889 = vunpack.c.h.b16 %v263
    %v890 = vunpack.c.l.b16 %v264
    %v891 = vunpack.c.h.b16 %v264
    %v892 = vunpack.c.l.b16 %v265
    %v893 = vunpack.c.h.b16 %v265
    %v894 = vunpack.c.l.b16 %v266
    %v895 = vunpack.c.h.b16 %v266
    %v896 = vunpack.c.l.b16 %v267
    %v897 = vunpack.c.h.b16 %v267
    %v898 = vunpack.c.l.b16 %v268
    %v899 = vunpack.c.h.b16 %v268
    %v900 = vunpack.c.l.b16 %v269
    %v901 = vunpack.c.h.b16 %v269
    %v902 = vunpack.c.l.b16 %v270
    %v903 = vunpack.c.h.b16 %v270
    %v904 = vunpack.c.l.b16 %v271
    %v905 = vunpack.c.h.b16 %v271
    %v906 = vunpack.c.l.b16 %v272
    %v907 = vunpack.c.h.b16 %v272
    %v908 = vunpack.c.l.b16 %v273
    %v909 = vunpack.c.h.b16 %v273
    %v910 = vunpack.c.l.b16 %v274
    %v911 = vunpack.c.h.b16 %v274
    %v912 = vunpack.c.l.b16 %v275
    %v913 = vunpack.c.h.b16 %v275
    %v914 = vunpack.c.l.b16 %v276
    %v915 = vunpack.c.h.b16 %v276
    %v916 = vunpack.c.l.b16 %v277
    %v917 = vunpack.c.h.b16 %v277
    %v918 = vunpack.c.l.b16 %v278
    %v919 = vunpack.c.h.b16 %v278
    %v920 = vunpack.c.l.b16 %v279
    %v921 = vunpack.c.h.b16 %v279
    %v922 = vunpack.c.l.b16 %v280
    %v923 = vunpack.c.h.b16 %v280
    %v924 = vunpack.c.l.b16 %v281
    %v925 = vunpack.c.h.b16 %v281
    %v926 = vunpack.c.l.b16 %v282
    %v927 = vunpack.c.h.b16 %v282
    %v928 = vunpack.c.l.b16 %v283
    %v929 = vunpack.c.h.b16 %v283
    %v930 = vunpack.c.l.b16 %v284
    %v931 = vunpack.c.h.b16 %v284
    %v932 = vunpack.c.l.b16 %v285
    %v933 = vunpack.c.h.b16 %v285
    %v934 = vunpack.c.l.b16 %v286
    %v935 = vunpack.c.h.b16 %v286
    %v936 = vunpack.c.l.b16 %v287
    %v937 = vunpack.c.h.b16 %v287
    %v938 = vunpack.c.l.b16 %v288
    %v939 = vunpack.c.h.b16 %v288
    %v940 = vunpack.c.l.b16 %v289
    %v941 = vunpack.c.h.b16 %v289
    %v942 = vunpack.c.l.b16 %v290
    %v943 = vunpack.c.h.b16 %v290
    %v944 = vunpack.c.l.b16 %v291
    %v945 = vunpack.c.h.b16 %v291
    %v946 = vunpack.c.l.b16 %v292
    %v947 = vunpack.c.h.b16 %v292
    %v948 = vunpack.c.l.b16 %v293
    %v949 = vunpack.c.h.b16 %v293
    %v950 = vunpack.c.l.b16 %v294
    %v951 = vunpack.c.h.b16 %v294
    %v952 = vunpack.c.l.b16 %v295
    %v953 = vunpack.c.h.b16 %v295
    %v954 = vunpack.c.l.b16 %v296
    %v955 = vunpack.c.h.b16 %v296
    %v956 = vunpack.c.l.b16 %v297
    %v957 = vunpack.c.h.b16 %v297
    %v958 = vunpack.c.l.b16 %v298
    %v959 = vunpack.c.h.b16 %v298
    %v960 = vunpack.c.l.b16 %v299
    %v961 = vunpack.c.h.b16 %v299
    %v962 = vunpack.c.l.b16 %v300
    %v963 = vunpack.c.h.b16 %v300
    %v964 = vunpack.c.l.b16 %v301
    %v965 = vunpack.c.h.b16 %v301
    %v966 = vunpack.c.l.b16 %v302
    %v967 = vunpack.c.h.b16 %v302
    %v968 = vunpack.c.l.b16 %v303
    %v969 = vunpack.c.h.b16 %v303
    %v970 = vunpack.c.l.b16 %v304
    %v971 = vunpack.c.h.b16 %v304
    %v972 = vunpack.c.l.b16 %v305
    %v973 = vunpack.c.h.b16 %v305
    %v974 = vunpack.c.l.b16 %v306
    %v975 = vunpack.c.h.b16 %v306
    %v976 = vunpack.c.l.b16 %v307
    %v977 = vunpack.c.h.b16 %v307
    %v978 = vunpack.c.l.b16 %v308
    %v979 = vunpack.c.h.b16 %v308
    %v980 = vunpack.c.l.b16 %v309
    %v981 = vunpack.c.h.b16 %v309
    %v982 = vunpack.c.l.b16 %v310
    %v983 = vunpack.c.h.b16 %v310
    %v984 = vunpack.c.l.b16 %v311
    %v985 = vunpack.c.h.b16 %v311
    %v986 = vunpack.c.l.b16 %v312
    %v987 = vunpack.c.h.b16 %v312
    %v988 = vunpack.c.l.b16 %v313
    %v989 = vunpack.c.h.b16 %v313
    %v990 = vunpack.c.l.b16 %v314
    %v991 = vunpack.c.h.b16 %v314
    %v992 = vunpack.c.l.b16 %v315
    %v993 = vunpack.c.h.b16 %v315
    %v994 = vunpack.c.l.b16 %v316
    %v995 = vunpack.c.h.b16 %v316
    %v996 = vunpack.c.l.b16 %v317
    %v997 = vunpack.c.h.b16 %v317
    %v998 = vunpack.c.l.b16 %v318
    %v999 = vunpack.c.h.b16 %v318
    %v1000 = vunpack.c.l.b16 %v319
    %v1001 = vunpack.c.h.b16 %v319
    %v1002 = vunpack.c.l.b16 %v320
    %v1003 = vunpack.c.h.b16 %v320
    %v1004 = vunpack.c.l.b16 %v321
    %v1005 = vunpack.c.h.b16 %v321
    %v1006 = vunpack.c.l.b16 %v322
    %v1007 = vunpack.c.h.b16 %v322
    %v1008 = vunpack.c.l.b16 %v323
    %v1009 = vunpack.c.h.b16 %v323
    %v1010 = vunpack.c.l.b16 %v324
    %v1011 = vunpack.c.h.b16 %v324
    %v1012 = vunpack.c.l.b16 %v325
    %v1013 = vunpack.c.h.b16 %v325
    %v1014 = vunpack.c.l.b16 %v326
    %v1015 = vunpack.c.h.b16 %v326
    %v1016 = vunpack.c.l.b16 %v327
    %v1017 = vunpack.c.h.b16 %v327
    %v1018 = vunpack.c.l.b16 %v328
    %v1019 = vunpack.c.h.b16 %v328
    %v1020 = vunpack.c.l.b16 %v329
    %v1021 = vunpack.c.h.b16 %v329
    %v1022 = vunpack.c.l.b16 %v330
    %v1023 = vunpack.c.h.b16 %v330
    %v1024 = vunpack.c.l.b16 %v331
    %v1025 = vunpack.c.h.b16 %v331
    %v1026 = vunpack.c.l.b16 %v332
    %v1027 = vunpack.c.h.b16 %v332
    %v1028 = vunpack.c.l.b16 %v333
    %v1029 = vunpack.c.h.b16 %v333
    %v1030 = vunpack.c.l.b16 %v334
    %v1031 = vunpack.c.h.b16 %v334
    %v1032 = vunpack.c.l.b16 %v335
    %v1033 = vunpack.c.h.b16 %v335
    %v1034 = vunpack.c.l.b16 %v336
    %v1035 = vunpack.c.h.b16 %v336
    %v1036 = vunpack.c.l.b16 %v337
    %v1037 = vunpack.c.h.b16 %v337
    %v1038 = vunpack.c.l.b16 %v338
    %v1039 = vunpack.c.h.b16 %v338
    %v1040 = vunpack.c.l.b16 %v339
    %v1041 = vunpack.c.h.b16 %v339
    %v1042 = vunpack.c.l.b16 %v340
    %v1043 = vunpack.c.h.b16 %v340
    %v1044 = vunpack.c.l.b16 %v341
    %v1045 = vunpack.c.h.b16 %v341
    %v1046 = vunpack.c.l.b16 %v342
    %v1047 = vunpack.c.h.b16 %v342
    %v1048 = vunpack.c.l.b16 %v343
    %v1049 = vunpack.c.h.b16 %v343
    %v1050 = vunpack.c.l.b16 %v344
    %v1051 = vunpack.c.h.b16 %v344
    %v1052 = vunpack.c.l.b16 %v345
    %v1053 = vunpack.c.h.b16 %v345
    %v1054 = vunpack.c.l.b16 %v346
    %v1055 = vunpack.c.h.b16 %v346
    %v1056 = vunpack.c.l.b16 %v347
    %v1057 = vunpack.c.h.b16 %v347
    %v1058 = vunpack.c.l.b16 %v348
    %v1059 = vunpack.c.h.b16 %v348
    %v1060 = vunpack.c.l.b16 %v349
    %v1061 = vunpack.c.h.b16 %v349
    %v1062 = vunpack.c.l.b16 %v350
    %v1063 = vunpack.c.h.b16 %v350
    %v1064 = vunpack.c.l.b16 %v351
    %v1065 = vunpack.c.h.b16 %v351
    %v1066 = vunpack.c.l.b16 %v352
    %v1067 = vunpack.c.h.b16 %v352
    %v1068 = vunpack.c.l.b16 %v353
    %v1069 = vunpack.c.h.b16 %v353
    %v1070 = vunpack.c.l.b16 %v354
    %v1071 = vunpack.c.h.b16 %v354
    %v1072 = vunpack.c.l.b16 %v355
    %v1073 = vunpack.c.h.b16 %v355
    %v1074 = vunpack.c.l.b16 %v356
    %v1075 = vunpack.c.h.b16 %v356
    %v1076 = vunpack.c.l.b16 %v357
    %v1077 = vunpack.c.h.b16 %v357
    %v1078 = vunpack.c.l.b16 %v358
    %v1079 = vunpack.c.h.b16 %v358
    %v1080 = vunpack.c.l.b16 %v359
    %v1081 = vunpack.c.h.b16 %v359
    %v1082 = vunpack.c.l.b16 %v360
    %v1083 = vunpack.c.h.b16 %v360
    %v1084 = vunpack.c.l.b16 %v361
    %v1085 = vunpack.c.h.b16 %v361
    %v1086 = vunpack.c.l.b16 %v362
    %v1087 = vunpack.c.h.b16 %v362
    %v1088 = vunpack.c.l.b16 %v363
    %v1089 = vunpack.c.h.b16 %v363
    %v1090 = vunpack.c.l.b16 %v364
    %v1091 = vunpack.c.h.b16 %v364
    %v1092 = vunpack.c.l.b16 %v365
    %v1093 = vunpack.c.h.b16 %v365
    %v1094 = vunpack.c.l.b16 %v366
    %v1095 = vunpack.c.h.b16 %v366
    %v1096 = vunpack.c.l.b16 %v367
    %v1097 = vunpack.c.h.b16 %v367
    %v1098 = vunpack.c.l.b16 %v368
    %v1099 = vunpack.c.h.b16 %v368
    %v1100 = vunpack.c.l.b16 %v369
    %v1101 = vunpack.c.h.b16 %v369
    %v1102 = vunpack.c.l.b16 %v370
    %v1103 = vunpack.c.h.b16 %v370
    %v1104 = vunpack.c.l.b16 %v371
    %v1105 = vunpack.c.h.b16 %v371
    %v1106 = vunpack.c.l.b16 %v372
    %v1107 = vunpack.c.h.b16 %v372
    %v1108 = vunpack.c.l.b16 %v373
    %v1109 = vunpack.c.h.b16 %v373
    %v1110 = vunpack.c.l.b16 %v374
    %v1111 = vunpack.c.h.b16 %v374
    %v1112 = vunpack.c.l.b16 %v375
    %v1113 = vunpack.c.h.b16 %v375
    %v1114 = vunpack.c.l.b16 %v376
    %v1115 = vunpack.c.h.b16 %v376
    %v1116 = vunpack.c.l.b16 %v377
    %v1117 = vunpack.c.h.b16 %v377
    %v1118 = vunpack.c.l.b16 %v378
    %v1119 = vunpack.c.h.b16 %v378
    %v1120 = vunpack.c.l.b16 %v379
    %v1121 = vunpack.c.h.b16 %v379
    %v1122 = vunpack.c.l.b16 %v380
    %v1123 = vunpack.c.h.b16 %v380
    %v1124 = vunpack.c.l.b16 %v381
    %v1125 = vunpack.c.h.b16 %v381
    %v1126 = vunpack.c.l.b16 %v382
    %v1127 = vunpack.c.h.b16 %v382
    %v1128 = vunpack.c.l.b16 %v383
    %v1129 = vunpack.c.h.b16 %v383
    %v1130 = vunpack.c.l.b16 %v384
    %v1131 = vunpack.c.h.b16 %v384
    %v1132 = vunpack.c.l.b16 %v385
    %v1133 = vunpack.c.h.b16 %v385
    %v1134 = vunpack.c.l.b16 %v386
    %v1135 = vunpack.c.h.b16 %v386
    %v1136 = vunpack.c.l.b16 %v387
    %v1137 = vunpack.c.h.b16 %v387
    %v1138 = vunpack.c.l.b16 %v388
    %v1139 = vunpack.c.h.b16 %v388
    %v1140 = vunpack.c.l.b16 %v389
    %v1141 = vunpack.c.h.b16 %v389
    %v1142 = vunpack.c.l.b16 %v390
    %v1143 = vunpack.c.h.b16 %v390
    %v1144 = vunpack.c.l.b16 %v391
    %v1145 = vunpack.c.h.b16 %v391
    %v1146 = vunpack.c.l.b16 %v392
    %v1147 = vunpack.c.h.b16 %v392
    %v1148 = vunpack.c.l.b16 %v393
    %v1149 = vunpack.c.h.b16 %v393
    %v1150 = vunpack.c.l.b16 %v394
    %v1151 = vunpack.c.h.b16 %v394
    %v1152 = vunpack.c.l.b16 %v395
    %v1153 = vunpack.c.h.b16 %v395
    %v1154 = vunpack.c.l.b16 %v396
    %v1155 = vunpack.c.h.b16 %v396
    %v1156 = vunpack.c.l.b16 %v397
    %v1157 = vunpack.c.h.b16 %v397
    %v1158 = vunpack.c.l.b16 %v398
    %v1159 = vunpack.c.h.b16 %v398
    %v1160 = vunpack.c.l.b16 %v399
    %v1161 = vunpack.c.h.b16 %v399
    %v1162 = vunpack.c.l.b16 %v400
    %v1163 = vunpack.c.h.b16 %v400
    %v1164 = vunpack.c.l.b16 %v401
    %v1165 = vunpack.c.h.b16 %v401
    %v1166 = vunpack.c.l.b16 %v402
    %v1167 = vunpack.c.h.b16 %v402
    %v1168 = vunpack.c.l.b16 %v403
    %v1169 = vunpack.c.h.b16 %v403
    %v1170 = vunpack.c.l.b16 %v404
    %v1171 = vunpack.c.h.b16 %v404
    %v1172 = vunpack.c.l.b16 %v405
    %v1173 = vunpack.c.h.b16 %v405
    %v1174 = vunpack.c.l.b16 %v406
    %v1175 = vunpack.c.h.b16 %v406
    %v1176 = vunpack.c.l.b16 %v407
    %v1177 = vunpack.c.h.b16 %v407
    %v1178 = vunpack.c.l.b16 %v408
    %v1179 = vunpack.c.h.b16 %v408
    %v1180 = vunpack.c.l.b16 %v409
    %v1181 = vunpack.c.h.b16 %v409
    %v1182 = vunpack.c.l.b16 %v410
    %v1183 = vunpack.c.h.b16 %v410
    %v1184 = vunpack.c.l.b16 %v411
    %v1185 = vunpack.c.h.b16 %v411
    %v1186 = vunpack.c.l.b16 %v412
    %v1187 = vunpack.c.h.b16 %v412
    %v1188 = vunpack.c.l.b16 %v413
    %v1189 = vunpack.c.h.b16 %v413
    %v1190 = vunpack.c.l.b16 %v414
    %v1191 = vunpack.c.h.b16 %v414
    %v1192 = vunpack.c.l.b16 %v415
    %v1193 = vunpack.c.h.b16 %v415
    %v1194 = vunpack.c.l.b16 %v416
    %v1195 = vunpack.c.h.b16 %v416
    %v1196 = vunpack.c.l.b16 %v417
    %v1197 = vunpack.c.h.b16 %v417
    %v1198 = vunpack.c.l.b16 %v418
    %v1199 = vunpack.c.h.b16 %v418
    %v1200 = vunpack.c.l.b16 %v419
    %v1201 = vunpack.c.h.b16 %v419
    %v1202 = vunpack.c.l.b16 %v420
    %v1203 = vunpack.c.h.b16 %v420
    %v1204 = vunpack.c.l.b16 %v421
    %v1205 = vunpack.c.h.b16 %v421
    %v1206 = vunpack.c.l.b16 %v422
    %v1207 = vunpack.c.h.b16 %v422
    %v1208 = vunpack.c.l.b16 %v423
    %v1209 = vunpack.c.h.b16 %v423
    %v1210 = vunpack.c.l.b16 %v424
    %v1211 = vunpack.c.h.b16 %v424
    %v1212 = vunpack.c.l.b16 %v425
    %v1213 = vunpack.c.h.b16 %v425
    %v1214 = vunpack.c.l.b16 %v426
    %v1215 = vunpack.c.h.b16 %v426
    %v1216 = vunpack.c.l.b16 %v427
    %v1217 = vunpack.c.h.b16 %v427
    %v1218 = vpack.c.b16 %v710, %v706
    %v1219 = vpack.c.b16 %v711, %v707
    %v1220 = vpack.c.b16 %v712, %v708
    %v1221 = vpack.c.b16 %v713, %v709
    %v1222 = vpack.c.b16 %v718, %v714
    %v1223 = vpack.c.b16 %v719, %v715
    %v1224 = vpack.c.b16 %v720, %v716
    %v1225 = vpack.c.b16 %v721, %v717
    %v1226 = vpack.c.b16 %v726, %v722
    %v1227 = vpack.c.b16 %v727, %v723
    %v1228 = vpack.c.b16 %v728, %v724
    %v1229 = vpack.c.b16 %v729, %v725
    %v1230 = vpack.c.b16 %v734, %v730
    %v1231 = vpack.c.b16 %v735, %v731
    %v1232 = vpack.c.b16 %v736, %v732
    %v1233 = vpack.c.b16 %v737, %v733
    %v1234 = vpack.c.b16 %v742, %v738
    %v1235 = vpack.c.b16 %v743, %v739
    %v1236 = vpack.c.b16 %v744, %v740
    %v1237 = vpack.c.b16 %v745, %v741
    %v1238 = vpack.c.b16 %v750, %v746
    %v1239 = vpack.c.b16 %v751, %v747
    %v1240 = vpack.c.b16 %v752, %v748
    %v1241 = vpack.c.b16 %v753, %v749
    %v1242 = vpack.c.b16 %v758, %v754
    %v1243 = vpack.c.b16 %v759, %v755
    %v1244 = vpack.c.b16 %v760, %v756
    %v1245 = vpack.c.b16 %v761, %v757
    %v1246 = vpack.c.b16 %v766, %v762
    %v1247 = vpack.c.b16 %v767, %v763
    %v1248 = vpack.c.b16 %v768, %v764
    %v1249 = vpack.c.b16 %v769, %v765
    %v1250 = vpack.c.b16 %v774, %v770
    %v1251 = vpack.c.b16 %v775, %v771
    %v1252 = vpack.c.b16 %v776, %v772
    %v1253 = vpack.c.b16 %v777, %v773
    %v1254 = vpack.c.b16 %v782, %v778
    %v1255 = vpack.c.b16 %v783, %v779
    %v1256 = vpack.c.b16 %v784, %v780
    %v1257 = vpack.c.b16 %v785, %v781
    %v1258 = vpack.c.b16 %v790, %v786
    %v1259 = vpack.c.b16 %v791, %v787
    %v1260 = vpack.c.b16 %v792, %v788
    %v1261 = vpack.c.b16 %v793, %v789
    %v1262 = vpack.c.b16 %v798, %v794
    %v1263 = vpack.c.b16 %v799, %v795
    %v1264 = vpack.c.b16 %v800, %v796
    %v1265 = vpack.c.b16 %v801, %v797
    %v1266 = vpack.c.b16 %v806, %v802
    %v1267 = vpack.c.b16 %v807, %v803
    %v1268 = vpack.c.b16 %v808, %v804
    %v1269 = vpack.c.b16 %v809, %v805
    %v1270 = vpack.c.b16 %v814, %v810
    %v1271 = vpack.c.b16 %v815, %v811
    %v1272 = vpack.c.b16 %v816, %v812
    %v1273 = vpack.c.b16 %v817, %v813
    %v1274 = vpack.c.b16 %v822, %v818
    %v1275 = vpack.c.b16 %v823, %v819
    %v1276 = vpack.c.b16 %v824, %v820
    %v1277 = vpack.c.b16 %v825, %v821
    %v1278 = vpack.c.b16 %v830, %v826
    %v1279 = vpack.c.b16 %v831, %v827
    %v1280 = vpack.c.b16 %v832, %v828
    %v1281 = vpack.c.b16 %v833, %v829
    %v1282 = vpack.c.b16 %v838, %v834
    %v1283 = vpack.c.b16 %v839, %v835
    %v1284 = vpack.c.b16 %v840, %v836
    %v1285 = vpack.c.b16 %v841, %v837
    %v1286 = vpack.c.b16 %v846, %v842
    %v1287 = vpack.c.b16 %v847, %v843
    %v1288 = vpack.c.b16 %v848, %v844
    %v1289 = vpack.c.b16 %v849, %v845
    %v1290 = vpack.c.b16 %v854, %v850
    %v1291 = vpack.c.b16 %v855, %v851
    %v1292 = vpack.c.b16 %v856, %v852
    %v1293 = vpack.c.b16 %v857, %v853
    %v1294 = vpack.c.b16 %v862, %v858
    %v1295 = vpack.c.b16 %v863, %v859
    %v1296 = vpack.c.b16 %v864, %v860
    %v1297 = vpack.c.b16 %v865, %v861
    %v1298 = vpack.c.b16 %v870, %v866
    %v1299 = vpack.c.b16 %v871, %v867
    %v1300 = vpack.c.b16 %v872, %v868
    %v1301 = vpack.c.b16 %v873, %v869
    %v1302 = vpack.c.b16 %v878, %v874
    %v1303 = vpack.c.b16 %v879, %v875
    %v1304 = vpack.c.b16 %v880, %v876
    %v1305 = vpack.c.b16 %v881, %v877
    %v1306 = vpack.c.b16 %v886, %v882
    %v1307 = vpack.c.b16 %v887, %v883
    %v1308 = vpack.c.b16 %v888, %v884
    %v1309 = vpack.c.b16 %v889, %v885
    %v1310 = vpack.c.b16 %v894, %v890
    %v1311 = vpack.c.b16 %v895, %v891
    %v1312 = vpack.c.b16 %v896, %v892
    %v1313 = vpack.c.b16 %v897, %v893
    %v1314 = vpack.c.b16 %v902, %v898
    %v1315 = vpack.c.b16 %v903, %v899
    %v1316 = vpack.c.b16 %v904, %v900
    %v1317 = vpack.c.b16 %v905, %v901
    %v1318 = vpack.c.b16 %v910, %v906
    %v1319 = vpack.c.b16 %v911, %v907
    %v1320 = vpack.c.b16 %v912, %v908
    %v1321 = vpack.c.b16 %v913, %v909
    %v1322 = vpack.c.b16 %v918, %v914
    %v1323 = vpack.c.b16 %v919, %v915
    %v1324 = vpack.c.b16 %v920, %v916
    %v1325 = vpack.c.b16 %v921, %v917
    %v1326 = vpack.c.b16 %v926, %v922
    %v1327 = vpack.c.b16 %v927, %v923
    %v1328 = vpack.c.b16 %v928, %v924
    %v1329 = vpack.c.b16 %v929, %v925
    %v1330 = vpack.c.b16 %v934, %v930
    %v1331 = vpack.c.b16 %v935, %v931
    %v1332 = vpack.c.b16 %v936, %v932
    %v1333 = vpack.c.b16 %v937, %v933
    %v1334 = vpack.c.b16 %v942, %v938
    %v1335 = vpack.c.b16 %v943, %v939
    %v1336 = vpack.c.b16 %v944, %v940
    %v1337 = vpack.c.b16 %v945, %v941
    %v1338 = vpack.c.b16 %v950, %v946
    %v1339 = vpack.c.b16 %v951, %v947
    %v1340 = vpack.c.b16 %v952, %v948
    %v1341 = vpack.c.b16 %v953, %v949
    %v1342 = vpack.c.b16 %v958, %v954
    %v1343 = vpack.c.b16 %v959, %v955
    %v1344 = vpack.c.b16 %v960, %v956
    %v1345 = vpack.c.b16 %v961, %v957
    %v1346 = vpack.c.b16 %v966, %v962
    %v1347 = vpack.c.b16 %v967, %v963
    %v1348 = vpack.c.b16 %v968, %v964
    %v1349 = vpack.c.b16 %v969, %v965
    %v1350 = vpack.c.b16 %v974, %v970
    %v1351 = vpack.c.b16 %v975, %v971
    %v1352 = vpack.c.b16 %v976, %v972
    %v1353 = vpack.c.b16 %v977, %v973
    %v1354 = vpack.c.b16 %v982, %v978
    %v1355 = vpack.c.b16 %v983, %v979
    %v1356 = vpack.c.b16 %v984, %v980
    %v1357 = vpack.c.b16 %v985, %v981
    %v1358 = vpack.c.b16 %v990, %v986
    %v1359 = vpack.c.b16 %v991, %v987
    %v1360 = vpack.c.b16 %v992, %v988
    %v1361 = vpack.c.b16 %v993, %v989
    %v1362 = vpack.c.b16 %v998, %v994
    %v1363 = vpack.c.b16 %v999, %v995
    %v1364 = vpack.c.b16 %v1000, %v996
    %v1365 = vpack.c.b16 %v1001, %v997
    %v1366 = vpack.c.b16 %v1006, %v1002
    %v1367 = vpack.c.b16 %v1007, %v1003
    %v1368 = vpack.c.b16 %v1008, %v1004
    %v1369 = vpack.c.b16 %v1009, %v1005
    %v1370 = vpack.c.b16 %v1014, %v1010
    %v1371 = vpack.c.b16 %v1015, %v1011
    %v1372 = vpack.c.b16 %v1016, %v1012
    %v1373 = vpack.c.b16 %v1017, %v1013
    %v1374 = vpack.c.b16 %v1022, %v1018
    %v1375 = vpack.c.b16 %v1023, %v1019
    %v1376 = vpack.c.b16 %v1024, %v1020
    %v1377 = vpack.c.b16 %v1025, %v1021
    %v1378 = vpack.c.b16 %v1030, %v1026
    %v1379 = vpack.c.b16 %v1031, %v1027
    %v1380 = vpack.c.b16 %v1032, %v1028
    %v1381 = vpack.c.b16 %v1033, %v1029
    %v1382 = vpack.c.b16 %v1038, %v1034
    %v1383 = vpack.c.b16 %v1039, %v1035
    %v1384 = vpack.c.b16 %v1040, %v1036
    %v1385 = vpack.c.b16 %v1041, %v1037
    %v1386 = vpack.c.b16 %v1046, %v1042
    %v1387 = vpack.c.b16 %v1047, %v1043
    %v1388 = vpack.c.b16 %v1048, %v1044
    %v1389 = vpack.c.b16 %v1049, %v1045
    %v1390 = vpack.c.b16 %v1054, %v1050
    %v1391 = vpack.c.b16 %v1055, %v1051
    %v1392 = vpack.c.b16 %v1056, %v1052
    %v1393 = vpack.c.b16 %v1057, %v1053
    %v1394 = vpack.c.b16 %v1062, %v1058
    %v1395 = vpack.c.b16 %v1063, %v1059
    %v1396 = vpack.c.b16 %v1064, %v1060
    %v1397 = vpack.c.b16 %v1065, %v1061
    %v1398 = vpack.c.b16 %v1070, %v1066
    %v1399 = vpack.c.b16 %v1071, %v1067
    %v1400 = vpack.c.b16 %v1072, %v1068
    %v1401 = vpack.c.b16 %v1073, %v1069
    %v1402 = vpack.c.b16 %v1078, %v1074
    %v1403 = vpack.c.b16 %v1079, %v1075
    %v1404 = vpack.c.b16 %v1080, %v1076
    %v1405 = vpack.c.b16 %v1081, %v1077
    %v1406 = vpack.c.b16 %v1086, %v1082
    %v1407 = vpack.c.b16 %v1087, %v1083
    %v1408 = vpack.c.b16 %v1088, %v1084
    %v1409 = vpack.c.b16 %v1089, %v1085
    %v1410 = vpack.c.b16 %v1094, %v1090
    %v1411 = vpack.c.b16 %v1095, %v1091
    %v1412 = vpack.c.b16 %v1096, %v1092
    %v1413 = vpack.c.b16 %v1097, %v1093
    %v1414 = vpack.c.b16 %v1102, %v1098
    %v1415 = vpack.c.b16 %v1103, %v1099
    %v1416 = vpack.c.b16 %v1104, %v1100
    %v1417 = vpack.c.b16 %v1105, %v1101
    %v1418 = vpack.c.b16 %v1110, %v1106
    %v1419 = vpack.c.b16 %v1111, %v1107
    %v1420 = vpack.c.b16 %v1112, %v1108
    %v1421 = vpack.c.b16 %v1113, %v1109
    %v1422 = vpack.c.b16 %v1118, %v1114
    %v1423 = vpack.c.b16 %v1119, %v1115
    %v1424 = vpack.c.b16 %v1120, %v1116
    %v1425 = vpack.c.b16 %v1121, %v1117
    %v1426 = vpack.c.b16 %v1126, %v1122
    %v1427 = vpack.c.b16 %v1127, %v1123
    %v1428 = vpack.c.b16 %v1128, %v1124
    %v1429 = vpack.c.b16 %v1129, %v1125
    %v1430 = vpack.c.b16 %v1134, %v1130
    %v1431 = vpack.c.b16 %v1135, %v1131
    %v1432 = vpack.c.b16 %v1136, %v1132
    %v1433 = vpack.c.b16 %v1137, %v1133
    %v1434 = vpack.c.b16 %v1142, %v1138
    %v1435 = vpack.c.b16 %v1143, %v1139
    %v1436 = vpack.c.b16 %v1144, %v1140
    %v1437 = vpack.c.b16 %v1145, %v1141
    %v1438 = vpack.c.b16 %v1150, %v1146
    %v1439 = vpack.c.b16 %v1151, %v1147
    %v1440 = vpack.c.b16 %v1152, %v1148
    %v1441 = vpack.c.b16 %v1153, %v1149
    %v1442 = vpack.c.b16 %v1158, %v1154
    %v1443 = vpack.c.b16 %v1159, %v1155
    %v1444 = vpack.c.b16 %v1160, %v1156
    %v1445 = vpack.c.b16 %v1161, %v1157
    %v1446 = vpack.c.b16 %v1166, %v1162
    %v1447 = vpack.c.b16 %v1167, %v1163
    %v1448 = vpack.c.b16 %v1168, %v1164
    %v1449 = vpack.c.b16 %v1169, %v1165
    %v1450 = vpack.c.b16 %v1174, %v1170
    %v1451 = vpack.c.b16 %v1175, %v1171
    %v1452 = vpack.c.b16 %v1176, %v1172
    %v1453 = vpack.c.b16 %v1177, %v1173
    %v1454 = vpack.c.b16 %v1182, %v1178
    %v1455 = vpack.c.b16 %v1183, %v1179
    %v1456 = vpack.c.b16 %v1184, %v1180
    %v1457 = vpack.c.b16 %v1185, %v1181
    %v1458 = vpack.c.b16 %v1190, %v1186
    %v1459 = vpack.c.b16 %v1191, %v1187
    %v1460 = vpack.c.b16 %v1192, %v1188
    %v1461 = vpack.c.b16 %v1193, %v1189
    %v1462 = vpack.c.b16 %v1198, %v1194
    %v1463 = vpack.c.b16 %v1199, %v1195
    %v1464 = vpack.c.b16 %v1200, %v1196
    %v1465 = vpack.c.b16 %v1201, %v1197
    %v1466 = vpack.c.b16 %v1206, %v1202
    %v1467 = vpack.c.b16 %v1207, %v1203
    %v1468 = vpack.c.b16 %v1208, %v1204
    %v1469 = vpack.c.b16 %v1209, %v1205
    %v1470 = vpack.c.b16 %v1214, %v1210
    %v1471 = vpack.c.b16 %v1215, %v1211
    %v1472 = vpack.c.b16 %v1216, %v1212
    %v1473 = vpack.c.b16 %v1217, %v1213
    %1730 = vmatprep.subr.bf16.mxu0 %v1219
    %1731 = vmatpush1.bf16.msra.mxu0 %v1218
    %1732 = vmatprep.subr.bf16.mxu0 %v1223
    %1733 = vmatpush1.bf16.msra.mxu0 %v1222
    %1734 = vmatprep.subr.bf16.mxu0 %v1227
    %1735 = vmatpush1.bf16.msra.mxu0 %v1226
    %1736 = vmatprep.subr.bf16.mxu0 %v1231
    %1737 = vmatpush1.bf16.msra.mxu0 %v1230
    %1738 = vmatprep.subr.bf16.mxu0 %v1235
    %1739 = vmatpush1.bf16.msra.mxu0 %v1234
    %1740 = vmatprep.subr.bf16.mxu0 %v1239
    %1741 = vmatpush1.bf16.msra.mxu0 %v1238
    %1742 = vmatprep.subr.bf16.mxu0 %v1243
    %1743 = vmatpush1.bf16.msra.mxu0 %v1242
    %1744 = vmatprep.subr.bf16.mxu0 %v1247
    %1745 = vmatpush1.bf16.msra.mxu0 %v1246
    %1746 = vmatprep.subr.bf16.mxu0 %v1251
    %1747 = vmatpush1.bf16.msra.mxu0 %v1250
    %1748 = vmatprep.subr.bf16.mxu0 %v1255
    %1749 = vmatpush1.bf16.msra.mxu0 %v1254
    %1750 = vmatprep.subr.bf16.mxu0 %v1259
    %1751 = vmatpush1.bf16.msra.mxu0 %v1258
    %1752 = vmatprep.subr.bf16.mxu0 %v1263
    %1753 = vmatpush1.bf16.msra.mxu0 %v1262
    %1754 = vmatprep.subr.bf16.mxu0 %v1267
    %1755 = vmatpush1.bf16.msra.mxu0 %v1266
    %1756 = vmatprep.subr.bf16.mxu0 %v1271
    %1757 = vmatpush1.bf16.msra.mxu0 %v1270
    %1758 = vmatprep.subr.bf16.mxu0 %v1275
    %1759 = vmatpush1.bf16.msra.mxu0 %v1274
    %1760 = vmatprep.subr.bf16.mxu0 %v1279
    %1761 = vmatpush1.bf16.msra.mxu0 %v1278
    %1762 = vmatprep.mubr.bf16.mxu0 %v165
    %1763 = vmatmul.mubr.bf16.gmra.mrb[0].mxu0 %v164
    %v1764 = vpop.f32.mrb[0].mxu0
    %v1765 = vadd.f32 %v433, %v1764
    %v1766 = vpop.f32.mrb[0].mxu0
    %v1767 = vadd.f32 %v437, %v1766
    %v1768 = vpop.f32.mrb[0].mxu0
    %v1769 = vpop.f32.mrb[0].mxu0
    %1770 = vdwg.mxu0
    %1771 = vmatprep.subr.bf16.mxu0 %v1283
    %1772 = vmatpush1.bf16.msra.mxu0 %v1282
    %1773 = vmatprep.subr.bf16.mxu0 %v1287
    %1774 = vmatpush1.bf16.msra.mxu0 %v1286
    %1775 = vmatprep.subr.bf16.mxu0 %v1291
    %1776 = vmatpush1.bf16.msra.mxu0 %v1290
    %1777 = vmatprep.subr.bf16.mxu0 %v1295
    %1778 = vmatpush1.bf16.msra.mxu0 %v1294
    %1779 = vmatprep.subr.bf16.mxu0 %v1299
    %1780 = vmatpush1.bf16.msra.mxu0 %v1298
    %1781 = vmatprep.subr.bf16.mxu0 %v1303
    %1782 = vmatpush1.bf16.msra.mxu0 %v1302
    %1783 = vmatprep.subr.bf16.mxu0 %v1307
    %1784 = vmatpush1.bf16.msra.mxu0 %v1306
    %1785 = vmatprep.subr.bf16.mxu0 %v1311
    %1786 = vmatpush1.bf16.msra.mxu0 %v1310
    %1787 = vmatprep.subr.bf16.mxu0 %v1315
    %1788 = vmatpush1.bf16.msra.mxu0 %v1314
    %1789 = vmatprep.subr.bf16.mxu0 %v1319
    %1790 = vmatpush1.bf16.msra.mxu0 %v1318
    %1791 = vmatprep.subr.bf16.mxu0 %v1323
    %1792 = vmatpush1.bf16.msra.mxu0 %v1322
    %1793 = vmatprep.subr.bf16.mxu0 %v1327
    %1794 = vmatpush1.bf16.msra.mxu0 %v1326
    %1795 = vmatprep.subr.bf16.mxu0 %v1331
    %1796 = vmatpush1.bf16.msra.mxu0 %v1330
    %1797 = vmatprep.subr.bf16.mxu0 %v1335
    %1798 = vmatpush1.bf16.msra.mxu0 %v1334
    %1799 = vmatprep.subr.bf16.mxu0 %v1339
    %1800 = vmatpush1.bf16.msra.mxu0 %v1338
    %1801 = vmatprep.subr.bf16.mxu0 %v1343
    %1802 = vmatpush1.bf16.msra.mxu0 %v1342
    %1803 = vmatprep.mubr.bf16.mxu0 %v167
    %1804 = vmatmul.mubr.bf16.gmra.mrb[0].mxu0 %v166
    %v1805 = vpop.f32.mrb[0].mxu0
    %v1806 = vadd.f32 %v1765, %v1805
    %v1807 = vpop.f32.mrb[0].mxu0
    %v1808 = vadd.f32 %v1767, %v1807
    %v1809 = vpop.f32.mrb[0].mxu0
    %v1810 = vpop.f32.mrb[0].mxu0
    %1811 = vdwg.mxu0
    %1812 = vmatprep.subr.bf16.mxu0 %v1347
    %1813 = vmatpush1.bf16.msra.mxu0 %v1346
    %1814 = vmatprep.subr.bf16.mxu0 %v1351
    %1815 = vmatpush1.bf16.msra.mxu0 %v1350
    %1816 = vmatprep.subr.bf16.mxu0 %v1355
    %1817 = vmatpush1.bf16.msra.mxu0 %v1354
    %1818 = vmatprep.subr.bf16.mxu0 %v1359
    %1819 = vmatpush1.bf16.msra.mxu0 %v1358
    %1820 = vmatprep.subr.bf16.mxu0 %v1363
    %1821 = vmatpush1.bf16.msra.mxu0 %v1362
    %1822 = vmatprep.subr.bf16.mxu0 %v1367
    %1823 = vmatpush1.bf16.msra.mxu0 %v1366
    %1824 = vmatprep.subr.bf16.mxu0 %v1371
    %1825 = vmatpush1.bf16.msra.mxu0 %v1370
    %1826 = vmatprep.subr.bf16.mxu0 %v1375
    %1827 = vmatpush1.bf16.msra.mxu0 %v1374
    %1828 = vmatprep.subr.bf16.mxu0 %v1379
    %1829 = vmatpush1.bf16.msra.mxu0 %v1378
    %1830 = vmatprep.subr.bf16.mxu0 %v1383
    %1831 = vmatpush1.bf16.msra.mxu0 %v1382
    %1832 = vmatprep.subr.bf16.mxu0 %v1387
    %1833 = vmatpush1.bf16.msra.mxu0 %v1386
    %1834 = vmatprep.subr.bf16.mxu0 %v1391
    %1835 = vmatpush1.bf16.msra.mxu0 %v1390
    %1836 = vmatprep.subr.bf16.mxu0 %v1395
    %1837 = vmatpush1.bf16.msra.mxu0 %v1394
    %1838 = vmatprep.subr.bf16.mxu0 %v1399
    %1839 = vmatpush1.bf16.msra.mxu0 %v1398
    %1840 = vmatprep.subr.bf16.mxu0 %v1403
    %1841 = vmatpush1.bf16.msra.mxu0 %v1402
    %1842 = vmatprep.subr.bf16.mxu0 %v1407
    %1843 = vmatpush1.bf16.msra.mxu0 %v1406
    %1844 = vmatprep.mubr.bf16.mxu0 %v169
    %1845 = vmatmul.mubr.bf16.gmra.mrb[0].mxu0 %v168
    %v1846 = vpop.f32.mrb[0].mxu0
    %v1847 = vadd.f32 %v1806, %v1846
    %v1848 = vpop.f32.mrb[0].mxu0
    %v1849 = vadd.f32 %v1808, %v1848
    %v1850 = vpop.f32.mrb[0].mxu0
    %v1851 = vpop.f32.mrb[0].mxu0
    %1852 = vdwg.mxu0
    %1853 = vmatprep.subr.bf16.mxu0 %v1411
    %1854 = vmatpush1.bf16.msra.mxu0 %v1410
    %1855 = vmatprep.subr.bf16.mxu0 %v1415
    %1856 = vmatpush1.bf16.msra.mxu0 %v1414
    %1857 = vmatprep.subr.bf16.mxu0 %v1419
    %1858 = vmatpush1.bf16.msra.mxu0 %v1418
    %1859 = vmatprep.subr.bf16.mxu0 %v1423
    %1860 = vmatpush1.bf16.msra.mxu0 %v1422
    %1861 = vmatprep.subr.bf16.mxu0 %v1427
    %1862 = vmatpush1.bf16.msra.mxu0 %v1426
    %1863 = vmatprep.subr.bf16.mxu0 %v1431
    %1864 = vmatpush1.bf16.msra.mxu0 %v1430
    %1865 = vmatprep.subr.bf16.mxu0 %v1435
    %1866 = vmatpush1.bf16.msra.mxu0 %v1434
    %1867 = vmatprep.subr.bf16.mxu0 %v1439
    %1868 = vmatpush1.bf16.msra.mxu0 %v1438
    %1869 = vmatprep.subr.bf16.mxu0 %v1443
    %1870 = vmatpush1.bf16.msra.mxu0 %v1442
    %1871 = vmatprep.subr.bf16.mxu0 %v1447
    %1872 = vmatpush1.bf16.msra.mxu0 %v1446
    %1873 = vmatprep.subr.bf16.mxu0 %v1451
    %1874 = vmatpush1.bf16.msra.mxu0 %v1450
    %1875 = vmatprep.subr.bf16.mxu0 %v1455
    %1876 = vmatpush1.bf16.msra.mxu0 %v1454
    %1877 = vmatprep.subr.bf16.mxu0 %v1459
    %1878 = vmatpush1.bf16.msra.mxu0 %v1458
    %1879 = vmatprep.subr.bf16.mxu0 %v1463
    %1880 = vmatpush1.bf16.msra.mxu0 %v1462
    %1881 = vmatprep.subr.bf16.mxu0 %v1467
    %1882 = vmatpush1.bf16.msra.mxu0 %v1466
    %1883 = vmatprep.subr.bf16.mxu0 %v1471
    %1884 = vmatpush1.bf16.msra.mxu0 %v1470
    %1885 = vmatprep.mubr.bf16.mxu0 %v171
    %1886 = vmatmul.mubr.bf16.gmra.mrb[0].mxu0 %v170
    %v1887 = vpop.f32.mrb[0].mxu0
    %v1888 = vadd.f32 %v1847, %v1887
    %v1889 = vpop.f32.mrb[0].mxu0
    %v1890 = vadd.f32 %v1849, %v1889
    %v1891 = vpop.f32.mrb[0].mxu0
    %v1892 = vpop.f32.mrb[0].mxu0
    %1893 = vdwg.mxu0
    %1894 = vmatprep.subr.bf16.mxu0 %v1221
    %1895 = vmatpush1.bf16.msra.mxu0 %v1220
    %1896 = vmatprep.subr.bf16.mxu0 %v1225
    %1897 = vmatpush1.bf16.msra.mxu0 %v1224
    %1898 = vmatprep.subr.bf16.mxu0 %v1229
    %1899 = vmatpush1.bf16.msra.mxu0 %v1228
    %1900 = vmatprep.subr.bf16.mxu0 %v1233
    %1901 = vmatpush1.bf16.msra.mxu0 %v1232
    %1902 = vmatprep.subr.bf16.mxu0 %v1237
    %1903 = vmatpush1.bf16.msra.mxu0 %v1236
    %1904 = vmatprep.subr.bf16.mxu0 %v1241
    %1905 = vmatpush1.bf16.msra.mxu0 %v1240
    %1906 = vmatprep.subr.bf16.mxu0 %v1245
    %1907 = vmatpush1.bf16.msra.mxu0 %v1244
    %1908 = vmatprep.subr.bf16.mxu0 %v1249
    %1909 = vmatpush1.bf16.msra.mxu0 %v1248
    %1910 = vmatprep.subr.bf16.mxu0 %v1253
    %1911 = vmatpush1.bf16.msra.mxu0 %v1252
    %1912 = vmatprep.subr.bf16.mxu0 %v1257
    %1913 = vmatpush1.bf16.msra.mxu0 %v1256
    %1914 = vmatprep.subr.bf16.mxu0 %v1261
    %1915 = vmatpush1.bf16.msra.mxu0 %v1260
    %1916 = vmatprep.subr.bf16.mxu0 %v1265
    %1917 = vmatpush1.bf16.msra.mxu0 %v1264
    %1918 = vmatprep.subr.bf16.mxu0 %v1269
    %1919 = vmatpush1.bf16.msra.mxu0 %v1268
    %1920 = vmatprep.subr.bf16.mxu0 %v1273
    %1921 = vmatpush1.bf16.msra.mxu0 %v1272
    %1922 = vmatprep.subr.bf16.mxu0 %v1277
    %1923 = vmatpush1.bf16.msra.mxu0 %v1276
    %1924 = vmatprep.subr.bf16.mxu0 %v1281
    %1925 = vmatpush1.bf16.msra.mxu0 %v1280
    %1926 = vmatprep.mubr.bf16.mxu0 %v165
    %1927 = vmatmul.mubr.bf16.gmra.mrb[0].mxu0 %v164
    %v1928 = vpop.f32.mrb[0].mxu0
    %v1929 = vadd.f32 %v441, %v1928
    %v1930 = vpop.f32.mrb[0].mxu0
    %v1931 = vadd.f32 %v445, %v1930
    %v1932 = vpop.f32.mrb[0].mxu0
    %v1933 = vpop.f32.mrb[0].mxu0
    %1934 = vdwg.mxu0
    %1935 = vmatprep.subr.bf16.mxu0 %v1285
    %1936 = vmatpush1.bf16.msra.mxu0 %v1284
    %1937 = vmatprep.subr.bf16.mxu0 %v1289
    %1938 = vmatpush1.bf16.msra.mxu0 %v1288
    %1939 = vmatprep.subr.bf16.mxu0 %v1293
    %1940 = vmatpush1.bf16.msra.mxu0 %v1292
    %1941 = vmatprep.subr.bf16.mxu0 %v1297
    %1942 = vmatpush1.bf16.msra.mxu0 %v1296
    %1943 = vmatprep.subr.bf16.mxu0 %v1301
    %1944 = vmatpush1.bf16.msra.mxu0 %v1300
    %1945 = vmatprep.subr.bf16.mxu0 %v1305
    %1946 = vmatpush1.bf16.msra.mxu0 %v1304
    %1947 = vmatprep.subr.bf16.mxu0 %v1309
    %1948 = vmatpush1.bf16.msra.mxu0 %v1308
    %1949 = vmatprep.subr.bf16.mxu0 %v1313
    %1950 = vmatpush1.bf16.msra.mxu0 %v1312
    %1951 = vmatprep.subr.bf16.mxu0 %v1317
    %1952 = vmatpush1.bf16.msra.mxu0 %v1316
    %1953 = vmatprep.subr.bf16.mxu0 %v1321
    %1954 = vmatpush1.bf16.msra.mxu0 %v1320
    %1955 = vmatprep.subr.bf16.mxu0 %v1325
    %1956 = vmatpush1.bf16.msra.mxu0 %v1324
    %1957 = vmatprep.subr.bf16.mxu0 %v1329
    %1958 = vmatpush1.bf16.msra.mxu0 %v1328
    %1959 = vmatprep.subr.bf16.mxu0 %v1333
    %1960 = vmatpush1.bf16.msra.mxu0 %v1332
    %1961 = vmatprep.subr.bf16.mxu0 %v1337
    %1962 = vmatpush1.bf16.msra.mxu0 %v1336
    %1963 = vmatprep.subr.bf16.mxu0 %v1341
    %1964 = vmatpush1.bf16.msra.mxu0 %v1340
    %1965 = vmatprep.subr.bf16.mxu0 %v1345
    %1966 = vmatpush1.bf16.msra.mxu0 %v1344
    %1967 = vmatprep.mubr.bf16.mxu0 %v167
    %1968 = vmatmul.mubr.bf16.gmra.mrb[0].mxu0 %v166
    %v1969 = vpop.f32.mrb[0].mxu0
    %v1970 = vadd.f32 %v1929, %v1969
    %v1971 = vpop.f32.mrb[0].mxu0
    %v1972 = vadd.f32 %v1931, %v1971
    %v1973 = vpop.f32.mrb[0].mxu0
    %v1974 = vpop.f32.mrb[0].mxu0
    %1975 = vdwg.mxu0
    %1976 = vmatprep.subr.bf16.mxu0 %v1349
    %1977 = vmatpush1.bf16.msra.mxu0 %v1348
    %1978 = vmatprep.subr.bf16.mxu0 %v1353
    %1979 = vmatpush1.bf16.msra.mxu0 %v1352
    %1980 = vmatprep.subr.bf16.mxu0 %v1357
    %1981 = vmatpush1.bf16.msra.mxu0 %v1356
    %1982 = vmatprep.subr.bf16.mxu0 %v1361
    %1983 = vmatpush1.bf16.msra.mxu0 %v1360
    %1984 = vmatprep.subr.bf16.mxu0 %v1365
    %1985 = vmatpush1.bf16.msra.mxu0 %v1364
    %1986 = vmatprep.subr.bf16.mxu0 %v1369
    %1987 = vmatpush1.bf16.msra.mxu0 %v1368
    %1988 = vmatprep.subr.bf16.mxu0 %v1373
    %1989 = vmatpush1.bf16.msra.mxu0 %v1372
    %1990 = vmatprep.subr.bf16.mxu0 %v1377
    %1991 = vmatpush1.bf16.msra.mxu0 %v1376
    %1992 = vmatprep.subr.bf16.mxu0 %v1381
    %1993 = vmatpush1.bf16.msra.mxu0 %v1380
    %1994 = vmatprep.subr.bf16.mxu0 %v1385
    %1995 = vmatpush1.bf16.msra.mxu0 %v1384
    %1996 = vmatprep.subr.bf16.mxu0 %v1389
    %1997 = vmatpush1.bf16.msra.mxu0 %v1388
    %1998 = vmatprep.subr.bf16.mxu0 %v1393
    %1999 = vmatpush1.bf16.msra.mxu0 %v1392
    %2000 = vmatprep.subr.bf16.mxu0 %v1397
    %2001 = vmatpush1.bf16.msra.mxu0 %v1396
    %2002 = vmatprep.subr.bf16.mxu0 %v1401
    %2003 = vmatpush1.bf16.msra.mxu0 %v1400
    %2004 = vmatprep.subr.bf16.mxu0 %v1405
    %2005 = vmatpush1.bf16.msra.mxu0 %v1404
    %2006 = vmatprep.subr.bf16.mxu0 %v1409
    %2007 = vmatpush1.bf16.msra.mxu0 %v1408
    %2008 = vmatprep.mubr.bf16.mxu0 %v169
    %2009 = vmatmul.mubr.bf16.gmra.mrb[0].mxu0 %v168
    %v2010 = vpop.f32.mrb[0].mxu0
    %v2011 = vadd.f32 %v1970, %v2010
    %v2012 = vpop.f32.mrb[0].mxu0
    %v2013 = vadd.f32 %v1972, %v2012
    %v2014 = vpop.f32.mrb[0].mxu0
    %v2015 = vpop.f32.mrb[0].mxu0
    %2016 = vdwg.mxu0
    %2017 = vmatprep.subr.bf16.mxu0 %v1413
    %2018 = vmatpush1.bf16.msra.mxu0 %v1412
    %2019 = vmatprep.subr.bf16.mxu0 %v1417
    %2020 = vmatpush1.bf16.msra.mxu0 %v1416
    %2021 = vmatprep.subr.bf16.mxu0 %v1421
    %2022 = vmatpush1.bf16.msra.mxu0 %v1420
    %2023 = vmatprep.subr.bf16.mxu0 %v1425
    %2024 = vmatpush1.bf16.msra.mxu0 %v1424
    %2025 = vmatprep.subr.bf16.mxu0 %v1429
    %2026 = vmatpush1.bf16.msra.mxu0 %v1428
    %2027 = vmatprep.subr.bf16.mxu0 %v1433
    %2028 = vmatpush1.bf16.msra.mxu0 %v1432
    %2029 = vmatprep.subr.bf16.mxu0 %v1437
    %2030 = vmatpush1.bf16.msra.mxu0 %v1436
    %2031 = vmatprep.subr.bf16.mxu0 %v1441
    %2032 = vmatpush1.bf16.msra.mxu0 %v1440
    %2033 = vmatprep.subr.bf16.mxu0 %v1445
    %2034 = vmatpush1.bf16.msra.mxu0 %v1444
    %2035 = vmatprep.subr.bf16.mxu0 %v1449
    %2036 = vmatpush1.bf16.msra.mxu0 %v1448
    %2037 = vmatprep.subr.bf16.mxu0 %v1453
    %2038 = vmatpush1.bf16.msra.mxu0 %v1452
    %2039 = vmatprep.subr.bf16.mxu0 %v1457
    %2040 = vmatpush1.bf16.msra.mxu0 %v1456
    %2041 = vmatprep.subr.bf16.mxu0 %v1461
    %2042 = vmatpush1.bf16.msra.mxu0 %v1460
    %2043 = vmatprep.subr.bf16.mxu0 %v1465
    %2044 = vmatpush1.bf16.msra.mxu0 %v1464
    %2045 = vmatprep.subr.bf16.mxu0 %v1469
    %2046 = vmatpush1.bf16.msra.mxu0 %v1468
    %2047 = vmatprep.subr.bf16.mxu0 %v1473
    %2048 = vmatpush1.bf16.msra.mxu0 %v1472
    %2049 = vmatprep.mubr.bf16.mxu0 %v171
    %2050 = vmatmul.mubr.bf16.gmra.mrb[0].mxu0 %v170
    %v2051 = vpop.f32.mrb[0].mxu0
    %v2052 = vadd.f32 %v2011, %v2051
    %v2053 = vpop.f32.mrb[0].mxu0
    %v2054 = vadd.f32 %v2013, %v2053
    %v2055 = vpop.f32.mrb[0].mxu0
    %v2056 = vpop.f32.mrb[0].mxu0
    %2057 = vdwg.mxu0
    %v2058 = vmul.f32 %v1888, 0.2
    %v2059 = vmul.f32 %v1890, 0.2
    %v2060 = vmul.f32 %v2052, 0.2
    %v2061 = vmul.f32 %v2054, 0.2
    %v2062 = vmax.f32 %v1888, %v2058
    %v2063 = vmax.f32 %v1890, %v2059
    %v2064 = vmax.f32 %v2052, %v2060
    %v2065 = vmax.f32 %v2054, %v2061
    %v2066 = vpack.c.bf16 %v2062, %v2062
    %v2067 = vpack.c.bf16 %v2063, %v2063
    %v2068 = vpack.c.bf16 %v2064, %v2064
    %v2069 = vpack.c.bf16 %v2065, %v2065
    %v2070 = vld [vmem:[%s3] sm:$0xff]
    %v2071 = vld [vmem:[%s3 + $0x8] sm:$0xff]
    %v2072 = vld [vmem:[%s3 + $0x10] sm:$0xff]
    %v2073 = vld [vmem:[%s3 + $0x18] sm:$0xff]
    %v2074 = vld [vmem:[%s3 + $0x20] sm:$0xff]
    %v2075 = vld [vmem:[%s3 + $0x28] sm:$0xff]
    %v2076 = vld [vmem:[%s3 + $0x30] sm:$0xff]
    %v2077 = vld [vmem:[%s3 + $0x38] sm:$0xff]
    %v2078 = vld [vmem:[%s3 + $0x40] sm:$0xff]
    %v2079 = vld [vmem:[%s3 + $0x48] sm:$0xff]
    %v2080 = vld [vmem:[%s3 + $0x50] sm:$0xff]
    %v2081 = vld [vmem:[%s3 + $0x58] sm:$0xff]
    %v2082 = vld [vmem:[%s3 + $0x60] sm:$0xff]
    %v2083 = vld [vmem:[%s3 + $0x68] sm:$0xff]
    %v2084 = vld [vmem:[%s3 + $0x70] sm:$0xff]
    %v2085 = vld [vmem:[%s3 + $0x78] sm:$0xff]
    %v2086 = vld [vmem:[%s3 + $0x80] sm:$0xff]
    %v2087 = vld [vmem:[%s3 + $0x88] sm:$0xff]
    %v2088 = vld [vmem:[%s3 + $0x90] sm:$0xff]
    %v2089 = vld [vmem:[%s3 + $0x98] sm:$0xff]
    %v2090 = vld [vmem:[%s3 + $0xa0] sm:$0xff]
    %v2091 = vld [vmem:[%s3 + $0xa8] sm:$0xff]
    %v2092 = vld [vmem:[%s3 + $0xb0] sm:$0xff]
    %v2093 = vld [vmem:[%s3 + $0xb8] sm:$0xff]
    %v2094 = vld [vmem:[%s3 + $0xc0] sm:$0xff]
    %v2095 = vld [vmem:[%s3 + $0xc8] sm:$0xff]
    %v2096 = vld [vmem:[%s3 + $0xd0] sm:$0xff]
    %v2097 = vld [vmem:[%s3 + $0xd8] sm:$0xff]
    %v2098 = vld [vmem:[%s3 + $0xe0] sm:$0xff]
    %v2099 = vld [vmem:[%s3 + $0xe8] sm:$0xff]
    %v2100 = vld [vmem:[%s3 + $0xf0] sm:$0xff]
    %v2101 = vld [vmem:[%s3 + $0xf8] sm:$0xff]
    %v2102 = vld [vmem:[%s3 + $0x100] sm:$0xff]
    %v2103 = vld [vmem:[%s3 + $0x108] sm:$0xff]
    %v2104 = vld [vmem:[%s3 + $0x110] sm:$0xff]
    %v2105 = vld [vmem:[%s3 + $0x118] sm:$0xff]
    %v2106 = vld [vmem:[%s3 + $0x120] sm:$0xff]
    %v2107 = vld [vmem:[%s3 + $0x128] sm:$0xff]
    %v2108 = vld [vmem:[%s3 + $0x130] sm:$0xff]
    %v2109 = vld [vmem:[%s3 + $0x138] sm:$0xff]
    %v2110 = vld [vmem:[%s3 + $0x140] sm:$0xff]
    %v2111 = vld [vmem:[%s3 + $0x148] sm:$0xff]
    %v2112 = vld [vmem:[%s3 + $0x150] sm:$0xff]
    %v2113 = vld [vmem:[%s3 + $0x158] sm:$0xff]
    %v2114 = vld [vmem:[%s3 + $0x160] sm:$0xff]
    %v2115 = vld [vmem:[%s3 + $0x168] sm:$0xff]
    %v2116 = vld [vmem:[%s3 + $0x170] sm:$0xff]
    %v2117 = vld [vmem:[%s3 + $0x178] sm:$0xff]
    %v2118 = vld [vmem:[%s3 + $0x180] sm:$0xff]
    %v2119 = vld [vmem:[%s3 + $0x188] sm:$0xff]
    %v2120 = vld [vmem:[%s3 + $0x190] sm:$0xff]
    %v2121 = vld [vmem:[%s3 + $0x198] sm:$0xff]
    %v2122 = vld [vmem:[%s3 + $0x1a0] sm:$0xff]
    %v2123 = vld [vmem:[%s3 + $0x1a8] sm:$0xff]
    %v2124 = vld [vmem:[%s3 + $0x1b0] sm:$0xff]
    %v2125 = vld [vmem:[%s3 + $0x1b8] sm:$0xff]
    %v2126 = vld [vmem:[%s3 + $0x1c0] sm:$0xff]
    %v2127 = vld [vmem:[%s3 + $0x1c8] sm:$0xff]
    %v2128 = vld [vmem:[%s3 + $0x1d0] sm:$0xff]
    %v2129 = vld [vmem:[%s3 + $0x1d8] sm:$0xff]
    %v2130 = vld [vmem:[%s3 + $0x1e0] sm:$0xff]
    %v2131 = vld [vmem:[%s3 + $0x1e8] sm:$0xff]
    %v2132 = vld [vmem:[%s3 + $0x1f0] sm:$0xff]
    %v2133 = vld [vmem:[%s3 + $0x1f8] sm:$0xff]
    %v2198 = vunpack.c.l.b16 %v2070
    %v2199 = vunpack.c.h.b16 %v2070
    %v2200 = vunpack.c.l.b16 %v2071
    %v2201 = vunpack.c.h.b16 %v2071
    %v2202 = vunpack.c.l.b16 %v2072
    %v2203 = vunpack.c.h.b16 %v2072
    %v2204 = vunpack.c.l.b16 %v2073
    %v2205 = vunpack.c.h.b16 %v2073
    %v2206 = vunpack.c.l.b16 %v2074
    %v2207 = vunpack.c.h.b16 %v2074
    %v2208 = vunpack.c.l.b16 %v2075
    %v2209 = vunpack.c.h.b16 %v2075
    %v2210 = vunpack.c.l.b16 %v2076
    %v2211 = vunpack.c.h.b16 %v2076
    %v2212 = vunpack.c.l.b16 %v2077
    %v2213 = vunpack.c.h.b16 %v2077
    %v2214 = vunpack.c.l.b16 %v2078
    %v2215 = vunpack.c.h.b16 %v2078
    %v2216 = vunpack.c.l.b16 %v2079
    %v2217 = vunpack.c.h.b16 %v2079
    %v2218 = vunpack.c.l.b16 %v2080
    %v2219 = vunpack.c.h.b16 %v2080
    %v2220 = vunpack.c.l.b16 %v2081
    %v2221 = vunpack.c.h.b16 %v2081
    %v2222 = vunpack.c.l.b16 %v2082
    %v2223 = vunpack.c.h.b16 %v2082
    %v2224 = vunpack.c.l.b16 %v2083
    %v2225 = vunpack.c.h.b16 %v2083
    %v2226 = vunpack.c.l.b16 %v2084
    %v2227 = vunpack.c.h.b16 %v2084
    %v2228 = vunpack.c.l.b16 %v2085
    %v2229 = vunpack.c.h.b16 %v2085
    %v2230 = vunpack.c.l.b16 %v2086
    %v2231 = vunpack.c.h.b16 %v2086
    %v2232 = vunpack.c.l.b16 %v2087
    %v2233 = vunpack.c.h.b16 %v2087
    %v2234 = vunpack.c.l.b16 %v2088
    %v2235 = vunpack.c.h.b16 %v2088
    %v2236 = vunpack.c.l.b16 %v2089
    %v2237 = vunpack.c.h.b16 %v2089
    %v2238 = vunpack.c.l.b16 %v2090
    %v2239 = vunpack.c.h.b16 %v2090
    %v2240 = vunpack.c.l.b16 %v2091
    %v2241 = vunpack.c.h.b16 %v2091
    %v2242 = vunpack.c.l.b16 %v2092
    %v2243 = vunpack.c.h.b16 %v2092
    %v2244 = vunpack.c.l.b16 %v2093
    %v2245 = vunpack.c.h.b16 %v2093
    %v2246 = vunpack.c.l.b16 %v2094
    %v2247 = vunpack.c.h.b16 %v2094
    %v2248 = vunpack.c.l.b16 %v2095
    %v2249 = vunpack.c.h.b16 %v2095
    %v2250 = vunpack.c.l.b16 %v2096
    %v2251 = vunpack.c.h.b16 %v2096
    %v2252 = vunpack.c.l.b16 %v2097
    %v2253 = vunpack.c.h.b16 %v2097
    %v2254 = vunpack.c.l.b16 %v2098
    %v2255 = vunpack.c.h.b16 %v2098
    %v2256 = vunpack.c.l.b16 %v2099
    %v2257 = vunpack.c.h.b16 %v2099
    %v2258 = vunpack.c.l.b16 %v2100
    %v2259 = vunpack.c.h.b16 %v2100
    %v2260 = vunpack.c.l.b16 %v2101
    %v2261 = vunpack.c.h.b16 %v2101
    %v2262 = vunpack.c.l.b16 %v2102
    %v2263 = vunpack.c.h.b16 %v2102
    %v2264 = vunpack.c.l.b16 %v2103
    %v2265 = vunpack.c.h.b16 %v2103
    %v2266 = vunpack.c.l.b16 %v2104
    %v2267 = vunpack.c.h.b16 %v2104
    %v2268 = vunpack.c.l.b16 %v2105
    %v2269 = vunpack.c.h.b16 %v2105
    %v2270 = vunpack.c.l.b16 %v2106
    %v2271 = vunpack.c.h.b16 %v2106
    %v2272 = vunpack.c.l.b16 %v2107
    %v2273 = vunpack.c.h.b16 %v2107
    %v2274 = vunpack.c.l.b16 %v2108
    %v2275 = vunpack.c.h.b16 %v2108
    %v2276 = vunpack.c.l.b16 %v2109
    %v2277 = vunpack.c.h.b16 %v2109
    %v2278 = vunpack.c.l.b16 %v2110
    %v2279 = vunpack.c.h.b16 %v2110
    %v2280 = vunpack.c.l.b16 %v2111
    %v2281 = vunpack.c.h.b16 %v2111
    %v2282 = vunpack.c.l.b16 %v2112
    %v2283 = vunpack.c.h.b16 %v2112
    %v2284 = vunpack.c.l.b16 %v2113
    %v2285 = vunpack.c.h.b16 %v2113
    %v2286 = vunpack.c.l.b16 %v2114
    %v2287 = vunpack.c.h.b16 %v2114
    %v2288 = vunpack.c.l.b16 %v2115
    %v2289 = vunpack.c.h.b16 %v2115
    %v2290 = vunpack.c.l.b16 %v2116
    %v2291 = vunpack.c.h.b16 %v2116
    %v2292 = vunpack.c.l.b16 %v2117
    %v2293 = vunpack.c.h.b16 %v2117
    %v2294 = vunpack.c.l.b16 %v2118
    %v2295 = vunpack.c.h.b16 %v2118
    %v2296 = vunpack.c.l.b16 %v2119
    %v2297 = vunpack.c.h.b16 %v2119
    %v2298 = vunpack.c.l.b16 %v2120
    %v2299 = vunpack.c.h.b16 %v2120
    %v2300 = vunpack.c.l.b16 %v2121
    %v2301 = vunpack.c.h.b16 %v2121
    %v2302 = vunpack.c.l.b16 %v2122
    %v2303 = vunpack.c.h.b16 %v2122
    %v2304 = vunpack.c.l.b16 %v2123
    %v2305 = vunpack.c.h.b16 %v2123
    %v2306 = vunpack.c.l.b16 %v2124
    %v2307 = vunpack.c.h.b16 %v2124
    %v2308 = vunpack.c.l.b16 %v2125
    %v2309 = vunpack.c.h.b16 %v2125
    %v2310 = vunpack.c.l.b16 %v2126
    %v2311 = vunpack.c.h.b16 %v2126
    %v2312 = vunpack.c.l.b16 %v2127
    %v2313 = vunpack.c.h.b16 %v2127
    %v2314 = vunpack.c.l.b16 %v2128
    %v2315 = vunpack.c.h.b16 %v2128
    %v2316 = vunpack.c.l.b16 %v2129
    %v2317 = vunpack.c.h.b16 %v2129
    %v2318 = vunpack.c.l.b16 %v2130
    %v2319 = vunpack.c.h.b16 %v2130
    %v2320 = vunpack.c.l.b16 %v2131
    %v2321 = vunpack.c.h.b16 %v2131
    %v2322 = vunpack.c.l.b16 %v2132
    %v2323 = vunpack.c.h.b16 %v2132
    %v2324 = vunpack.c.l.b16 %v2133
    %v2325 = vunpack.c.h.b16 %v2133
    %v2326 = vpack.c.b16 %v2200, %v2198
    %v2327 = vpack.c.b16 %v2201, %v2199
    %v2328 = vpack.c.b16 %v2204, %v2202
    %v2329 = vpack.c.b16 %v2205, %v2203
    %v2330 = vpack.c.b16 %v2208, %v2206
    %v2331 = vpack.c.b16 %v2209, %v2207
    %v2332 = vpack.c.b16 %v2212, %v2210
    %v2333 = vpack.c.b16 %v2213, %v2211
    %v2334 = vpack.c.b16 %v2216, %v2214
    %v2335 = vpack.c.b16 %v2217, %v2215
    %v2336 = vpack.c.b16 %v2220, %v2218
    %v2337 = vpack.c.b16 %v2221, %v2219
    %v2338 = vpack.c.b16 %v2224, %v2222
    %v2339 = vpack.c.b16 %v2225, %v2223
    %v2340 = vpack.c.b16 %v2228, %v2226
    %v2341 = vpack.c.b16 %v2229, %v2227
    %v2342 = vpack.c.b16 %v2232, %v2230
    %v2343 = vpack.c.b16 %v2233, %v2231
    %v2344 = vpack.c.b16 %v2236, %v2234
    %v2345 = vpack.c.b16 %v2237, %v2235
    %v2346 = vpack.c.b16 %v2240, %v2238
    %v2347 = vpack.c.b16 %v2241, %v2239
    %v2348 = vpack.c.b16 %v2244, %v2242
    %v2349 = vpack.c.b16 %v2245, %v2243
    %v2350 = vpack.c.b16 %v2248, %v2246
    %v2351 = vpack.c.b16 %v2249, %v2247
    %v2352 = vpack.c.b16 %v2252, %v2250
    %v2353 = vpack.c.b16 %v2253, %v2251
    %v2354 = vpack.c.b16 %v2256, %v2254
    %v2355 = vpack.c.b16 %v2257, %v2255
    %v2356 = vpack.c.b16 %v2260, %v2258
    %v2357 = vpack.c.b16 %v2261, %v2259
    %v2358 = vpack.c.b16 %v2264, %v2262
    %v2359 = vpack.c.b16 %v2265, %v2263
    %v2360 = vpack.c.b16 %v2268, %v2266
    %v2361 = vpack.c.b16 %v2269, %v2267
    %v2362 = vpack.c.b16 %v2272, %v2270
    %v2363 = vpack.c.b16 %v2273, %v2271
    %v2364 = vpack.c.b16 %v2276, %v2274
    %v2365 = vpack.c.b16 %v2277, %v2275
    %v2366 = vpack.c.b16 %v2280, %v2278
    %v2367 = vpack.c.b16 %v2281, %v2279
    %v2368 = vpack.c.b16 %v2284, %v2282
    %v2369 = vpack.c.b16 %v2285, %v2283
    %v2370 = vpack.c.b16 %v2288, %v2286
    %v2371 = vpack.c.b16 %v2289, %v2287
    %v2372 = vpack.c.b16 %v2292, %v2290
    %v2373 = vpack.c.b16 %v2293, %v2291
    %v2374 = vpack.c.b16 %v2296, %v2294
    %v2375 = vpack.c.b16 %v2297, %v2295
    %v2376 = vpack.c.b16 %v2300, %v2298
    %v2377 = vpack.c.b16 %v2301, %v2299
    %v2378 = vpack.c.b16 %v2304, %v2302
    %v2379 = vpack.c.b16 %v2305, %v2303
    %v2380 = vpack.c.b16 %v2308, %v2306
    %v2381 = vpack.c.b16 %v2309, %v2307
    %v2382 = vpack.c.b16 %v2312, %v2310
    %v2383 = vpack.c.b16 %v2313, %v2311
    %v2384 = vpack.c.b16 %v2316, %v2314
    %v2385 = vpack.c.b16 %v2317, %v2315
    %v2386 = vpack.c.b16 %v2320, %v2318
    %v2387 = vpack.c.b16 %v2321, %v2319
    %v2388 = vpack.c.b16 %v2324, %v2322
    %v2389 = vpack.c.b16 %v2325, %v2323
    %2454 = vmatprep.subr.bf16.mxu0 %v2327
    %2455 = vmatpush1.bf16.msra.mxu0 %v2326
    %2456 = vmatprep.subr.bf16.mxu0 %v2329
    %2457 = vmatpush1.bf16.msra.mxu0 %v2328
    %2458 = vmatprep.subr.bf16.mxu0 %v2331
    %2459 = vmatpush1.bf16.msra.mxu0 %v2330
    %2460 = vmatprep.subr.bf16.mxu0 %v2333
    %2461 = vmatpush1.bf16.msra.mxu0 %v2332
    %2462 = vmatprep.subr.bf16.mxu0 %v2335
    %2463 = vmatpush1.bf16.msra.mxu0 %v2334
    %2464 = vmatprep.subr.bf16.mxu0 %v2337
    %2465 = vmatpush1.bf16.msra.mxu0 %v2336
    %2466 = vmatprep.subr.bf16.mxu0 %v2339
    %2467 = vmatpush1.bf16.msra.mxu0 %v2338
    %2468 = vmatprep.subr.bf16.mxu0 %v2341
    %2469 = vmatpush1.bf16.msra.mxu0 %v2340
    %2470 = vmatprep.subr.bf16.mxu0 %v2343
    %2471 = vmatpush1.bf16.msra.mxu0 %v2342
    %2472 = vmatprep.subr.bf16.mxu0 %v2345
    %2473 = vmatpush1.bf16.msra.mxu0 %v2344
    %2474 = vmatprep.subr.bf16.mxu0 %v2347
    %2475 = vmatpush1.bf16.msra.mxu0 %v2346
    %2476 = vmatprep.subr.bf16.mxu0 %v2349
    %2477 = vmatpush1.bf16.msra.mxu0 %v2348
    %2478 = vmatprep.subr.bf16.mxu0 %v2351
    %2479 = vmatpush1.bf16.msra.mxu0 %v2350
    %2480 = vmatprep.subr.bf16.mxu0 %v2353
    %2481 = vmatpush1.bf16.msra.mxu0 %v2352
    %2482 = vmatprep.subr.bf16.mxu0 %v2355
    %2483 = vmatpush1.bf16.msra.mxu0 %v2354
    %2484 = vmatprep.subr.bf16.mxu0 %v2357
    %2485 = vmatpush1.bf16.msra.mxu0 %v2356
    %2486 = vmatprep.mubr.bf16.mxu0 %v2067
    %2487 = vmatmul.mubr.bf16.gmra.mrb[0].mxu0 %v2066
    %v2488 = vpop.f32.mrb[0].mxu0
    %v2489 = vadd.f32 0.0, %v2488
    %v2490 = vpop.f32.mrb[0].mxu0
    %v2491 = vadd.f32 0.0, %v2490
    %v2492 = vpop.f32.mrb[0].mxu0
    %v2493 = vpop.f32.mrb[0].mxu0
    %2494 = vdwg.mxu0
    %2495 = vmatprep.subr.bf16.mxu0 %v2359
    %2496 = vmatpush1.bf16.msra.mxu0 %v2358
    %2497 = vmatprep.subr.bf16.mxu0 %v2361
    %2498 = vmatpush1.bf16.msra.mxu0 %v2360
    %2499 = vmatprep.subr.bf16.mxu0 %v2363
    %2500 = vmatpush1.bf16.msra.mxu0 %v2362
    %2501 = vmatprep.subr.bf16.mxu0 %v2365
    %2502 = vmatpush1.bf16.msra.mxu0 %v2364
    %2503 = vmatprep.subr.bf16.mxu0 %v2367
    %2504 = vmatpush1.bf16.msra.mxu0 %v2366
    %2505 = vmatprep.subr.bf16.mxu0 %v2369
    %2506 = vmatpush1.bf16.msra.mxu0 %v2368
    %2507 = vmatprep.subr.bf16.mxu0 %v2371
    %2508 = vmatpush1.bf16.msra.mxu0 %v2370
    %2509 = vmatprep.subr.bf16.mxu0 %v2373
    %2510 = vmatpush1.bf16.msra.mxu0 %v2372
    %2511 = vmatprep.subr.bf16.mxu0 %v2375
    %2512 = vmatpush1.bf16.msra.mxu0 %v2374
    %2513 = vmatprep.subr.bf16.mxu0 %v2377
    %2514 = vmatpush1.bf16.msra.mxu0 %v2376
    %2515 = vmatprep.subr.bf16.mxu0 %v2379
    %2516 = vmatpush1.bf16.msra.mxu0 %v2378
    %2517 = vmatprep.subr.bf16.mxu0 %v2381
    %2518 = vmatpush1.bf16.msra.mxu0 %v2380
    %2519 = vmatprep.subr.bf16.mxu0 %v2383
    %2520 = vmatpush1.bf16.msra.mxu0 %v2382
    %2521 = vmatprep.subr.bf16.mxu0 %v2385
    %2522 = vmatpush1.bf16.msra.mxu0 %v2384
    %2523 = vmatprep.subr.bf16.mxu0 %v2387
    %2524 = vmatpush1.bf16.msra.mxu0 %v2386
    %2525 = vmatprep.subr.bf16.mxu0 %v2389
    %2526 = vmatpush1.bf16.msra.mxu0 %v2388
    %2527 = vmatprep.mubr.bf16.mxu0 %v2069
    %2528 = vmatmul.mubr.bf16.gmra.mrb[0].mxu0 %v2068
    %v2529 = vpop.f32.mrb[0].mxu0
    %v2530 = vadd.f32 %v2489, %v2529
    %v2531 = vpop.f32.mrb[0].mxu0
    %v2532 = vadd.f32 %v2491, %v2531
    %v2533 = vpop.f32.mrb[0].mxu0
    %v2534 = vpop.f32.mrb[0].mxu0
    %2535 = vdwg.mxu0
    %vm2536 = vcmask 1043456
    %v2537 = vsel %vm2536, %v2530, 0.0
    %v2538 = vrot.slane %v2537, 4
    %v2539 = vadd.f32 %v2537, %v2538
    %v2540 = vrot.slane %v2539, 2
    %v2541 = vadd.f32 %v2539, %v2540
    %v2542 = vrot.slane %v2541, 1
    %v2543 = vadd.f32 %v2541, %v2542
    %v2544 = vsel %vm2536, %v2532, 0.0
    %v2545 = vrot.slane %v2544, 4
    %v2546 = vadd.f32 %v2544, %v2545
    %v2547 = vrot.slane %v2546, 2
    %v2548 = vadd.f32 %v2546, %v2547
    %v2549 = vrot.slane %v2548, 1
    %v2550 = vadd.f32 %v2548, %v2549
    %v2551 = vld [vmem:[%s4] sm:$0xff]
    %v2552 = vld [vmem:[%s4 + $0x8] sm:$0xff]
    %v2553 = vld [vmem:[%s4 + $0x10] sm:$0xff]
    %v2554 = vld [vmem:[%s4 + $0x18] sm:$0xff]
    %v2555 = vld [vmem:[%s4 + $0x20] sm:$0xff]
    %v2556 = vld [vmem:[%s4 + $0x28] sm:$0xff]
    %v2557 = vld [vmem:[%s4 + $0x30] sm:$0xff]
    %v2558 = vld [vmem:[%s4 + $0x38] sm:$0xff]
    %v2559 = vld [vmem:[%s4 + $0x40] sm:$0xff]
    %v2560 = vld [vmem:[%s4 + $0x48] sm:$0xff]
    %v2561 = vld [vmem:[%s4 + $0x50] sm:$0xff]
    %v2562 = vld [vmem:[%s4 + $0x58] sm:$0xff]
    %v2563 = vld [vmem:[%s4 + $0x60] sm:$0xff]
    %v2564 = vld [vmem:[%s4 + $0x68] sm:$0xff]
    %v2565 = vld [vmem:[%s4 + $0x70] sm:$0xff]
    %v2566 = vld [vmem:[%s4 + $0x78] sm:$0xff]
    %v2567 = vld [vmem:[%s4 + $0x80] sm:$0xff]
    %v2568 = vld [vmem:[%s4 + $0x88] sm:$0xff]
    %v2569 = vld [vmem:[%s4 + $0x90] sm:$0xff]
    %v2570 = vld [vmem:[%s4 + $0x98] sm:$0xff]
    %v2571 = vld [vmem:[%s4 + $0xa0] sm:$0xff]
    %v2572 = vld [vmem:[%s4 + $0xa8] sm:$0xff]
    %v2573 = vld [vmem:[%s4 + $0xb0] sm:$0xff]
    %v2574 = vld [vmem:[%s4 + $0xb8] sm:$0xff]
    %v2575 = vld [vmem:[%s4 + $0xc0] sm:$0xff]
    %v2576 = vld [vmem:[%s4 + $0xc8] sm:$0xff]
    %v2577 = vld [vmem:[%s4 + $0xd0] sm:$0xff]
    %v2578 = vld [vmem:[%s4 + $0xd8] sm:$0xff]
    %v2579 = vld [vmem:[%s4 + $0xe0] sm:$0xff]
    %v2580 = vld [vmem:[%s4 + $0xe8] sm:$0xff]
    %v2581 = vld [vmem:[%s4 + $0xf0] sm:$0xff]
    %v2582 = vld [vmem:[%s4 + $0xf8] sm:$0xff]
    %2583 = vmatprep.subr.mxu0 0.0
    %2584 = vmatpush1.msra.mxu0 %v2551
    %2585 = vmatprep.subr.mxu0 0.0
    %2586 = vmatpush1.msra.mxu0 %v2552
    %2587 = vmatprep.subr.mxu0 0.0
    %2588 = vmatpush1.msra.mxu0 %v2553
    %2589 = vmatprep.subr.mxu0 0.0
    %2590 = vmatpush1.msra.mxu0 %v2554
    %2591 = vmatprep.subr.mxu0 0.0
    %2592 = vmatpush1.msra.mxu0 %v2555
    %2593 = vmatprep.subr.mxu0 0.0
    %2594 = vmatpush1.msra.mxu0 %v2556
    %2595 = vmatprep.subr.mxu0 0.0
    %2596 = vmatpush1.msra.mxu0 %v2557
    %2597 = vmatprep.subr.mxu0 0.0
    %2598 = vmatpush1.msra.mxu0 %v2558
    %2599 = vmatprep.subr.mxu0 0.0
    %2600 = vmatpush1.msra.mxu0 %v2559
    %2601 = vmatprep.subr.mxu0 0.0
    %2602 = vmatpush1.msra.mxu0 %v2560
    %2603 = vmatprep.subr.mxu0 0.0
    %2604 = vmatpush1.msra.mxu0 %v2561
    %2605 = vmatprep.subr.mxu0 0.0
    %2606 = vmatpush1.msra.mxu0 %v2562
    %2607 = vmatprep.subr.mxu0 0.0
    %2608 = vmatpush1.msra.mxu0 %v2563
    %2609 = vmatprep.subr.mxu0 0.0
    %2610 = vmatpush1.msra.mxu0 %v2564
    %2611 = vmatprep.subr.mxu0 0.0
    %2612 = vmatpush1.msra.mxu0 %v2565
    %2613 = vmatprep.subr.mxu0 0.0
    %2614 = vmatpush1.msra.mxu0 %v2566
    %2615 = vmatprep.subr.mxu0 0.0
    %2616 = vmatpush1.msra.mxu0 %v2567
    %2617 = vmatprep.subr.mxu0 0.0
    %2618 = vmatpush1.msra.mxu0 %v2568
    %2619 = vmatprep.subr.mxu0 0.0
    %2620 = vmatpush1.msra.mxu0 %v2569
    %2621 = vmatprep.subr.mxu0 0.0
    %2622 = vmatpush1.msra.mxu0 %v2570
    %2623 = vmatprep.subr.mxu0 0.0
    %2624 = vmatpush1.msra.mxu0 %v2571
    %2625 = vmatprep.subr.mxu0 0.0
    %2626 = vmatpush1.msra.mxu0 %v2572
    %2627 = vmatprep.subr.mxu0 0.0
    %2628 = vmatpush1.msra.mxu0 %v2573
    %2629 = vmatprep.subr.mxu0 0.0
    %2630 = vmatpush1.msra.mxu0 %v2574
    %2631 = vmatprep.subr.mxu0 0.0
    %2632 = vmatpush1.msra.mxu0 %v2575
    %2633 = vmatprep.subr.mxu0 0.0
    %2634 = vmatpush1.msra.mxu0 %v2576
    %2635 = vmatprep.subr.mxu0 0.0
    %2636 = vmatpush1.msra.mxu0 %v2577
    %2637 = vmatprep.subr.mxu0 0.0
    %2638 = vmatpush1.msra.mxu0 %v2578
    %2639 = vmatprep.subr.mxu0 0.0
    %2640 = vmatpush1.msra.mxu0 %v2579
    %2641 = vmatprep.subr.mxu0 0.0
    %2642 = vmatpush1.msra.mxu0 %v2580
    %2643 = vmatprep.subr.mxu0 0.0
    %2644 = vmatpush1.msra.mxu0 %v2581
    %2645 = vmatprep.subr.mxu0 0.0
    %2646 = vmatpush1.msra.mxu0 %v2582
    %2647 = vmatprep.mubr.f32.mxu0 %v2550
    %2648 = vmatmul.mubr.f32.gmra.mrb[0].mxu0 %v2543
    %v2649 = vpop.f32.mrb[0].mxu0
    %v2650 = vadd.f32 0.0, %v2649
    %v2651 = vpop.f32.mrb[0].mxu0
    %2652 = vdwg.mxu0
    %v2653 = vmul.f32 %v2530, %v2530
    %v2654 = vmul.f32 %v2532, %v2532
    %v2655 = vsel %vm2536, %v2653, 0.0
    %v2656 = vrot.slane %v2655, 4
    %v2657 = vadd.f32 %v2655, %v2656
    %v2658 = vrot.slane %v2657, 2
    %v2659 = vadd.f32 %v2657, %v2658
    %v2660 = vrot.slane %v2659, 1
    %v2661 = vadd.f32 %v2659, %v2660
    %v2662 = vsel %vm2536, %v2654, 0.0
    %v2663 = vrot.slane %v2662, 4
    %v2664 = vadd.f32 %v2662, %v2663
    %v2665 = vrot.slane %v2664, 2
    %v2666 = vadd.f32 %v2664, %v2665
    %v2667 = vrot.slane %v2666, 1
    %v2668 = vadd.f32 %v2666, %v2667
    %2669 = vmatprep.subr.mxu0 0.0
    %2670 = vmatpush1.msra.mxu0 %v2551
    %2671 = vmatprep.subr.mxu0 0.0
    %2672 = vmatpush1.msra.mxu0 %v2552
    %2673 = vmatprep.subr.mxu0 0.0
    %2674 = vmatpush1.msra.mxu0 %v2553
    %2675 = vmatprep.subr.mxu0 0.0
    %2676 = vmatpush1.msra.mxu0 %v2554
    %2677 = vmatprep.subr.mxu0 0.0
    %2678 = vmatpush1.msra.mxu0 %v2555
    %2679 = vmatprep.subr.mxu0 0.0
    %2680 = vmatpush1.msra.mxu0 %v2556
    %2681 = vmatprep.subr.mxu0 0.0
    %2682 = vmatpush1.msra.mxu0 %v2557
    %2683 = vmatprep.subr.mxu0 0.0
    %2684 = vmatpush1.msra.mxu0 %v2558
    %2685 = vmatprep.subr.mxu0 0.0
    %2686 = vmatpush1.msra.mxu0 %v2559
    %2687 = vmatprep.subr.mxu0 0.0
    %2688 = vmatpush1.msra.mxu0 %v2560
    %2689 = vmatprep.subr.mxu0 0.0
    %2690 = vmatpush1.msra.mxu0 %v2561
    %2691 = vmatprep.subr.mxu0 0.0
    %2692 = vmatpush1.msra.mxu0 %v2562
    %2693 = vmatprep.subr.mxu0 0.0
    %2694 = vmatpush1.msra.mxu0 %v2563
    %2695 = vmatprep.subr.mxu0 0.0
    %2696 = vmatpush1.msra.mxu0 %v2564
    %2697 = vmatprep.subr.mxu0 0.0
    %2698 = vmatpush1.msra.mxu0 %v2565
    %2699 = vmatprep.subr.mxu0 0.0
    %2700 = vmatpush1.msra.mxu0 %v2566
    %2701 = vmatprep.subr.mxu0 0.0
    %2702 = vmatpush1.msra.mxu0 %v2567
    %2703 = vmatprep.subr.mxu0 0.0
    %2704 = vmatpush1.msra.mxu0 %v2568
    %2705 = vmatprep.subr.mxu0 0.0
    %2706 = vmatpush1.msra.mxu0 %v2569
    %2707 = vmatprep.subr.mxu0 0.0
    %2708 = vmatpush1.msra.mxu0 %v2570
    %2709 = vmatprep.subr.mxu0 0.0
    %2710 = vmatpush1.msra.mxu0 %v2571
    %2711 = vmatprep.subr.mxu0 0.0
    %2712 = vmatpush1.msra.mxu0 %v2572
    %2713 = vmatprep.subr.mxu0 0.0
    %2714 = vmatpush1.msra.mxu0 %v2573
    %2715 = vmatprep.subr.mxu0 0.0
    %2716 = vmatpush1.msra.mxu0 %v2574
    %2717 = vmatprep.subr.mxu0 0.0
    %2718 = vmatpush1.msra.mxu0 %v2575
    %2719 = vmatprep.subr.mxu0 0.0
    %2720 = vmatpush1.msra.mxu0 %v2576
    %2721 = vmatprep.subr.mxu0 0.0
    %2722 = vmatpush1.msra.mxu0 %v2577
    %2723 = vmatprep.subr.mxu0 0.0
    %2724 = vmatpush1.msra.mxu0 %v2578
    %2725 = vmatprep.subr.mxu0 0.0
    %2726 = vmatpush1.msra.mxu0 %v2579
    %2727 = vmatprep.subr.mxu0 0.0
    %2728 = vmatpush1.msra.mxu0 %v2580
    %2729 = vmatprep.subr.mxu0 0.0
    %2730 = vmatpush1.msra.mxu0 %v2581
    %2731 = vmatprep.subr.mxu0 0.0
    %2732 = vmatpush1.msra.mxu0 %v2582
    %2733 = vmatprep.mubr.f32.mxu0 %v2668
    %2734 = vmatmul.mubr.f32.gmra.mrb[0].mxu0 %v2661
    %v2735 = vpop.f32.mrb[0].mxu0
    %v2736 = vadd.f32 0.0, %v2735
    %v2737 = vpop.f32.mrb[0].mxu0
    %2738 = vdwg.mxu0
    %v2739 = vmul.f32 %v2650, 0.015625
    %v2740 = vmul.f32 %v2736, 0.015625
    %v2741 = vmul.f32 %v2739, %v2739
    %v2742 = vsub.f32 %v2740, %v2741
    %v2743 = vmax.f32 %v2742, 0.0
    %v2744 = vld [vmem:[%s6] sm:$0x1]
    %v2745 = vadd.f32 %v2743, 1e-05
    %v2746 = vrsqrt.pop %v2745
    %v2747 = vmul.f32 %v2744, %v2746
    %v2748 = vld [vmem:[#allocation8] sm:$0x1]
    %v2749 = vmul.f32 %v2739, %v2747
    %v2750 = vsub.f32 %v2748, %v2749
    %v2751 = vld [vmem:[#allocation7] sm:$0xff]
    %v2752 = vld [vmem:[#allocation7 + $0x8] sm:$0xff]
    %v2753 = vld [vmem:[#allocation7 + $0x10] sm:$0xff]
    %v2754 = vld [vmem:[#allocation7 + $0x18] sm:$0xff]
    %vm2755 = vcmask 130048
    %v2757 = vsel %vm2755, %v2747, 0
    %2759 = vmatprep.subr.mxu0 %v2752
    %2760 = vmatpush1.msra.mxu0 %v2751
    %2761 = vmatprep.subr.mxu0 %v2754
    %2762 = vmatpush1.msra.mxu0 %v2753
    %2763 = vmatprep.subr.mxu0 0.0
    %2764 = vmatpush1.msra.mxu0 0.0
    %2765 = vmatprep.subr.mxu0 0.0
    %2766 = vmatpush1.msra.mxu0 0.0
    %2767 = vmatprep.subr.mxu0 0.0
    %2768 = vmatpush1.msra.mxu0 0.0
    %2769 = vmatprep.subr.mxu0 0.0
    %2770 = vmatpush1.msra.mxu0 0.0
    %2771 = vmatprep.subr.mxu0 0.0
    %2772 = vmatpush1.msra.mxu0 0.0
    %2773 = vmatprep.subr.mxu0 0.0
    %2774 = vmatpush1.msra.mxu0 0.0
    %2775 = vmatprep.subr.mxu0 0.0
    %2776 = vmatpush1.msra.mxu0 0.0
    %2777 = vmatprep.subr.mxu0 0.0
    %2778 = vmatpush1.msra.mxu0 0.0
    %2779 = vmatprep.subr.mxu0 0.0
    %2780 = vmatpush1.msra.mxu0 0.0
    %2781 = vmatprep.subr.mxu0 0.0
    %2782 = vmatpush1.msra.mxu0 0.0
    %2783 = vmatprep.subr.mxu0 0.0
    %2784 = vmatpush1.msra.mxu0 0.0
    %2785 = vmatprep.subr.mxu0 0.0
    %2786 = vmatpush1.msra.mxu0 0.0
    %2787 = vmatprep.subr.mxu0 0.0
    %2788 = vmatpush1.msra.mxu0 0.0
    %2789 = vmatprep.subr.mxu0 0.0
    %2790 = vmatpush1.msra.mxu0 0.0
    %2791 = vmatprep.subr.mxu0 0.0
    %2792 = vmatpush1.msra.mxu0 0.0
    %2793 = vmatprep.subr.mxu0 0.0
    %2794 = vmatpush1.msra.mxu0 0.0
    %2795 = vmatprep.subr.mxu0 0.0
    %2796 = vmatpush1.msra.mxu0 0.0
    %2797 = vmatprep.subr.mxu0 0.0
    %2798 = vmatpush1.msra.mxu0 0.0
    %2799 = vmatprep.subr.mxu0 0.0
    %2800 = vmatpush1.msra.mxu0 0.0
    %2801 = vmatprep.subr.mxu0 0.0
    %2802 = vmatpush1.msra.mxu0 0.0
    %2803 = vmatprep.subr.mxu0 0.0
    %2804 = vmatpush1.msra.mxu0 0.0
    %2805 = vmatprep.subr.mxu0 0.0
    %2806 = vmatpush1.msra.mxu0 0.0
    %2807 = vmatprep.subr.mxu0 0.0
    %2808 = vmatpush1.msra.mxu0 0.0
    %2809 = vmatprep.subr.mxu0 0.0
    %2810 = vmatpush1.msra.mxu0 0.0
    %2811 = vmatprep.subr.mxu0 0.0
    %2812 = vmatpush1.msra.mxu0 0.0
    %2813 = vmatprep.subr.mxu0 0.0
    %2814 = vmatpush1.msra.mxu0 0.0
    %2815 = vmatprep.subr.mxu0 0.0
    %2816 = vmatpush1.msra.mxu0 0.0
    %2817 = vmatprep.subr.mxu0 0.0
    %2818 = vmatpush1.msra.mxu0 0.0
    %2819 = vmatprep.subr.mxu0 0.0
    %2820 = vmatpush1.msra.mxu0 0.0
    %2821 = vmatprep.subr.mxu0 0.0
    %2822 = vmatpush1.msra.mxu0 0.0
    %2823 = vmatprep.mubr.f32.mxu0 0.0
    %2824 = vmatmul.mubr.f32.gmra.mrb[0].mxu0 %v2757
    %v2825 = vpop.f32.mrb[0].mxu0
    %v2826 = vadd.f32 0.0, %v2825
    %v2827 = vpop.f32.mrb[0].mxu0
    %v2828 = vadd.f32 0.0, %v2827
    %2829 = vdwg.mxu0
    %v2831 = vsel %vm2755, %v2750, 0
    %2833 = vmatprep.subr.mxu0 %v2752
    %2834 = vmatpush1.msra.mxu0 %v2751
    %2835 = vmatprep.subr.mxu0 %v2754
    %2836 = vmatpush1.msra.mxu0 %v2753
    %2837 = vmatprep.subr.mxu0 0.0
    %2838 = vmatpush1.msra.mxu0 0.0
    %2839 = vmatprep.subr.mxu0 0.0
    %2840 = vmatpush1.msra.mxu0 0.0
    %2841 = vmatprep.subr.mxu0 0.0
    %2842 = vmatpush1.msra.mxu0 0.0
    %2843 = vmatprep.subr.mxu0 0.0
    %2844 = vmatpush1.msra.mxu0 0.0
    %2845 = vmatprep.subr.mxu0 0.0
    %2846 = vmatpush1.msra.mxu0 0.0
    %2847 = vmatprep.subr.mxu0 0.0
    %2848 = vmatpush1.msra.mxu0 0.0
    %2849 = vmatprep.subr.mxu0 0.0
    %2850 = vmatpush1.msra.mxu0 0.0
    %2851 = vmatprep.subr.mxu0 0.0
    %2852 = vmatpush1.msra.mxu0 0.0
    %2853 = vmatprep.subr.mxu0 0.0
    %2854 = vmatpush1.msra.mxu0 0.0
    %2855 = vmatprep.subr.mxu0 0.0
    %2856 = vmatpush1.msra.mxu0 0.0
    %2857 = vmatprep.subr.mxu0 0.0
    %2858 = vmatpush1.msra.mxu0 0.0
    %2859 = vmatprep.subr.mxu0 0.0
    %2860 = vmatpush1.msra.mxu0 0.0
    %2861 = vmatprep.subr.mxu0 0.0
    %2862 = vmatpush1.msra.mxu0 0.0
    %2863 = vmatprep.subr.mxu0 0.0
    %2864 = vmatpush1.msra.mxu0 0.0
    %2865 = vmatprep.subr.mxu0 0.0
    %2866 = vmatpush1.msra.mxu0 0.0
    %2867 = vmatprep.subr.mxu0 0.0
    %2868 = vmatpush1.msra.mxu0 0.0
    %2869 = vmatprep.subr.mxu0 0.0
    %2870 = vmatpush1.msra.mxu0 0.0
    %2871 = vmatprep.subr.mxu0 0.0
    %2872 = vmatpush1.msra.mxu0 0.0
    %2873 = vmatprep.subr.mxu0 0.0
    %2874 = vmatpush1.msra.mxu0 0.0
    %2875 = vmatprep.subr.mxu0 0.0
    %2876 = vmatpush1.msra.mxu0 0.0
    %2877 = vmatprep.subr.mxu0 0.0
    %2878 = vmatpush1.msra.mxu0 0.0
    %2879 = vmatprep.subr.mxu0 0.0
    %2880 = vmatpush1.msra.mxu0 0.0
    %2881 = vmatprep.subr.mxu0 0.0
    %2882 = vmatpush1.msra.mxu0 0.0
    %2883 = vmatprep.subr.mxu0 0.0
    %2884 = vmatpush1.msra.mxu0 0.0
    %2885 = vmatprep.subr.mxu0 0.0
    %2886 = vmatpush1.msra.mxu0 0.0
    %2887 = vmatprep.subr.mxu0 0.0
    %2888 = vmatpush1.msra.mxu0 0.0
    %2889 = vmatprep.subr.mxu0 0.0
    %2890 = vmatpush1.msra.mxu0 0.0
    %2891 = vmatprep.subr.mxu0 0.0
    %2892 = vmatpush1.msra.mxu0 0.0
    %2893 = vmatprep.subr.mxu0 0.0
    %2894 = vmatpush1.msra.mxu0 0.0
    %2895 = vmatprep.subr.mxu0 0.0
    %2896 = vmatpush1.msra.mxu0 0.0
    %2897 = vmatprep.mubr.f32.mxu0 0.0
    %2898 = vmatmul.mubr.f32.gmra.mrb[0].mxu0 %v2831
    %v2899 = vpop.f32.mrb[0].mxu0
    %v2900 = vadd.f32 0.0, %v2899
    %v2901 = vpop.f32.mrb[0].mxu0
    %v2902 = vadd.f32 0.0, %v2901
    %2903 = vdwg.mxu0
    %v2904 = vlaneseq
    %v2905 = vshrl.u32 %v2904, 7
    %v2906 = vsub.s32 0, %v2905
    %v2907 = vrot.slane %v2826, %v2906
    %v2908 = vlaneseq
    %v2909 = vshrl.u32 %v2908, 7
    %v2910 = vsub.s32 0, %v2909
    %v2911 = vrot.slane %v2828, %v2910
    %v2912 = vmul.f32 %v2530, %v2907
    %v2913 = vmul.f32 %v2532, %v2911
    %v2914 = vlaneseq
    %v2915 = vshrl.u32 %v2914, 7
    %v2916 = vsub.s32 0, %v2915
    %v2917 = vrot.slane %v2900, %v2916
    %v2918 = vlaneseq
    %v2919 = vshrl.u32 %v2918, 7
    %v2920 = vsub.s32 0, %v2919
    %v2921 = vrot.slane %v2902, %v2920
    %v2922 = vadd.f32 %v2912, %v2917
    %v2923 = vadd.f32 %v2913, %v2921
    %v2924 = vmul.f32 %v2922, 0.2
    %v2925 = vmul.f32 %v2923, 0.2
    %v2926 = vmax.f32 %v2922, %v2924
    %v2927 = vmax.f32 %v2923, %v2925
    %v2928 = vpack.c.bf16 %v2926, %v2926
    %v2929 = vpack.c.bf16 %v2927, %v2927
    %v2930 = vld [vmem:[#allocation10] sm:$0xf]
    %v2931 = vld [vmem:[#allocation10 + $0x4] sm:$0xf]
    %v2932 = vld [vmem:[#allocation10 + $0x8] sm:$0xf]
    %v2933 = vld [vmem:[#allocation10 + $0xc] sm:$0xf]
    %v2934 = vld [vmem:[#allocation10 + $0x10] sm:$0xf]
    %v2935 = vld [vmem:[#allocation10 + $0x14] sm:$0xf]
    %v2936 = vld [vmem:[#allocation10 + $0x18] sm:$0xf]
    %v2937 = vld [vmem:[#allocation10 + $0x1c] sm:$0xf]
    %v2938 = vld [vmem:[#allocation10 + $0x20] sm:$0xf]
    %v2939 = vld [vmem:[#allocation10 + $0x24] sm:$0xf]
    %v2940 = vld [vmem:[#allocation10 + $0x28] sm:$0xf]
    %v2941 = vld [vmem:[#allocation10 + $0x2c] sm:$0xf]
    %v2942 = vld [vmem:[#allocation10 + $0x30] sm:$0xf]
    %v2943 = vld [vmem:[#allocation10 + $0x34] sm:$0xf]
    %v2944 = vld [vmem:[#allocation10 + $0x38] sm:$0xf]
    %v2945 = vld [vmem:[#allocation10 + $0x3c] sm:$0xf]
    %v2946 = vld [vmem:[#allocation10 + $0x40] sm:$0xf]
    %v2947 = vld [vmem:[#allocation10 + $0x44] sm:$0xf]
    %v2948 = vld [vmem:[#allocation10 + $0x48] sm:$0xf]
    %v2949 = vld [vmem:[#allocation10 + $0x4c] sm:$0xf]
    %v2950 = vld [vmem:[#allocation10 + $0x50] sm:$0xf]
    %v2951 = vld [vmem:[#allocation10 + $0x54] sm:$0xf]
    %v2952 = vld [vmem:[#allocation10 + $0x58] sm:$0xf]
    %v2953 = vld [vmem:[#allocation10 + $0x5c] sm:$0xf]
    %v2954 = vld [vmem:[#allocation10 + $0x60] sm:$0xf]
    %v2955 = vld [vmem:[#allocation10 + $0x64] sm:$0xf]
    %v2956 = vld [vmem:[#allocation10 + $0x68] sm:$0xf]
    %v2957 = vld [vmem:[#allocation10 + $0x6c] sm:$0xf]
    %v2958 = vld [vmem:[#allocation10 + $0x70] sm:$0xf]
    %v2959 = vld [vmem:[#allocation10 + $0x74] sm:$0xf]
    %v2960 = vld [vmem:[#allocation10 + $0x78] sm:$0xf]
    %v2961 = vld [vmem:[#allocation10 + $0x7c] sm:$0xf]
    %v2994 = vunpack.c.l.b16 %v2930
    %v2995 = vunpack.c.l.b16 %v2931
    %v2996 = vunpack.c.l.b16 %v2932
    %v2997 = vunpack.c.l.b16 %v2933
    %v2998 = vunpack.c.l.b16 %v2934
    %v2999 = vunpack.c.l.b16 %v2935
    %v3000 = vunpack.c.l.b16 %v2936
    %v3001 = vunpack.c.l.b16 %v2937
    %v3002 = vunpack.c.l.b16 %v2938
    %v3003 = vunpack.c.l.b16 %v2939
    %v3004 = vunpack.c.l.b16 %v2940
    %v3005 = vunpack.c.l.b16 %v2941
    %v3006 = vunpack.c.l.b16 %v2942
    %v3007 = vunpack.c.l.b16 %v2943
    %v3008 = vunpack.c.l.b16 %v2944
    %v3009 = vunpack.c.l.b16 %v2945
    %v3010 = vunpack.c.l.b16 %v2946
    %v3011 = vunpack.c.l.b16 %v2947
    %v3012 = vunpack.c.l.b16 %v2948
    %v3013 = vunpack.c.l.b16 %v2949
    %v3014 = vunpack.c.l.b16 %v2950
    %v3015 = vunpack.c.l.b16 %v2951
    %v3016 = vunpack.c.l.b16 %v2952
    %v3017 = vunpack.c.l.b16 %v2953
    %v3018 = vunpack.c.l.b16 %v2954
    %v3019 = vunpack.c.l.b16 %v2955
    %v3020 = vunpack.c.l.b16 %v2956
    %v3021 = vunpack.c.l.b16 %v2957
    %v3022 = vunpack.c.l.b16 %v2958
    %v3023 = vunpack.c.l.b16 %v2959
    %v3024 = vunpack.c.l.b16 %v2960
    %v3025 = vunpack.c.l.b16 %v2961
    %v3026 = vpack.c.b16 %v2995, %v2994
    %v3027 = vpack.c.b16 %v2997, %v2996
    %v3028 = vpack.c.b16 %v2999, %v2998
    %v3029 = vpack.c.b16 %v3001, %v3000
    %v3030 = vpack.c.b16 %v3003, %v3002
    %v3031 = vpack.c.b16 %v3005, %v3004
    %v3032 = vpack.c.b16 %v3007, %v3006
    %v3033 = vpack.c.b16 %v3009, %v3008
    %v3034 = vpack.c.b16 %v3011, %v3010
    %v3035 = vpack.c.b16 %v3013, %v3012
    %v3036 = vpack.c.b16 %v3015, %v3014
    %v3037 = vpack.c.b16 %v3017, %v3016
    %v3038 = vpack.c.b16 %v3019, %v3018
    %v3039 = vpack.c.b16 %v3021, %v3020
    %v3040 = vpack.c.b16 %v3023, %v3022
    %v3041 = vpack.c.b16 %v3025, %v3024
    %3058 = vmatprep.subr.bf16.mxu0 0
    %3059 = vmatpush1.bf16.msra.mxu0 %v3026
    %3060 = vmatprep.subr.bf16.mxu0 0
    %3061 = vmatpush1.bf16.msra.mxu0 %v3027
    %3062 = vmatprep.subr.bf16.mxu0 0
    %3063 = vmatpush1.bf16.msra.mxu0 %v3028
    %3064 = vmatprep.subr.bf16.mxu0 0
    %3065 = vmatpush1.bf16.msra.mxu0 %v3029
    %3066 = vmatprep.subr.bf16.mxu0 0
    %3067 = vmatpush1.bf16.msra.mxu0 %v3030
    %3068 = vmatprep.subr.bf16.mxu0 0
    %3069 = vmatpush1.bf16.msra.mxu0 %v3031
    %3070 = vmatprep.subr.bf16.mxu0 0
    %3071 = vmatpush1.bf16.msra.mxu0 %v3032
    %3072 = vmatprep.subr.bf16.mxu0 0
    %3073 = vmatpush1.bf16.msra.mxu0 %v3033
    %3074 = vmatprep.subr.bf16.mxu0 0
    %3075 = vmatpush1.bf16.msra.mxu0 %v3034
    %3076 = vmatprep.subr.bf16.mxu0 0
    %3077 = vmatpush1.bf16.msra.mxu0 %v3035
    %3078 = vmatprep.subr.bf16.mxu0 0
    %3079 = vmatpush1.bf16.msra.mxu0 %v3036
    %3080 = vmatprep.subr.bf16.mxu0 0
    %3081 = vmatpush1.bf16.msra.mxu0 %v3037
    %3082 = vmatprep.subr.bf16.mxu0 0
    %3083 = vmatpush1.bf16.msra.mxu0 %v3038
    %3084 = vmatprep.subr.bf16.mxu0 0
    %3085 = vmatpush1.bf16.msra.mxu0 %v3039
    %3086 = vmatprep.subr.bf16.mxu0 0
    %3087 = vmatpush1.bf16.msra.mxu0 %v3040
    %3088 = vmatprep.subr.bf16.mxu0 0
    %3089 = vmatpush1.bf16.msra.mxu0 %v3041
    %3090 = vmatprep.mubr.bf16.mxu0 %v2929
    %3091 = vmatmul.mubr.bf16.gmra.mrb[0].mxu0 %v2928
    %v3092 = vpop.f32.mrb[0].mxu0
    %v3093 = vadd.f32 0.0, %v3092
    %v3094 = vpop.f32.mrb[0].mxu0
    %v3095 = vpop.f32.mrb[0].mxu0
    %v3096 = vpop.f32.mrb[0].mxu0
    %3097 = vdwg.mxu0
    %v3098 = vsel %vm2536, %v3093, 0.0
    %v3099 = vrot.slane %v3098, 4
    %v3100 = vadd.f32 %v3098, %v3099
    %v3101 = vrot.slane %v3100, 2
    %v3102 = vadd.f32 %v3100, %v3101
    %v3103 = vrot.slane %v3102, 1
    %v3104 = vadd.f32 %v3102, %v3103
    %v3105 = vld [vmem:[%s9] sm:$0xff]
    %v3106 = vld [vmem:[%s9 + $0x8] sm:$0xff]
    %v3107 = vld [vmem:[%s9 + $0x10] sm:$0xff]
    %v3108 = vld [vmem:[%s9 + $0x18] sm:$0xff]
    %v3109 = vld [vmem:[%s9 + $0x20] sm:$0xff]
    %v3110 = vld [vmem:[%s9 + $0x28] sm:$0xff]
    %v3111 = vld [vmem:[%s9 + $0x30] sm:$0xff]
    %v3112 = vld [vmem:[%s9 + $0x38] sm:$0xff]
    %v3113 = vld [vmem:[%s9 + $0x40] sm:$0xff]
    %v3114 = vld [vmem:[%s9 + $0x48] sm:$0xff]
    %v3115 = vld [vmem:[%s9 + $0x50] sm:$0xff]
    %v3116 = vld [vmem:[%s9 + $0x58] sm:$0xff]
    %v3117 = vld [vmem:[%s9 + $0x60] sm:$0xff]
    %v3118 = vld [vmem:[%s9 + $0x68] sm:$0xff]
    %v3119 = vld [vmem:[%s9 + $0x70] sm:$0xff]
    %v3120 = vld [vmem:[%s9 + $0x78] sm:$0xff]
    %3121 = vmatprep.subr.mxu0 0.0
    %3122 = vmatpush1.msra.mxu0 %v3105
    %3123 = vmatprep.subr.mxu0 0.0
    %3124 = vmatpush1.msra.mxu0 %v3106
    %3125 = vmatprep.subr.mxu0 0.0
    %3126 = vmatpush1.msra.mxu0 %v3107
    %3127 = vmatprep.subr.mxu0 0.0
    %3128 = vmatpush1.msra.mxu0 %v3108
    %3129 = vmatprep.subr.mxu0 0.0
    %3130 = vmatpush1.msra.mxu0 %v3109
    %3131 = vmatprep.subr.mxu0 0.0
    %3132 = vmatpush1.msra.mxu0 %v3110
    %3133 = vmatprep.subr.mxu0 0.0
    %3134 = vmatpush1.msra.mxu0 %v3111
    %3135 = vmatprep.subr.mxu0 0.0
    %3136 = vmatpush1.msra.mxu0 %v3112
    %3137 = vmatprep.subr.mxu0 0.0
    %3138 = vmatpush1.msra.mxu0 %v3113
    %3139 = vmatprep.subr.mxu0 0.0
    %3140 = vmatpush1.msra.mxu0 %v3114
    %3141 = vmatprep.subr.mxu0 0.0
    %3142 = vmatpush1.msra.mxu0 %v3115
    %3143 = vmatprep.subr.mxu0 0.0
    %3144 = vmatpush1.msra.mxu0 %v3116
    %3145 = vmatprep.subr.mxu0 0.0
    %3146 = vmatpush1.msra.mxu0 %v3117
    %3147 = vmatprep.subr.mxu0 0.0
    %3148 = vmatpush1.msra.mxu0 %v3118
    %3149 = vmatprep.subr.mxu0 0.0
    %3150 = vmatpush1.msra.mxu0 %v3119
    %3151 = vmatprep.subr.mxu0 0.0
    %3152 = vmatpush1.msra.mxu0 %v3120
    %3153 = vmatprep.subr.mxu0 0.0
    %3154 = vmatpush1.msra.mxu0 0.0
    %3155 = vmatprep.subr.mxu0 0.0
    %3156 = vmatpush1.msra.mxu0 0.0
    %3157 = vmatprep.subr.mxu0 0.0
    %3158 = vmatpush1.msra.mxu0 0.0
    %3159 = vmatprep.subr.mxu0 0.0
    %3160 = vmatpush1.msra.mxu0 0.0
    %3161 = vmatprep.subr.mxu0 0.0
    %3162 = vmatpush1.msra.mxu0 0.0
    %3163 = vmatprep.subr.mxu0 0.0
    %3164 = vmatpush1.msra.mxu0 0.0
    %3165 = vmatprep.subr.mxu0 0.0
    %3166 = vmatpush1.msra.mxu0 0.0
    %3167 = vmatprep.subr.mxu0 0.0
    %3168 = vmatpush1.msra.mxu0 0.0
    %3169 = vmatprep.subr.mxu0 0.0
    %3170 = vmatpush1.msra.mxu0 0.0
    %3171 = vmatprep.subr.mxu0 0.0
    %3172 = vmatpush1.msra.mxu0 0.0
    %3173 = vmatprep.subr.mxu0 0.0
    %3174 = vmatpush1.msra.mxu0 0.0
    %3175 = vmatprep.subr.mxu0 0.0
    %3176 = vmatpush1.msra.mxu0 0.0
    %3177 = vmatprep.subr.mxu0 0.0
    %3178 = vmatpush1.msra.mxu0 0.0
    %3179 = vmatprep.subr.mxu0 0.0
    %3180 = vmatpush1.msra.mxu0 0.0
    %3181 = vmatprep.subr.mxu0 0.0
    %3182 = vmatpush1.msra.mxu0 0.0
    %3183 = vmatprep.subr.mxu0 0.0
    %3184 = vmatpush1.msra.mxu0 0.0
    %3185 = vmatprep.mubr.f32.mxu0 0.0
    %3186 = vmatmul.mubr.f32.gmra.mrb[0].mxu0 %v3104
    %v3187 = vpop.f32.mrb[0].mxu0
    %v3188 = vadd.f32 0.0, %v3187
    %v3189 = vpop.f32.mrb[0].mxu0
    %3190 = vdwg.mxu0
    %v3191 = vmul.f32 %v3093, %v3093
    %v3192 = vsel %vm2536, %v3191, 0.0
    %v3193 = vrot.slane %v3192, 4
    %v3194 = vadd.f32 %v3192, %v3193
    %v3195 = vrot.slane %v3194, 2
    %v3196 = vadd.f32 %v3194, %v3195
    %v3197 = vrot.slane %v3196, 1
    %v3198 = vadd.f32 %v3196, %v3197
    %3199 = vmatprep.subr.mxu0 0.0
    %3200 = vmatpush1.msra.mxu0 %v3105
    %3201 = vmatprep.subr.mxu0 0.0
    %3202 = vmatpush1.msra.mxu0 %v3106
    %3203 = vmatprep.subr.mxu0 0.0
    %3204 = vmatpush1.msra.mxu0 %v3107
    %3205 = vmatprep.subr.mxu0 0.0
    %3206 = vmatpush1.msra.mxu0 %v3108
    %3207 = vmatprep.subr.mxu0 0.0
    %3208 = vmatpush1.msra.mxu0 %v3109
    %3209 = vmatprep.subr.mxu0 0.0
    %3210 = vmatpush1.msra.mxu0 %v3110
    %3211 = vmatprep.subr.mxu0 0.0
    %3212 = vmatpush1.msra.mxu0 %v3111
    %3213 = vmatprep.subr.mxu0 0.0
    %3214 = vmatpush1.msra.mxu0 %v3112
    %3215 = vmatprep.subr.mxu0 0.0
    %3216 = vmatpush1.msra.mxu0 %v3113
    %3217 = vmatprep.subr.mxu0 0.0
    %3218 = vmatpush1.msra.mxu0 %v3114
    %3219 = vmatprep.subr.mxu0 0.0
    %3220 = vmatpush1.msra.mxu0 %v3115
    %3221 = vmatprep.subr.mxu0 0.0
    %3222 = vmatpush1.msra.mxu0 %v3116
    %3223 = vmatprep.subr.mxu0 0.0
    %3224 = vmatpush1.msra.mxu0 %v3117
    %3225 = vmatprep.subr.mxu0 0.0
    %3226 = vmatpush1.msra.mxu0 %v3118
    %3227 = vmatprep.subr.mxu0 0.0
    %3228 = vmatpush1.msra.mxu0 %v3119
    %3229 = vmatprep.subr.mxu0 0.0
    %3230 = vmatpush1.msra.mxu0 %v3120
    %3231 = vmatprep.subr.mxu0 0.0
    %3232 = vmatpush1.msra.mxu0 0.0
    %3233 = vmatprep.subr.mxu0 0.0
    %3234 = vmatpush1.msra.mxu0 0.0
    %3235 = vmatprep.subr.mxu0 0.0
    %3236 = vmatpush1.msra.mxu0 0.0
    %3237 = vmatprep.subr.mxu0 0.0
    %3238 = vmatpush1.msra.mxu0 0.0
    %3239 = vmatprep.subr.mxu0 0.0
    %3240 = vmatpush1.msra.mxu0 0.0
    %3241 = vmatprep.subr.mxu0 0.0
    %3242 = vmatpush1.msra.mxu0 0.0
    %3243 = vmatprep.subr.mxu0 0.0
    %3244 = vmatpush1.msra.mxu0 0.0
    %3245 = vmatprep.subr.mxu0 0.0
    %3246 = vmatpush1.msra.mxu0 0.0
    %3247 = vmatprep.subr.mxu0 0.0
    %3248 = vmatpush1.msra.mxu0 0.0
    %3249 = vmatprep.subr.mxu0 0.0
    %3250 = vmatpush1.msra.mxu0 0.0
    %3251 = vmatprep.subr.mxu0 0.0
    %3252 = vmatpush1.msra.mxu0 0.0
    %3253 = vmatprep.subr.mxu0 0.0
    %3254 = vmatpush1.msra.mxu0 0.0
    %3255 = vmatprep.subr.mxu0 0.0
    %3256 = vmatpush1.msra.mxu0 0.0
    %3257 = vmatprep.subr.mxu0 0.0
    %3258 = vmatpush1.msra.mxu0 0.0
    %3259 = vmatprep.subr.mxu0 0.0
    %3260 = vmatpush1.msra.mxu0 0.0
    %3261 = vmatprep.subr.mxu0 0.0
    %3262 = vmatpush1.msra.mxu0 0.0
    %3263 = vmatprep.mubr.f32.mxu0 0.0
    %3264 = vmatmul.mubr.f32.gmra.mrb[0].mxu0 %v3198
    %v3265 = vpop.f32.mrb[0].mxu0
    %v3266 = vadd.f32 0.0, %v3265
    %v3267 = vpop.f32.mrb[0].mxu0
    %3268 = vdwg.mxu0
    %v3269 = vmul.f32 %v3188, 0.0625
    %v3270 = vmul.f32 %v3266, 0.0625
    %v3271 = vmul.f32 %v3269, %v3269
    %v3272 = vsub.f32 %v3270, %v3271
    %v3273 = vmax.f32 %v3272, 0.0
    %v3274 = vld [vmem:[%s11] sm:$0x1]
    %v3275 = vadd.f32 %v3273, 1e-05
    %v3276 = vrsqrt.pop %v3275
    %v3277 = vmul.f32 %v3274, %v3276
    %v3278 = vld [vmem:[%s12] sm:$0x1]
    %v3279 = vmul.f32 %v3269, %v3277
    %v3280 = vsub.f32 %v3278, %v3279
    %v3281 = vld [vmem:[#allocation11] sm:$0xff]
    %v3282 = vld [vmem:[#allocation11 + $0x8] sm:$0xff]
    %v3283 = vld [vmem:[#allocation11 + $0x10] sm:$0xff]
    %v3284 = vld [vmem:[#allocation11 + $0x18] sm:$0xff]
    %vm3285 = vcmask 261120
    %v3287 = vsel %vm3285, %v3277, 0
    %3289 = vmatprep.subr.mxu0 0.0
    %3290 = vmatpush1.msra.mxu0 %v3281
    %3291 = vmatprep.subr.mxu0 0.0
    %3292 = vmatpush1.msra.mxu0 %v3282
    %3293 = vmatprep.subr.mxu0 0.0
    %3294 = vmatpush1.msra.mxu0 %v3283
    %3295 = vmatprep.subr.mxu0 0.0
    %3296 = vmatpush1.msra.mxu0 %v3284
    %3297 = vmatprep.subr.mxu0 0.0
    %3298 = vmatpush1.msra.mxu0 0.0
    %3299 = vmatprep.subr.mxu0 0.0
    %3300 = vmatpush1.msra.mxu0 0.0
    %3301 = vmatprep.subr.mxu0 0.0
    %3302 = vmatpush1.msra.mxu0 0.0
    %3303 = vmatprep.subr.mxu0 0.0
    %3304 = vmatpush1.msra.mxu0 0.0
    %3305 = vmatprep.subr.mxu0 0.0
    %3306 = vmatpush1.msra.mxu0 0.0
    %3307 = vmatprep.subr.mxu0 0.0
    %3308 = vmatpush1.msra.mxu0 0.0
    %3309 = vmatprep.subr.mxu0 0.0
    %3310 = vmatpush1.msra.mxu0 0.0
    %3311 = vmatprep.subr.mxu0 0.0
    %3312 = vmatpush1.msra.mxu0 0.0
    %3313 = vmatprep.subr.mxu0 0.0
    %3314 = vmatpush1.msra.mxu0 0.0
    %3315 = vmatprep.subr.mxu0 0.0
    %3316 = vmatpush1.msra.mxu0 0.0
    %3317 = vmatprep.subr.mxu0 0.0
    %3318 = vmatpush1.msra.mxu0 0.0
    %3319 = vmatprep.subr.mxu0 0.0
    %3320 = vmatpush1.msra.mxu0 0.0
    %3321 = vmatprep.subr.mxu0 0.0
    %3322 = vmatpush1.msra.mxu0 0.0
    %3323 = vmatprep.subr.mxu0 0.0
    %3324 = vmatpush1.msra.mxu0 0.0
    %3325 = vmatprep.subr.mxu0 0.0
    %3326 = vmatpush1.msra.mxu0 0.0
    %3327 = vmatprep.subr.mxu0 0.0
    %3328 = vmatpush1.msra.mxu0 0.0
    %3329 = vmatprep.subr.mxu0 0.0
    %3330 = vmatpush1.msra.mxu0 0.0
    %3331 = vmatprep.subr.mxu0 0.0
    %3332 = vmatpush1.msra.mxu0 0.0
    %3333 = vmatprep.subr.mxu0 0.0
    %3334 = vmatpush1.msra.mxu0 0.0
    %3335 = vmatprep.subr.mxu0 0.0
    %3336 = vmatpush1.msra.mxu0 0.0
    %3337 = vmatprep.subr.mxu0 0.0
    %3338 = vmatpush1.msra.mxu0 0.0
    %3339 = vmatprep.subr.mxu0 0.0
    %3340 = vmatpush1.msra.mxu0 0.0
    %3341 = vmatprep.subr.mxu0 0.0
    %3342 = vmatpush1.msra.mxu0 0.0
    %3343 = vmatprep.subr.mxu0 0.0
    %3344 = vmatpush1.msra.mxu0 0.0
    %3345 = vmatprep.subr.mxu0 0.0
    %3346 = vmatpush1.msra.mxu0 0.0
    %3347 = vmatprep.subr.mxu0 0.0
    %3348 = vmatpush1.msra.mxu0 0.0
    %3349 = vmatprep.subr.mxu0 0.0
    %3350 = vmatpush1.msra.mxu0 0.0
    %3351 = vmatprep.subr.mxu0 0.0
    %3352 = vmatpush1.msra.mxu0 0.0
    %3353 = vmatprep.mubr.f32.mxu0 0.0
    %3354 = vmatmul.mubr.f32.gmra.mrb[0].mxu0 %v3287
    %v3355 = vpop.f32.mrb[0].mxu0
    %v3356 = vadd.f32 0.0, %v3355
    %v3357 = vpop.f32.mrb[0].mxu0
    %3358 = vdwg.mxu0
    %v3360 = vsel %vm3285, %v3280, 0
    %3362 = vmatprep.subr.mxu0 0.0
    %3363 = vmatpush1.msra.mxu0 %v3281
    %3364 = vmatprep.subr.mxu0 0.0
    %3365 = vmatpush1.msra.mxu0 %v3282
    %3366 = vmatprep.subr.mxu0 0.0
    %3367 = vmatpush1.msra.mxu0 %v3283
    %3368 = vmatprep.subr.mxu0 0.0
    %3369 = vmatpush1.msra.mxu0 %v3284
    %3370 = vmatprep.subr.mxu0 0.0
    %3371 = vmatpush1.msra.mxu0 0.0
    %3372 = vmatprep.subr.mxu0 0.0
    %3373 = vmatpush1.msra.mxu0 0.0
    %3374 = vmatprep.subr.mxu0 0.0
    %3375 = vmatpush1.msra.mxu0 0.0
    %3376 = vmatprep.subr.mxu0 0.0
    %3377 = vmatpush1.msra.mxu0 0.0
    %3378 = vmatprep.subr.mxu0 0.0
    %3379 = vmatpush1.msra.mxu0 0.0
    %3380 = vmatprep.subr.mxu0 0.0
    %3381 = vmatpush1.msra.mxu0 0.0
    %3382 = vmatprep.subr.mxu0 0.0
    %3383 = vmatpush1.msra.mxu0 0.0
    %3384 = vmatprep.subr.mxu0 0.0
    %3385 = vmatpush1.msra.mxu0 0.0
    %3386 = vmatprep.subr.mxu0 0.0
    %3387 = vmatpush1.msra.mxu0 0.0
    %3388 = vmatprep.subr.mxu0 0.0
    %3389 = vmatpush1.msra.mxu0 0.0
    %3390 = vmatprep.subr.mxu0 0.0
    %3391 = vmatpush1.msra.mxu0 0.0
    %3392 = vmatprep.subr.mxu0 0.0
    %3393 = vmatpush1.msra.mxu0 0.0
    %3394 = vmatprep.subr.mxu0 0.0
    %3395 = vmatpush1.msra.mxu0 0.0
    %3396 = vmatprep.subr.mxu0 0.0
    %3397 = vmatpush1.msra.mxu0 0.0
    %3398 = vmatprep.subr.mxu0 0.0
    %3399 = vmatpush1.msra.mxu0 0.0
    %3400 = vmatprep.subr.mxu0 0.0
    %3401 = vmatpush1.msra.mxu0 0.0
    %3402 = vmatprep.subr.mxu0 0.0
    %3403 = vmatpush1.msra.mxu0 0.0
    %3404 = vmatprep.subr.mxu0 0.0
    %3405 = vmatpush1.msra.mxu0 0.0
    %3406 = vmatprep.subr.mxu0 0.0
    %3407 = vmatpush1.msra.mxu0 0.0
    %3408 = vmatprep.subr.mxu0 0.0
    %3409 = vmatpush1.msra.mxu0 0.0
    %3410 = vmatprep.subr.mxu0 0.0
    %3411 = vmatpush1.msra.mxu0 0.0
    %3412 = vmatprep.subr.mxu0 0.0
    %3413 = vmatpush1.msra.mxu0 0.0
    %3414 = vmatprep.subr.mxu0 0.0
    %3415 = vmatpush1.msra.mxu0 0.0
    %3416 = vmatprep.subr.mxu0 0.0
    %3417 = vmatpush1.msra.mxu0 0.0
    %3418 = vmatprep.subr.mxu0 0.0
    %3419 = vmatpush1.msra.mxu0 0.0
    %3420 = vmatprep.subr.mxu0 0.0
    %3421 = vmatpush1.msra.mxu0 0.0
    %3422 = vmatprep.subr.mxu0 0.0
    %3423 = vmatpush1.msra.mxu0 0.0
    %3424 = vmatprep.subr.mxu0 0.0
    %3425 = vmatpush1.msra.mxu0 0.0
    %3426 = vmatprep.mubr.f32.mxu0 0.0
    %3427 = vmatmul.mubr.f32.gmra.mrb[0].mxu0 %v3360
    %v3428 = vpop.f32.mrb[0].mxu0
    %v3429 = vadd.f32 0.0, %v3428
    %v3430 = vpop.f32.mrb[0].mxu0
    %3431 = vdwg.mxu0
    %v3432 = vlaneseq
    %v3433 = vshrl.u32 %v3432, 7
    %v3434 = vsub.s32 0, %v3433
    %v3435 = vrot.slane %v3356, %v3434
    %v3436 = vmul.f32 %v3093, %v3435
    %v3437 = vlaneseq
    %v3438 = vshrl.u32 %v3437, 7
    %v3439 = vsub.s32 0, %v3438
    %v3440 = vrot.slane %v3429, %v3439
    %v3441 = vadd.f32 %v3436, %v3440
    %v3442 = vmul.f32 %v3441, 0.2
    %v3443 = vmax.f32 %v3441, %v3442
    %v3444 = vpack.c.bf16 %v3443, %v3443
    %v3445 = vld [vmem:[%s13] sm:$0xf]
    %v3446 = vld [vmem:[%s13 + $0x4] sm:$0xf]
    %v3447 = vld [vmem:[%s13 + $0x8] sm:$0xf]
    %v3448 = vld [vmem:[%s13 + $0xc] sm:$0xf]
    %v3449 = vld [vmem:[%s13 + $0x10] sm:$0xf]
    %v3450 = vld [vmem:[%s13 + $0x14] sm:$0xf]
    %v3451 = vld [vmem:[%s13 + $0x18] sm:$0xf]
    %v3452 = vld [vmem:[%s13 + $0x1c] sm:$0xf]
    %v3453 = vld [vmem:[%s13 + $0x20] sm:$0xf]
    %v3454 = vld [vmem:[%s13 + $0x24] sm:$0xf]
    %v3455 = vld [vmem:[%s13 + $0x28] sm:$0xf]
    %v3456 = vld [vmem:[%s13 + $0x2c] sm:$0xf]
    %v3457 = vld [vmem:[%s13 + $0x30] sm:$0xf]
    %v3458 = vld [vmem:[%s13 + $0x34] sm:$0xf]
    %v3459 = vld [vmem:[%s13 + $0x38] sm:$0xf]
    %v3460 = vld [vmem:[%s13 + $0x3c] sm:$0xf]
    %v3477 = vunpack.c.l.b16 %v3445
    %v3478 = vunpack.c.l.b16 %v3446
    %v3479 = vunpack.c.l.b16 %v3447
    %v3480 = vunpack.c.l.b16 %v3448
    %v3481 = vunpack.c.l.b16 %v3449
    %v3482 = vunpack.c.l.b16 %v3450
    %v3483 = vunpack.c.l.b16 %v3451
    %v3484 = vunpack.c.l.b16 %v3452
    %v3485 = vunpack.c.l.b16 %v3453
    %v3486 = vunpack.c.l.b16 %v3454
    %v3487 = vunpack.c.l.b16 %v3455
    %v3488 = vunpack.c.l.b16 %v3456
    %v3489 = vunpack.c.l.b16 %v3457
    %v3490 = vunpack.c.l.b16 %v3458
    %v3491 = vunpack.c.l.b16 %v3459
    %v3492 = vunpack.c.l.b16 %v3460
    %v3493 = vpack.c.b16 %v3478, %v3477
    %v3494 = vpack.c.b16 %v3480, %v3479
    %v3495 = vpack.c.b16 %v3482, %v3481
    %v3496 = vpack.c.b16 %v3484, %v3483
    %v3497 = vpack.c.b16 %v3486, %v3485
    %v3498 = vpack.c.b16 %v3488, %v3487
    %v3499 = vpack.c.b16 %v3490, %v3489
    %v3500 = vpack.c.b16 %v3492, %v3491
    %3509 = vmatprep.subr.bf16.mxu0 0
    %3510 = vmatpush1.bf16.msra.mxu0 %v3493
    %3511 = vmatprep.subr.bf16.mxu0 0
    %3512 = vmatpush1.bf16.msra.mxu0 %v3494
    %3513 = vmatprep.subr.bf16.mxu0 0
    %3514 = vmatpush1.bf16.msra.mxu0 %v3495
    %3515 = vmatprep.subr.bf16.mxu0 0
    %3516 = vmatpush1.bf16.msra.mxu0 %v3496
    %3517 = vmatprep.subr.bf16.mxu0 0
    %3518 = vmatpush1.bf16.msra.mxu0 %v3497
    %3519 = vmatprep.subr.bf16.mxu0 0
    %3520 = vmatpush1.bf16.msra.mxu0 %v3498
    %3521 = vmatprep.subr.bf16.mxu0 0
    %3522 = vmatpush1.bf16.msra.mxu0 %v3499
    %3523 = vmatprep.subr.bf16.mxu0 0
    %3524 = vmatpush1.bf16.msra.mxu0 %v3500
    %3525 = vmatprep.subr.bf16.mxu0 0
    %3526 = vmatpush1.bf16.msra.mxu0 0
    %3527 = vmatprep.subr.bf16.mxu0 0
    %3528 = vmatpush1.bf16.msra.mxu0 0
    %3529 = vmatprep.subr.bf16.mxu0 0
    %3530 = vmatpush1.bf16.msra.mxu0 0
    %3531 = vmatprep.subr.bf16.mxu0 0
    %3532 = vmatpush1.bf16.msra.mxu0 0
    %3533 = vmatprep.subr.bf16.mxu0 0
    %3534 = vmatpush1.bf16.msra.mxu0 0
    %3535 = vmatprep.subr.bf16.mxu0 0
    %3536 = vmatpush1.bf16.msra.mxu0 0
    %3537 = vmatprep.subr.bf16.mxu0 0
    %3538 = vmatpush1.bf16.msra.mxu0 0
    %3539 = vmatprep.subr.bf16.mxu0 0
    %3540 = vmatpush1.bf16.msra.mxu0 0
    %3541 = vmatprep.mubr.bf16.mxu0 0
    %3542 = vmatmul.mubr.bf16.gmra.mrb[0].mxu0 %v3444
    %v3543 = vpop.f32.mrb[0].mxu0
    %v3544 = vadd.f32 0.0, %v3543
    %v3545 = vpop.f32.mrb[0].mxu0
    %v3546 = vpop.f32.mrb[0].mxu0
    %v3547 = vpop.f32.mrb[0].mxu0
    %3548 = vdwg.mxu0
    %vm3549 = vcmask 519168
    %v3550 = vsel %vm3549, %v3544, 0.0
    %v3551 = vrot.slane %v3550, 4
    %v3552 = vadd.f32 %v3550, %v3551
    %v3553 = vrot.slane %v3552, 2
    %v3554 = vadd.f32 %v3552, %v3553
    %v3555 = vrot.slane %v3554, 1
    %v3556 = vadd.f32 %v3554, %v3555
    %v3557 = vld [vmem:[%s14] sm:$0xff]
    %v3558 = vld [vmem:[%s14 + $0x8] sm:$0xff]
    %v3559 = vld [vmem:[%s14 + $0x10] sm:$0xff]
    %v3560 = vld [vmem:[%s14 + $0x18] sm:$0xff]
    %v3561 = vld [vmem:[%s14 + $0x20] sm:$0xff]
    %v3562 = vld [vmem:[%s14 + $0x28] sm:$0xff]
    %v3563 = vld [vmem:[%s14 + $0x30] sm:$0xff]
    %v3564 = vld [vmem:[%s14 + $0x38] sm:$0xff]
    %vm3565 = vcmask 523264
    %v3567 = vsel %vm3565, %v3556, 0
    %3569 = vmatprep.subr.mxu0 0.0
    %3570 = vmatpush1.msra.mxu0 %v3557
    %3571 = vmatprep.subr.mxu0 0.0
    %3572 = vmatpush1.msra.mxu0 %v3558
    %3573 = vmatprep.subr.mxu0 0.0
    %3574 = vmatpush1.msra.mxu0 %v3559
    %3575 = vmatprep.subr.mxu0 0.0
    %3576 = vmatpush1.msra.mxu0 %v3560
    %3577 = vmatprep.subr.mxu0 0.0
    %3578 = vmatpush1.msra.mxu0 %v3561
    %3579 = vmatprep.subr.mxu0 0.0
    %3580 = vmatpush1.msra.mxu0 %v3562
    %3581 = vmatprep.subr.mxu0 0.0
    %3582 = vmatpush1.msra.mxu0 %v3563
    %3583 = vmatprep.subr.mxu0 0.0
    %3584 = vmatpush1.msra.mxu0 %v3564
    %3585 = vmatprep.subr.mxu0 0.0
    %3586 = vmatpush1.msra.mxu0 0.0
    %3587 = vmatprep.subr.mxu0 0.0
    %3588 = vmatpush1.msra.mxu0 0.0
    %3589 = vmatprep.subr.mxu0 0.0
    %3590 = vmatpush1.msra.mxu0 0.0
    %3591 = vmatprep.subr.mxu0 0.0
    %3592 = vmatpush1.msra.mxu0 0.0
    %3593 = vmatprep.subr.mxu0 0.0
    %3594 = vmatpush1.msra.mxu0 0.0
    %3595 = vmatprep.subr.mxu0 0.0
    %3596 = vmatpush1.msra.mxu0 0.0
    %3597 = vmatprep.subr.mxu0 0.0
    %3598 = vmatpush1.msra.mxu0 0.0
    %3599 = vmatprep.subr.mxu0 0.0
    %3600 = vmatpush1.msra.mxu0 0.0
    %3601 = vmatprep.subr.mxu0 0.0
    %3602 = vmatpush1.msra.mxu0 0.0
    %3603 = vmatprep.subr.mxu0 0.0
    %3604 = vmatpush1.msra.mxu0 0.0
    %3605 = vmatprep.subr.mxu0 0.0
    %3606 = vmatpush1.msra.mxu0 0.0
    %3607 = vmatprep.subr.mxu0 0.0
    %3608 = vmatpush1.msra.mxu0 0.0
    %3609 = vmatprep.subr.mxu0 0.0
    %3610 = vmatpush1.msra.mxu0 0.0
    %3611 = vmatprep.subr.mxu0 0.0
    %3612 = vmatpush1.msra.mxu0 0.0
    %3613 = vmatprep.subr.mxu0 0.0
    %3614 = vmatpush1.msra.mxu0 0.0
    %3615 = vmatprep.subr.mxu0 0.0
    %3616 = vmatpush1.msra.mxu0 0.0
    %3617 = vmatprep.subr.mxu0 0.0
    %3618 = vmatpush1.msra.mxu0 0.0
    %3619 = vmatprep.subr.mxu0 0.0
    %3620 = vmatpush1.msra.mxu0 0.0
    %3621 = vmatprep.subr.mxu0 0.0
    %3622 = vmatpush1.msra.mxu0 0.0
    %3623 = vmatprep.subr.mxu0 0.0
    %3624 = vmatpush1.msra.mxu0 0.0
    %3625 = vmatprep.subr.mxu0 0.0
    %3626 = vmatpush1.msra.mxu0 0.0
    %3627 = vmatprep.subr.mxu0 0.0
    %3628 = vmatpush1.msra.mxu0 0.0
    %3629 = vmatprep.subr.mxu0 0.0
    %3630 = vmatpush1.msra.mxu0 0.0
    %3631 = vmatprep.subr.mxu0 0.0
    %3632 = vmatpush1.msra.mxu0 0.0
    %3633 = vmatprep.mubr.f32.mxu0 0.0
    %3634 = vmatmul.mubr.f32.gmra.mrb[0].mxu0 %v3567
    %v3635 = vpop.f32.mrb[0].mxu0
    %v3636 = vadd.f32 0.0, %v3635
    %v3637 = vpop.f32.mrb[0].mxu0
    %3638 = vdwg.mxu0
    %v3639 = vmul.f32 %v3544, %v3544
    %v3640 = vsel %vm3549, %v3639, 0.0
    %v3641 = vrot.slane %v3640, 4
    %v3642 = vadd.f32 %v3640, %v3641
    %v3643 = vrot.slane %v3642, 2
    %v3644 = vadd.f32 %v3642, %v3643
    %v3645 = vrot.slane %v3644, 1
    %v3646 = vadd.f32 %v3644, %v3645
    %v3648 = vsel %vm3565, %v3646, 0
    %3650 = vmatprep.subr.mxu0 0.0
    %3651 = vmatpush1.msra.mxu0 %v3557
    %3652 = vmatprep.subr.mxu0 0.0
    %3653 = vmatpush1.msra.mxu0 %v3558
    %3654 = vmatprep.subr.mxu0 0.0
    %3655 = vmatpush1.msra.mxu0 %v3559
    %3656 = vmatprep.subr.mxu0 0.0
    %3657 = vmatpush1.msra.mxu0 %v3560
    %3658 = vmatprep.subr.mxu0 0.0
    %3659 = vmatpush1.msra.mxu0 %v3561
    %3660 = vmatprep.subr.mxu0 0.0
    %3661 = vmatpush1.msra.mxu0 %v3562
    %3662 = vmatprep.subr.mxu0 0.0
    %3663 = vmatpush1.msra.mxu0 %v3563
    %3664 = vmatprep.subr.mxu0 0.0
    %3665 = vmatpush1.msra.mxu0 %v3564
    %3666 = vmatprep.subr.mxu0 0.0
    %3667 = vmatpush1.msra.mxu0 0.0
    %3668 = vmatprep.subr.mxu0 0.0
    %3669 = vmatpush1.msra.mxu0 0.0
    %3670 = vmatprep.subr.mxu0 0.0
    %3671 = vmatpush1.msra.mxu0 0.0
    %3672 = vmatprep.subr.mxu0 0.0
    %3673 = vmatpush1.msra.mxu0 0.0
    %3674 = vmatprep.subr.mxu0 0.0
    %3675 = vmatpush1.msra.mxu0 0.0
    %3676 = vmatprep.subr.mxu0 0.0
    %3677 = vmatpush1.msra.mxu0 0.0
    %3678 = vmatprep.subr.mxu0 0.0
    %3679 = vmatpush1.msra.mxu0 0.0
    %3680 = vmatprep.subr.mxu0 0.0
    %3681 = vmatpush1.msra.mxu0 0.0
    %3682 = vmatprep.subr.mxu0 0.0
    %3683 = vmatpush1.msra.mxu0 0.0
    %3684 = vmatprep.subr.mxu0 0.0
    %3685 = vmatpush1.msra.mxu0 0.0
    %3686 = vmatprep.subr.mxu0 0.0
    %3687 = vmatpush1.msra.mxu0 0.0
    %3688 = vmatprep.subr.mxu0 0.0
    %3689 = vmatpush1.msra.mxu0 0.0
    %3690 = vmatprep.subr.mxu0 0.0
    %3691 = vmatpush1.msra.mxu0 0.0
    %3692 = vmatprep.subr.mxu0 0.0
    %3693 = vmatpush1.msra.mxu0 0.0
    %3694 = vmatprep.subr.mxu0 0.0
    %3695 = vmatpush1.msra.mxu0 0.0
    %3696 = vmatprep.subr.mxu0 0.0
    %3697 = vmatpush1.msra.mxu0 0.0
    %3698 = vmatprep.subr.mxu0 0.0
    %3699 = vmatpush1.msra.mxu0 0.0
    %3700 = vmatprep.subr.mxu0 0.0
    %3701 = vmatpush1.msra.mxu0 0.0
    %3702 = vmatprep.subr.mxu0 0.0
    %3703 = vmatpush1.msra.mxu0 0.0
    %3704 = vmatprep.subr.mxu0 0.0
    %3705 = vmatpush1.msra.mxu0 0.0
    %3706 = vmatprep.subr.mxu0 0.0
    %3707 = vmatpush1.msra.mxu0 0.0
    %3708 = vmatprep.subr.mxu0 0.0
    %3709 = vmatpush1.msra.mxu0 0.0
    %3710 = vmatprep.subr.mxu0 0.0
    %3711 = vmatpush1.msra.mxu0 0.0
    %3712 = vmatprep.subr.mxu0 0.0
    %3713 = vmatpush1.msra.mxu0 0.0
    %3714 = vmatprep.mubr.f32.mxu0 0.0
    %3715 = vmatmul.mubr.f32.gmra.mrb[0].mxu0 %v3648
    %v3716 = vpop.f32.mrb[0].mxu0
    %v3717 = vadd.f32 0.0, %v3716
    %v3718 = vpop.f32.mrb[0].mxu0
    %3719 = vdwg.mxu0
    %v3720 = vmul.f32 %v3636, 0.25
    %v3721 = vmul.f32 %v3717, 0.25
    %v3722 = vmul.f32 %v3720, %v3720
    %v3723 = vsub.f32 %v3721, %v3722
    %v3724 = vmax.f32 %v3723, 0.0
    %v3725 = vld [vmem:[%s16] sm:$0x1]
    %v3726 = vadd.f32 %v3724, 1e-05
    %v3727 = vrsqrt.pop %v3726
    %v3728 = vmul.f32 %v3725, %v3727
    %v3729 = vld [vmem:[%s17] sm:$0x1]
    %v3730 = vmul.f32 %v3720, %v3728
    %v3731 = vsub.f32 %v3729, %v3730
    %v3732 = vld [vmem:[%s15] sm:$0xff]
    %v3733 = vld [vmem:[%s15 + $0x8] sm:$0xff]
    %v3734 = vld [vmem:[%s15 + $0x10] sm:$0xff]
    %v3735 = vld [vmem:[%s15 + $0x18] sm:$0xff]
    %v3736 = vld [vmem:[%s15 + $0x20] sm:$0xff]
    %v3737 = vld [vmem:[%s15 + $0x28] sm:$0xff]
    %v3738 = vld [vmem:[%s15 + $0x30] sm:$0xff]
    %v3739 = vld [vmem:[%s15 + $0x38] sm:$0xff]
    %v3741 = vsel %vm3565, %v3728, 0
    %3743 = vmatprep.subr.mxu0 0.0
    %3744 = vmatpush1.msra.mxu0 %v3732
    %3745 = vmatprep.subr.mxu0 0.0
    %3746 = vmatpush1.msra.mxu0 %v3733
    %3747 = vmatprep.subr.mxu0 0.0
    %3748 = vmatpush1.msra.mxu0 %v3734
    %3749 = vmatprep.subr.mxu0 0.0
    %3750 = vmatpush1.msra.mxu0 %v3735
    %3751 = vmatprep.subr.mxu0 0.0
    %3752 = vmatpush1.msra.mxu0 %v3736
    %3753 = vmatprep.subr.mxu0 0.0
    %3754 = vmatpush1.msra.mxu0 %v3737
    %3755 = vmatprep.subr.mxu0 0.0
    %3756 = vmatpush1.msra.mxu0 %v3738
    %3757 = vmatprep.subr.mxu0 0.0
    %3758 = vmatpush1.msra.mxu0 %v3739
    %3759 = vmatprep.subr.mxu0 0.0
    %3760 = vmatpush1.msra.mxu0 0.0
    %3761 = vmatprep.subr.mxu0 0.0
    %3762 = vmatpush1.msra.mxu0 0.0
    %3763 = vmatprep.subr.mxu0 0.0
    %3764 = vmatpush1.msra.mxu0 0.0
    %3765 = vmatprep.subr.mxu0 0.0
    %3766 = vmatpush1.msra.mxu0 0.0
    %3767 = vmatprep.subr.mxu0 0.0
    %3768 = vmatpush1.msra.mxu0 0.0
    %3769 = vmatprep.subr.mxu0 0.0
    %3770 = vmatpush1.msra.mxu0 0.0
    %3771 = vmatprep.subr.mxu0 0.0
    %3772 = vmatpush1.msra.mxu0 0.0
    %3773 = vmatprep.subr.mxu0 0.0
    %3774 = vmatpush1.msra.mxu0 0.0
    %3775 = vmatprep.subr.mxu0 0.0
    %3776 = vmatpush1.msra.mxu0 0.0
    %3777 = vmatprep.subr.mxu0 0.0
    %3778 = vmatpush1.msra.mxu0 0.0
    %3779 = vmatprep.subr.mxu0 0.0
    %3780 = vmatpush1.msra.mxu0 0.0
    %3781 = vmatprep.subr.mxu0 0.0
    %3782 = vmatpush1.msra.mxu0 0.0
    %3783 = vmatprep.subr.mxu0 0.0
    %3784 = vmatpush1.msra.mxu0 0.0
    %3785 = vmatprep.subr.mxu0 0.0
    %3786 = vmatpush1.msra.mxu0 0.0
    %3787 = vmatprep.subr.mxu0 0.0
    %3788 = vmatpush1.msra.mxu0 0.0
    %3789 = vmatprep.subr.mxu0 0.0
    %3790 = vmatpush1.msra.mxu0 0.0
    %3791 = vmatprep.subr.mxu0 0.0
    %3792 = vmatpush1.msra.mxu0 0.0
    %3793 = vmatprep.subr.mxu0 0.0
    %3794 = vmatpush1.msra.mxu0 0.0
    %3795 = vmatprep.subr.mxu0 0.0
    %3796 = vmatpush1.msra.mxu0 0.0
    %3797 = vmatprep.subr.mxu0 0.0
    %3798 = vmatpush1.msra.mxu0 0.0
    %3799 = vmatprep.subr.mxu0 0.0
    %3800 = vmatpush1.msra.mxu0 0.0
    %3801 = vmatprep.subr.mxu0 0.0
    %3802 = vmatpush1.msra.mxu0 0.0
    %3803 = vmatprep.subr.mxu0 0.0
    %3804 = vmatpush1.msra.mxu0 0.0
    %3805 = vmatprep.subr.mxu0 0.0
    %3806 = vmatpush1.msra.mxu0 0.0
    %3807 = vmatprep.mubr.f32.mxu0 0.0
    %3808 = vmatmul.mubr.f32.gmra.mrb[0].mxu0 %v3741
    %v3809 = vpop.f32.mrb[0].mxu0
    %v3810 = vadd.f32 0.0, %v3809
    %v3811 = vpop.f32.mrb[0].mxu0
    %3812 = vdwg.mxu0
    %v3814 = vsel %vm3565, %v3731, 0
    %3816 = vmatprep.subr.mxu0 0.0
    %3817 = vmatpush1.msra.mxu0 %v3732
    %3818 = vmatprep.subr.mxu0 0.0
    %3819 = vmatpush1.msra.mxu0 %v3733
    %3820 = vmatprep.subr.mxu0 0.0
    %3821 = vmatpush1.msra.mxu0 %v3734
    %3822 = vmatprep.subr.mxu0 0.0
    %3823 = vmatpush1.msra.mxu0 %v3735
    %3824 = vmatprep.subr.mxu0 0.0
    %3825 = vmatpush1.msra.mxu0 %v3736
    %3826 = vmatprep.subr.mxu0 0.0
    %3827 = vmatpush1.msra.mxu0 %v3737
    %3828 = vmatprep.subr.mxu0 0.0
    %3829 = vmatpush1.msra.mxu0 %v3738
    %3830 = vmatprep.subr.mxu0 0.0
    %3831 = vmatpush1.msra.mxu0 %v3739
    %3832 = vmatprep.subr.mxu0 0.0
    %3833 = vmatpush1.msra.mxu0 0.0
    %3834 = vmatprep.subr.mxu0 0.0
    %3835 = vmatpush1.msra.mxu0 0.0
    %3836 = vmatprep.subr.mxu0 0.0
    %3837 = vmatpush1.msra.mxu0 0.0
    %3838 = vmatprep.subr.mxu0 0.0
    %3839 = vmatpush1.msra.mxu0 0.0
    %3840 = vmatprep.subr.mxu0 0.0
    %3841 = vmatpush1.msra.mxu0 0.0
    %3842 = vmatprep.subr.mxu0 0.0
    %3843 = vmatpush1.msra.mxu0 0.0
    %3844 = vmatprep.subr.mxu0 0.0
    %3845 = vmatpush1.msra.mxu0 0.0
    %3846 = vmatprep.subr.mxu0 0.0
    %3847 = vmatpush1.msra.mxu0 0.0
    %3848 = vmatprep.subr.mxu0 0.0
    %3849 = vmatpush1.msra.mxu0 0.0
    %3850 = vmatprep.subr.mxu0 0.0
    %3851 = vmatpush1.msra.mxu0 0.0
    %3852 = vmatprep.subr.mxu0 0.0
    %3853 = vmatpush1.msra.mxu0 0.0
    %3854 = vmatprep.subr.mxu0 0.0
    %3855 = vmatpush1.msra.mxu0 0.0
    %3856 = vmatprep.subr.mxu0 0.0
    %3857 = vmatpush1.msra.mxu0 0.0
    %3858 = vmatprep.subr.mxu0 0.0
    %3859 = vmatpush1.msra.mxu0 0.0
    %3860 = vmatprep.subr.mxu0 0.0
    %3861 = vmatpush1.msra.mxu0 0.0
    %3862 = vmatprep.subr.mxu0 0.0
    %3863 = vmatpush1.msra.mxu0 0.0
    %3864 = vmatprep.subr.mxu0 0.0
    %3865 = vmatpush1.msra.mxu0 0.0
    %3866 = vmatprep.subr.mxu0 0.0
    %3867 = vmatpush1.msra.mxu0 0.0
    %3868 = vmatprep.subr.mxu0 0.0
    %3869 = vmatpush1.msra.mxu0 0.0
    %3870 = vmatprep.subr.mxu0 0.0
    %3871 = vmatpush1.msra.mxu0 0.0
    %3872 = vmatprep.subr.mxu0 0.0
    %3873 = vmatpush1.msra.mxu0 0.0
    %3874 = vmatprep.subr.mxu0 0.0
    %3875 = vmatpush1.msra.mxu0 0.0
    %3876 = vmatprep.subr.mxu0 0.0
    %3877 = vmatpush1.msra.mxu0 0.0
    %3878 = vmatprep.subr.mxu0 0.0
    %3879 = vmatpush1.msra.mxu0 0.0
    %3880 = vmatprep.mubr.f32.mxu0 0.0
    %3881 = vmatmul.mubr.f32.gmra.mrb[0].mxu0 %v3814
    %v3882 = vpop.f32.mrb[0].mxu0
    %v3883 = vadd.f32 0.0, %v3882
    %v3884 = vpop.f32.mrb[0].mxu0
    %3885 = vdwg.mxu0
    %v3886 = vlaneseq
    %v3887 = vshrl.u32 %v3886, 7
    %v3888 = vsub.s32 0, %v3887
    %v3889 = vrot.slane %v3810, %v3888
    %v3890 = vmul.f32 %v3544, %v3889
    %v3891 = vlaneseq
    %v3892 = vshrl.u32 %v3891, 7
    %v3893 = vsub.s32 0, %v3892
    %v3894 = vrot.slane %v3883, %v3893
    %v3895 = vadd.f32 %v3890, %v3894
    %v3896 = vmul.f32 %v3895, 0.2
    %v3897 = vmax.f32 %v3895, %v3896
    %v3898 = vld [vmem:[%s18] sm:$0xff]
    %v3899 = vld [vmem:[%s18 + $0x8] sm:$0xff]
    %v3900 = vld [vmem:[%s18 + $0x10] sm:$0xff]
    %v3901 = vld [vmem:[%s18 + $0x18] sm:$0xff]
    %v3902 = vld [vmem:[%s18 + $0x20] sm:$0xff]
    %v3903 = vld [vmem:[%s18 + $0x28] sm:$0xff]
    %v3904 = vld [vmem:[%s18 + $0x30] sm:$0xff]
    %v3905 = vld [vmem:[%s18 + $0x38] sm:$0xff]
    %v3906 = vld [vmem:[#allocation2] sm:$0x1]
    %v3908 = vlaneseq
    %v3909 = vshrl.u32 %v3908, 7
    %v3910 = vsub.s32 0, %v3909
    %v3911 = vrot.slane %v3906, %v3910
    %v3914 = vsel %vm3565, %v3897, 0
    %3916 = vmatprep.subr.mxu0 0.0
    %3917 = vmatpush1.msra.mxu0 %v3898
    %3918 = vmatprep.subr.mxu0 0.0
    %3919 = vmatpush1.msra.mxu0 %v3899
    %3920 = vmatprep.subr.mxu0 0.0
    %3921 = vmatpush1.msra.mxu0 %v3900
    %3922 = vmatprep.subr.mxu0 0.0
    %3923 = vmatpush1.msra.mxu0 %v3901
    %3924 = vmatprep.subr.mxu0 0.0
    %3925 = vmatpush1.msra.mxu0 %v3902
    %3926 = vmatprep.subr.mxu0 0.0
    %3927 = vmatpush1.msra.mxu0 %v3903
    %3928 = vmatprep.subr.mxu0 0.0
    %3929 = vmatpush1.msra.mxu0 %v3904
    %3930 = vmatprep.subr.mxu0 0.0
    %3931 = vmatpush1.msra.mxu0 %v3905
    %3932 = vmatprep.subr.mxu0 0.0
    %3933 = vmatpush1.msra.mxu0 0.0
    %3934 = vmatprep.subr.mxu0 0.0
    %3935 = vmatpush1.msra.mxu0 0.0
    %3936 = vmatprep.subr.mxu0 0.0
    %3937 = vmatpush1.msra.mxu0 0.0
    %3938 = vmatprep.subr.mxu0 0.0
    %3939 = vmatpush1.msra.mxu0 0.0
    %3940 = vmatprep.subr.mxu0 0.0
    %3941 = vmatpush1.msra.mxu0 0.0
    %3942 = vmatprep.subr.mxu0 0.0
    %3943 = vmatpush1.msra.mxu0 0.0
    %3944 = vmatprep.subr.mxu0 0.0
    %3945 = vmatpush1.msra.mxu0 0.0
    %3946 = vmatprep.subr.mxu0 0.0
    %3947 = vmatpush1.msra.mxu0 0.0
    %3948 = vmatprep.subr.mxu0 0.0
    %3949 = vmatpush1.msra.mxu0 0.0
    %3950 = vmatprep.subr.mxu0 0.0
    %3951 = vmatpush1.msra.mxu0 0.0
    %3952 = vmatprep.subr.mxu0 0.0
    %3953 = vmatpush1.msra.mxu0 0.0
    %3954 = vmatprep.subr.mxu0 0.0
    %3955 = vmatpush1.msra.mxu0 0.0
    %3956 = vmatprep.subr.mxu0 0.0
    %3957 = vmatpush1.msra.mxu0 0.0
    %3958 = vmatprep.subr.mxu0 0.0
    %3959 = vmatpush1.msra.mxu0 0.0
    %3960 = vmatprep.subr.mxu0 0.0
    %3961 = vmatpush1.msra.mxu0 0.0
    %3962 = vmatprep.subr.mxu0 0.0
    %3963 = vmatpush1.msra.mxu0 0.0
    %3964 = vmatprep.subr.mxu0 0.0
    %3965 = vmatpush1.msra.mxu0 0.0
    %3966 = vmatprep.subr.mxu0 0.0
    %3967 = vmatpush1.msra.mxu0 0.0
    %3968 = vmatprep.subr.mxu0 0.0
    %3969 = vmatpush1.msra.mxu0 0.0
    %3970 = vmatprep.subr.mxu0 0.0
    %3971 = vmatpush1.msra.mxu0 0.0
    %3972 = vmatprep.subr.mxu0 0.0
    %3973 = vmatpush1.msra.mxu0 0.0
    %3974 = vmatprep.subr.mxu0 0.0
    %3975 = vmatpush1.msra.mxu0 0.0
    %3976 = vmatprep.subr.mxu0 0.0
    %3977 = vmatpush1.msra.mxu0 0.0
    %3978 = vmatprep.subr.mxu0 0.0
    %3979 = vmatpush1.msra.mxu0 0.0
    %3980 = vmatprep.mubr.f32.mxu0 0.0
    %3981 = vmatmul.mubr.f32.gmra.mrb[0].mxu0 %v3914
    %v3982 = vpop.f32.mrb[0].mxu0
    %v3983 = vadd.f32 %v3911, %v3982
    %v3984 = vpop.f32.mrb[0].mxu0
    %3985 = vdwg.mxu0
    %vm3986 = vcmask 3072
    %3987 = vst.msk [vmem:[%s21] sm:$0xf] %vm3986, %v3983
    %v3988 = vsub.f32 0.0, %v3983
    %v3989 = vmul.f32 %v3988, 1.442695
    %v3990 = vpow.pop %v3989
    %v3991 = vadd.f32 %v3990, 1.0
    %v3992 = vrcp.pop %v3991
    %v3993 = vmul.f32 1.0, %v3992
    %3994 = vst.msk [vmem:[%s20] sm:$0xf] %vm3986, %v3993
    // Predicated region
    $region106: #{tpu_custom_call.1} parent=1 // pred_check
      _
    $region107: #{tpu_custom_call.1} parent=1 // pred_check_branch
      %3996 = sbr.rel (0) target = $region109
    $region108: #{tpu_custom_call.1} parent=1 // pred_region
      _
    $region109: #{tpu_custom_call.1} parent=1 // pred_fallthru
      _
    // Predicated region
    $region110: #{tpu_custom_call.1} parent=1 // pred_check
      _
    $region111: #{tpu_custom_call.1} parent=1 // pred_check_branch
      %3998 = sbr.rel (0) target = $region113
    $region112: #{tpu_custom_call.1} parent=1 // pred_region
      _
    $region113: #{tpu_custom_call.1} parent=1 // pred_fallthru
      _
    // Predicated region
    $region114: #{tpu_custom_call.1} parent=1 // pred_check
      _
    $region115: #{tpu_custom_call.1} parent=1 // pred_check_branch
      %4000 = sbr.rel (0) target = $region117
    $region116: #{tpu_custom_call.1} parent=1 // pred_region
      _
    $region117: #{tpu_custom_call.1} parent=1 // pred_fallthru
      _
    // Predicated region
    $region118: #{tpu_custom_call.1} parent=1 // pred_check
      _
    $region119: #{tpu_custom_call.1} parent=1 // pred_check_branch
      %4002 = sbr.rel (0) target = $region121
    $region120: #{tpu_custom_call.1} parent=1 // pred_region
      _
    $region121: #{tpu_custom_call.1} parent=1 // pred_fallthru
      _
    %4003 = vsyncpa [#allocation4], 1
    %4004 = vsyncpa [#allocation6], 1
    %4005 = vsyncpa [#allocation9], 1
    %4006 = vsyncpa [#allocation12], 1

</llo_original>
